<compile_context>
chip_gen: v7x
topology: tpu7x:2x2x1
jax: 0.10.0
libtpu: 0.0.40
codegen_flags: <defaults>
</compile_context>

<pallas_src>
import jax
import jax.numpy as jnp
from jax.experimental import pallas as pl
from jax.experimental.pallas import tpu as pltpu


# ---------------------------------------------------------------------------
# Fused single-kernel path: resident x, v2 column strip staged in VMEM scratch.
# ---------------------------------------------------------------------------
def _fused_kernel(x_ref, a_col_ref, a_row_ref, o_ref, v2_ref):
    # x_ref     : (N, N)   resident (single-buffered, grid-invariant)
    # a_col_ref : (N, TN)  column strip of arg -> RHS of the first matmul
    # a_row_ref : (TM, N)  row strip of arg    -> LHS of the second matmul
    # o_ref     : (TM, TN) output block
    # v2_ref    : (N, TN)  f32 scratch holding v2[:, j_blk] for the current j
    i = pl.program_id(1)

    @pl.when(i == 0)
    def _():
        # v2[:, j_blk] = x @ arg[:, j_blk]   (MXU, f32 accumulation)
        v2_ref[...] = jnp.dot(x_ref[...], a_col_ref[...],
                              preferred_element_type=jnp.float32)

    tm = o_ref.shape[0]
    row0 = pl.multiple_of(i * tm, tm)
    v2_tile = v2_ref[pl.ds(row0, tm), :]                 # v2[i_blk, j_blk]
    # v3[i_blk, j_blk] = arg[i_blk, :] @ v2[:, j_blk] ; out = v3 + v2
    v3 = jnp.dot(a_row_ref[...], v2_ref[...], preferred_element_type=jnp.float32)
    o_ref[...] = (v3 + v2_tile).astype(o_ref.dtype)


def _fused_vmem_bytes(n, tm, tn, itemsize, pinned_bufs):
    return (pinned_bufs * n * n * itemsize        # x (resident)
            + 2 * n * tn * itemsize               # arg column strip (dbl buffer)
            + 2 * tm * n * itemsize               # arg row strip    (dbl buffer)
            + 2 * tm * tn * itemsize              # output blocks    (dbl buffer)
            + n * tn * 4)                         # v2 scratch (f32)


def _fused_call(x, arg, *, tm, tn, single_buffer_pinned):
    n = x.shape[0]
    itemsize = x.dtype.itemsize
    pinned_bufs = 1 if single_buffer_pinned else 2
    need = _fused_vmem_bytes(n, tm, tn, itemsize, pinned_bufs)
    vmem_limit = min(max(int(need * 1.25) + (2 << 20), 32 << 20), 64 << 20)

    if single_buffer_pinned:
        x_spec = pl.BlockSpec((n, n), lambda j, i: (0, 0),
                              pipeline_mode=pl.Buffered(1))
    else:
        x_spec = pl.BlockSpec((n, n), lambda j, i: (0, 0))

    cost = pl.CostEstimate(
        flops=4 * n * n * n,                     # two N^3 matmuls, 2 flops/MAC
        transcendentals=0,
        bytes_accessed=4 * n * n * itemsize,     # x + two arg passes + out
    )

    return pl.pallas_call(
        _fused_kernel,
        out_shape=jax.ShapeDtypeStruct((n, n), x.dtype),
        grid=(n // tn, n // tm),                 # (j: column strip, i: row block)
        in_specs=[
            x_spec,
            pl.BlockSpec((n, tn), lambda j, i: (0, j)),   # arg column strip
            pl.BlockSpec((tm, n), lambda j, i: (i, 0)),   # arg row strip
        ],
        out_specs=pl.BlockSpec((tm, tn), lambda j, i: (i, j)),
        scratch_shapes=[pltpu.VMEM((n, tn), jnp.float32)],
        compiler_params=pltpu.CompilerParams(
            dimension_semantics=("parallel", "arbitrary"),
            vmem_limit_bytes=vmem_limit,
        ),
        cost_estimate=cost,
    )(x, arg, arg)


# ---------------------------------------------------------------------------
# Streamed path: two standard K-tiled matmuls, O(tile) VMEM (no N^2 residency).
#   out = arg @ (x @ arg) + (x @ arg)
# ---------------------------------------------------------------------------
def _make_matmul_kernel(with_add):
    def kernel(a_ref, b_ref, *rest):
        if with_add:
            add_ref, o_ref, acc_ref = rest
        else:
            o_ref, acc_ref = rest
        k = pl.program_id(2)

        @pl.when(k == 0)
        def _():
            acc_ref[...] = jnp.zeros_like(acc_ref)

        acc_ref[...] += jnp.dot(a_ref[...], b_ref[...],
                                preferred_element_type=jnp.float32)

        @pl.when(k == pl.num_programs(2) - 1)
        def _():
            r = acc_ref[...]
            if with_add:
                r = r + add_ref[...].astype(jnp.float32)
            o_ref[...] = r.astype(o_ref.dtype)

    return kernel


def _tiled_matmul(a, b, add=None, *, tm, tn, tk):
    m, kdim = a.shape
    _, n = b.shape
    grid = (m // tm, n // tn, kdim // tk)

    in_specs = [pl.BlockSpec((tm, tk), lambda i, j, k: (i, k)),
                pl.BlockSpec((tk, tn), lambda i, j, k: (k, j))]
    operands = [a, b]
    if add is not None:
        in_specs.append(pl.BlockSpec((tm, tn), lambda i, j, k: (i, j)))
        operands.append(add)

    cost = pl.CostEstimate(
        flops=2 * m * n * kdim,
        transcendentals=0,
        bytes_accessed=(m * kdim + kdim * n + m * n
                        + (m * n if add is not None else 0)) * a.dtype.itemsize,
    )

    return pl.pallas_call(
        _make_matmul_kernel(add is not None),
        out_shape=jax.ShapeDtypeStruct((m, n), a.dtype),
        grid=grid,
        in_specs=in_specs,
        out_specs=pl.BlockSpec((tm, tn), lambda i, j, k: (i, j)),
        scratch_shapes=[pltpu.VMEM((tm, tn), jnp.float32)],
        compiler_params=pltpu.CompilerParams(
            dimension_semantics=("parallel", "parallel", "arbitrary"),
        ),
        cost_estimate=cost,
    )(*operands)


def _streamed(x, arg, *, tm, tn, tk):
    v2 = _tiled_matmul(x, arg, tm=tm, tn=tn, tk=tk)           # v2 = x @ arg
    return _tiled_matmul(arg, v2, add=v2, tm=tm, tn=tn, tk=tk)  # arg @ v2 + v2


# ---------------------------------------------------------------------------
# Tile selection and dispatch.
# ---------------------------------------------------------------------------
def _preferred_lane_tile():
    # 128-wide strips on v5e (4x128^2 MXU), 256 on v6e/v7x (256^2 MXU).
    try:
        kind = jax.devices()[0].device_kind.lower()
    except Exception:
        kind = ""
    if "v5 lite" in kind or "v5e" in kind or "v5litepod" in kind:
        return 128
    return 256


def _pick_tile(n, prefer):
    for t in (prefer, 256, 128):
        if n % t == 0:
            return t
    return n            # full extent (always a legal block dim)


# Use the fused (resident-x) kernel only while its footprint stays well inside
# per-core VMEM (v7x: 64 MiB/TC); otherwise stream everything.
_FUSED_VMEM_BUDGET = 40 << 20


def mm_plus_mm(x, arg, *, tm=None, tn=None, force_streamed=False):
    n, k = x.shape
    kk, m = arg.shape
    assert k == kk and n == m == k, "Model semantics require square matrices"

    prefer = _preferred_lane_tile()
    tn = _pick_tile(n, prefer) if tn is None else tn
    tm = _pick_tile(n, prefer) if tm is None else tm
    assert n % tn == 0 and n % tm == 0

    fused_need = _fused_vmem_bytes(n, tm, tn, x.dtype.itemsize, pinned_bufs=1)
    if force_streamed or fused_need > _FUSED_VMEM_BUDGET:
        tk = _pick_tile(n, 256)
        return _streamed(x, arg, tm=tm, tn=tn, tk=tk)

    try:
        return _fused_call(x, arg, tm=tm, tn=tn, single_buffer_pinned=True)
    except Exception:
        # TODO(synk): pl.Buffered(1) (single-buffered pinned input) rejected by
        # this jax version -- fall back to default double buffering.
        return _fused_call(x, arg, tm=tm, tn=tn, single_buffer_pinned=False)


def reference(x, arg):
    p = jax.lax.Precision.HIGHEST
    v2 = jnp.dot(x, arg, precision=p)
    v3 = jnp.dot(arg, v2, precision=p)
    return v3 + v2


if __name__ == "__main__":
    N = 512  # small, 256-aligned -> fused path with a 2x2 tile grid

    key = jax.random.PRNGKey(0)
    kx, ka = jax.random.split(key)
    x = jax.random.normal(kx, (N, N), dtype=jnp.float32)
    # deterministic "parameter" for self.arg (the module's __init__ just stores it)
    arg = jax.random.normal(ka, (N, N), dtype=jnp.float32) * 0.1

    ref = reference(x, arg)

    # Fused (resident-x, VMEM-staged v2) path.
    out_fused = jax.block_until_ready(mm_plus_mm(x, arg))
    assert out_fused.shape == (N, N)
    assert jnp.allclose(out_fused, ref, atol=2e-3, rtol=2e-3), "fused mismatch"

    # Streamed large-N path (also validated so the v7x-safe path is known-good).
    out_streamed = jax.block_until_ready(mm_plus_mm(x, arg, force_streamed=True))
    assert jnp.allclose(out_streamed, ref, atol=2e-3, rtol=2e-3), "streamed mismatch"

    print("KERNEL_OK")
</pallas_src>

<mosaic_0001>
module attributes {stable_mosaic.version = 11 : i64} {
  func.func @_fused_kernel(%arg0: i32, %arg1: i32, %arg2: memref<512x512xf32, #tpu.memory_space<vmem>>, %arg3: memref<512x256xf32, #tpu.memory_space<vmem>>, %arg4: memref<256x512xf32, #tpu.memory_space<vmem>>, %arg5: memref<256x256xf32, #tpu.memory_space<vmem>>, %arg6: memref<512x256xf32, #tpu.memory_space<vmem>>) attributes {dimension_semantics = [#tpu.dimension_semantics<parallel>, #tpu.dimension_semantics<arbitrary>], iteration_bounds = array<i64: 2, 2>, scalar_prefetch = 0 : i64, scratch_operands = 1 : i64, tpu.core_type = #tpu.core_type<tc>, window_params = [{pipeline_mode = #tpu.pipeline_mode<synchronous>, transform_indices = @transform_0, window_bounds = array<i64: 512, 512>}, {transform_indices = @transform_1, window_bounds = array<i64: 512, 256>}, {transform_indices = @transform_2, window_bounds = array<i64: 256, 512>}, {transform_indices = @transform_3, window_bounds = array<i64: 256, 256>}]} {
    %c0_i32 = arith.constant 0 : i32
    %0 = arith.cmpi eq, %arg1, %c0_i32 : i32
    %1 = arith.extui %0 : i1 to i32
    %c0_i32_0 = arith.constant 0 : i32
    %2 = arith.cmpi ne, %1, %c0_i32_0 : i32
    scf.if %2 {
      %c0_7 = arith.constant 0 : index
      %c0_8 = arith.constant 0 : index
      %12 = vector.load %arg2[%c0_7, %c0_8] : memref<512x512xf32, #tpu.memory_space<vmem>>, vector<512x512xf32>
      %c0_9 = arith.constant 0 : index
      %c0_10 = arith.constant 0 : index
      %13 = vector.load %arg3[%c0_9, %c0_10] : memref<512x256xf32, #tpu.memory_space<vmem>>, vector<512x256xf32>
      %cst_11 = arith.constant dense<0.000000e+00> : vector<512x256xf32>
      %14 = tpu.matmul %12, %13, %cst_11 {dimension_numbers = #tpu.dot_dimension_numbers<[1], [0], [0], [1], [0, 0, 1, 1], [], []>} : vector<512x512xf32>, vector<512x256xf32>, vector<512x256xf32> -> vector<512x256xf32>
      %c0_12 = arith.constant 0 : index
      %c0_13 = arith.constant 0 : index
      %15 = vector.load %arg6[%c0_12, %c0_13] : memref<512x256xf32, #tpu.memory_space<vmem>>, vector<512x256xf32>
      tpu.vector_store %arg6[%c0_12, %c0_13], %14 {strides = array<i32>} : memref<512x256xf32, #tpu.memory_space<vmem>>, vector<512x256xf32>,
    } else {
    }
    %c256_i32 = arith.constant 256 : i32
    %3 = arith.muli %arg1, %c256_i32 : i32
    %4 = tpu.assume_multiple %3, 256 : i32
    %5 = arith.index_cast %4 : i32 to index
    %c0 = arith.constant 0 : index
    %6 = vector.load %arg6[%5, %c0] : memref<512x256xf32, #tpu.memory_space<vmem>>, vector<256x256xf32>
    %c0_1 = arith.constant 0 : index
    %c0_2 = arith.constant 0 : index
    %7 = vector.load %arg4[%c0_1, %c0_2] : memref<256x512xf32, #tpu.memory_space<vmem>>, vector<256x512xf32>
    %c0_3 = arith.constant 0 : index
    %c0_4 = arith.constant 0 : index
    %8 = vector.load %arg6[%c0_3, %c0_4] : memref<512x256xf32, #tpu.memory_space<vmem>>, vector<512x256xf32>
    %cst = arith.constant dense<0.000000e+00> : vector<256x256xf32>
    %9 = tpu.matmul %7, %8, %cst {dimension_numbers = #tpu.dot_dimension_numbers<[1], [0], [0], [1], [0, 0, 1, 1], [], []>} : vector<256x512xf32>, vector<512x256xf32>, vector<256x256xf32> -> vector<256x256xf32>
    %10 = arith.addf %9, %6 : vector<256x256xf32>
    %c0_5 = arith.constant 0 : index
    %c0_6 = arith.constant 0 : index
    %11 = vector.load %arg5[%c0_5, %c0_6] : memref<256x256xf32, #tpu.memory_space<vmem>>, vector<256x256xf32>
    tpu.vector_store %arg5[%c0_5, %c0_6], %10 {strides = array<i32>} : memref<256x256xf32, #tpu.memory_space<vmem>>, vector<256x256xf32>,
    return
  }
  func.func @transform_0(%arg0: i32, %arg1: i32) -> (i32, i32) {
    %c0_i32 = arith.constant 0 : i32
    %c0_i32_0 = arith.constant 0 : i32
    %c0_i32_1 = arith.constant 0 : i32
    return %c0_i32, %c0_i32_0 : i32, i32
  }
  func.func @transform_1(%arg0: i32, %arg1: i32) -> (i32, i32) {
    %c0_i32 = arith.constant 0 : i32
    %c0_i32_0 = arith.constant 0 : i32
    return %c0_i32, %arg0 : i32, i32
  }
  func.func @transform_2(%arg0: i32, %arg1: i32) -> (i32, i32) {
    %c0_i32 = arith.constant 0 : i32
    %c0_i32_0 = arith.constant 0 : i32
    return %arg1, %c0_i32 : i32, i32
  }
  func.func @transform_3(%arg0: i32, %arg1: i32) -> (i32, i32) {
    %c0_i32 = arith.constant 0 : i32
    return %arg1, %arg0 : i32, i32
  }
}

module attributes {stable_mosaic.version = 11 : i64} {
  func.func @_fused_kernel(%arg0: i32, %arg1: i32, %arg2: memref<512x512xf32, #tpu.memory_space<vmem>>, %arg3: memref<512x256xf32, #tpu.memory_space<vmem>>, %arg4: memref<256x512xf32, #tpu.memory_space<vmem>>, %arg5: memref<256x256xf32, #tpu.memory_space<vmem>>, %arg6: memref<512x256xf32, #tpu.memory_space<vmem>>) attributes {dimension_semantics = [#tpu.dimension_semantics<parallel>, #tpu.dimension_semantics<arbitrary>], iteration_bounds = array<i64: 2, 2>, scalar_prefetch = 0 : i64, scratch_operands = 1 : i64, tpu.core_type = #tpu.core_type<tc>, window_params = [{pipeline_mode = #tpu.pipeline_mode<synchronous>, transform_indices = @transform_0, window_bounds = array<i64: 512, 512>}, {transform_indices = @transform_1, window_bounds = array<i64: 512, 256>}, {transform_indices = @transform_2, window_bounds = array<i64: 256, 512>}, {transform_indices = @transform_3, window_bounds = array<i64: 256, 256>}]} {
    %c0_i32 = arith.constant 0 : i32
    %0 = arith.cmpi eq, %arg1, %c0_i32 : i32
    %1 = arith.extui %0 : i1 to i32
    %c0_i32_0 = arith.constant 0 : i32
    %2 = arith.cmpi ne, %1, %c0_i32_0 : i32
    scf.if %2 {
      %c0_7 = arith.constant 0 : index
      %c0_8 = arith.constant 0 : index
      %12 = vector.load %arg2[%c0_7, %c0_8] : memref<512x512xf32, #tpu.memory_space<vmem>>, vector<512x512xf32>
      %c0_9 = arith.constant 0 : index
      %c0_10 = arith.constant 0 : index
      %13 = vector.load %arg3[%c0_9, %c0_10] : memref<512x256xf32, #tpu.memory_space<vmem>>, vector<512x256xf32>
      %cst_11 = arith.constant dense<0.000000e+00> : vector<512x256xf32>
      %14 = tpu.matmul %12, %13, %cst_11 {dimension_numbers = #tpu.dot_dimension_numbers<[1], [0], [0], [1], [0, 0, 1, 1], [], []>} : vector<512x512xf32>, vector<512x256xf32>, vector<512x256xf32> -> vector<512x256xf32>
      %c0_12 = arith.constant 0 : index
      %c0_13 = arith.constant 0 : index
      %15 = vector.load %arg6[%c0_12, %c0_13] : memref<512x256xf32, #tpu.memory_space<vmem>>, vector<512x256xf32>
      tpu.vector_store %arg6[%c0_12, %c0_13], %14 {strides = array<i32>} : memref<512x256xf32, #tpu.memory_space<vmem>>, vector<512x256xf32>,
    } else {
    }
    %c256_i32 = arith.constant 256 : i32
    %3 = arith.muli %arg1, %c256_i32 : i32
    %4 = tpu.assume_multiple %3, 256 : i32
    %5 = arith.index_cast %4 : i32 to index
    %c0 = arith.constant 0 : index
    %6 = vector.load %arg6[%5, %c0] : memref<512x256xf32, #tpu.memory_space<vmem>>, vector<256x256xf32>
    %c0_1 = arith.constant 0 : index
    %c0_2 = arith.constant 0 : index
    %7 = vector.load %arg4[%c0_1, %c0_2] : memref<256x512xf32, #tpu.memory_space<vmem>>, vector<256x512xf32>
    %c0_3 = arith.constant 0 : index
    %c0_4 = arith.constant 0 : index
    %8 = vector.load %arg6[%c0_3, %c0_4] : memref<512x256xf32, #tpu.memory_space<vmem>>, vector<512x256xf32>
    %cst = arith.constant dense<0.000000e+00> : vector<256x256xf32>
    %9 = tpu.matmul %7, %8, %cst {dimension_numbers = #tpu.dot_dimension_numbers<[1], [0], [0], [1], [0, 0, 1, 1], [], []>} : vector<256x512xf32>, vector<512x256xf32>, vector<256x256xf32> -> vector<256x256xf32>
    %10 = arith.addf %9, %6 : vector<256x256xf32>
    %c0_5 = arith.constant 0 : index
    %c0_6 = arith.constant 0 : index
    %11 = vector.load %arg5[%c0_5, %c0_6] : memref<256x256xf32, #tpu.memory_space<vmem>>, vector<256x256xf32>
    tpu.vector_store %arg5[%c0_5, %c0_6], %10 {strides = array<i32>} : memref<256x256xf32, #tpu.memory_space<vmem>>, vector<256x256xf32>,
    return
  }
  func.func @transform_0(%arg0: i32, %arg1: i32) -> (i32, i32) {
    %c0_i32 = arith.constant 0 : i32
    %c0_i32_0 = arith.constant 0 : i32
    %c0_i32_1 = arith.constant 0 : i32
    return %c0_i32, %c0_i32_0 : i32, i32
  }
  func.func @transform_1(%arg0: i32, %arg1: i32) -> (i32, i32) {
    %c0_i32 = arith.constant 0 : i32
    %c0_i32_0 = arith.constant 0 : i32
    return %c0_i32, %arg0 : i32, i32
  }
  func.func @transform_2(%arg0: i32, %arg1: i32) -> (i32, i32) {
    %c0_i32 = arith.constant 0 : i32
    %c0_i32_0 = arith.constant 0 : i32
    return %arg1, %c0_i32 : i32, i32
  }
  func.func @transform_3(%arg0: i32, %arg1: i32) -> (i32, i32) {
    %c0_i32 = arith.constant 0 : i32
    return %arg1, %arg0 : i32, i32
  }
}

</mosaic_0001>

<llo_original>
// kernel: tpu_custom_call.1
$region0: #{tpu_custom_call.1}
  #allocation0 [shape = 'u32[]', space=smem, size = 0x4, offset = 0x4, fixed_abs, tag = 'smem constant byte address 0x4 - core index']
  #allocation1 [shape = 'u32[144,128]{1,0:T(1,128)}', space=vmem, size = 0x12000, scoped, tag = 'internal scratch']
  #allocation2 [shape = 'f32[512,256]{1,0:T(8,128)}', space=vmem, size = 0x80000, scoped, tag = 'scratch operand']
  %s0 = inlined_call_operand.hbm [shape: f32[512,512], index: 0, kind: input, shape index: {}]
  %s1 = inlined_call_operand.hbm [shape: f32[512,512], index: 1, kind: input, shape index: {}]
  %s2 = inlined_call_operand.hbm [shape: f32[512,512], index: 2, kind: input, shape index: {}]
  %s3 = inlined_call_operand.hbm [shape: f32[512,512], index: 3, kind: output, shape index: {}]
  %s4 = sld [smem:[#allocation0]]
  $region61: #{tpu_custom_call.1} parent=0
    _
  %s6 = ssub.s32 1, %s4
  %s7 = scalar_select 0, %s6, %s4
  $region1: #{tpu_custom_call.1} parent=0
    #allocation3 [shape = 'u8[1048576]{0}', space=vmem, size = 0x100000, scoped, tag = 'input window, operand 0, single buffered']
    #allocation4 [shape = 's32[2]{0}', space=sflag, size = 0x8, scoped, tag = 'scoped memory for tpu_custom_call.1']
    #allocation5 [shape = 's32[2]{0}', space=sflag, size = 0x8, scoped, tag = 'scoped memory for tpu_custom_call.1']
    #allocation6 [shape = 'u8[1048576]{0}', space=vmem, size = 0x100000, scoped, tag = 'input window, operand 1']
    #allocation7 [shape = 's32[2]{0}', space=sflag, size = 0x8, scoped, tag = 'scoped memory for tpu_custom_call.1']
    #allocation8 [shape = 'u8[1048576]{0}', space=vmem, size = 0x100000, scoped, tag = 'input window, operand 2']
    #allocation9 [shape = 'u8[524288]{0}', space=vmem, size = 0x80000, scoped, tag = 'output window, operand 0']
    %8 = vsyncpa [#allocation4], 0
    %9 = vsyncpa [#allocation7], 0
    %s10 = scalar_lea.sflag [#allocation7], 1
    %11 = vsyncpa %s10, 0
    %12 = vsyncpa [#allocation5], 0
    %s13 = scalar_lea.sflag [#allocation5], 1
    %14 = vsyncpa %s13, 0
    loop: start=0, step=1, limit=6
    $region2: #{tpu_custom_call.1} parent=1 // loop_pre_header
      _
    $region3: #{tpu_custom_call.1} parent=1 // loop_header
      %s16 = sphi 0, %s20
      %p17 = scmp.ge.s32.totalorder %s16, 6
      %s23 = sphi 0, %s35
      %s24 = sphi 0, %s31
      %s25 = sphi 0, %s23
      %s26 = sphi 0, %s24
      %s27 = sphi 0, %s25
      %s28 = sphi 0, %s26
      %s36 = sphi 0, %s36
      %s38 = sphi 0, %s36
      %s39 = sphi 0, %s38
      %s53 = sphi 0, %s39
      %s59 = sphi 0, %s61
      %s62 = sphi 0, %s59
      %s63 = sphi 0, %s62
      %s79 = sphi 0, %s63
      %s85 = sphi 0, %s87
      %s88 = sphi 0, %s85
      %s89 = sphi 0, %s88
      %s105 = sphi 0, %s89
      %s113 = sphi 0, %s115
      %s116 = sphi 0, %s113
      %s117 = sphi 0, %s116
      %s133 = sphi 0, %s117
    $region4: #{tpu_custom_call.1} parent=1 // loop_header_branch
      %19 = sbr.rel (%p17) target = $region8
    $region5: #{tpu_custom_call.1} parent=1 // loop_body
      %s21 = ssub.s32 %s16, 1
      %s22 = ssub.s32 %s16, 2
      %s29 = sadd.s32 1, %s24
      %p30 = scmp.ge.s32.totalorder %s29, 2
      %s31 = scalar_select %p30, 0, %s29
      %s32 = sadd.s32 1, %s23
      %s33 = scalar_select %p30, %s32, %s23
      %p34 = scmp.ge.s32.totalorder %s33, 2
      %s35 = scalar_select %p34, 0, %s33
      %s37 = sadd.s32 %s36, 1
      %p40 = scmp.eq.s32.totalorder %s16, 3
      %p41 = scmp.ne.s32.totalorder %s36, %s38
      %p42 = scmp.eq.s32.totalorder %s16, 0
      %p43 = por %p41, %p42
      %p44 = scmp.ne.s32.totalorder %s36, %s38
      %p45 = scmp.eq.s32.totalorder %s21, 3
      %p46 = por %p44, %p45
      %p47 = scmp.ne.s32.totalorder %s38, %s39
      %p48 = scmp.eq.s32.totalorder %s21, 0
      %p49 = por %p47, %p48
      %p50 = scmp.ne.s32.totalorder %s38, %s39
      %p51 = scmp.eq.s32.totalorder %s22, 3
      %p52 = por %p50, %p51
      %p54 = scmp.ne.s32.totalorder %s39, %s53
      %p55 = scmp.eq.s32.totalorder %s22, 0
      %p56 = por %p54, %p55
      %s57 = ssub.s32 %s23, %s35
      %p58 = scmp.eq.s32.totalorder %s57, 0
      %s60 = sadd.s32 %s59, 1
      %s61 = scalar_select %p58, %s59, %s60
      %p64 = pneg %p58
      %p65 = scmp.eq.s32.totalorder %s16, 3
      %p66 = por %p64, %p65
      %p67 = scmp.ne.s32.totalorder %s59, %s62
      %p68 = scmp.eq.s32.totalorder %s16, 0
      %p69 = por %p67, %p68
      %p70 = scmp.ne.s32.totalorder %s59, %s62
      %p71 = scmp.eq.s32.totalorder %s21, 3
      %p72 = por %p70, %p71
      %p73 = scmp.ne.s32.totalorder %s62, %s63
      %p74 = scmp.eq.s32.totalorder %s21, 0
      %p75 = por %p73, %p74
      %p76 = scmp.ne.s32.totalorder %s62, %s63
      %p77 = scmp.eq.s32.totalorder %s22, 3
      %p78 = por %p76, %p77
      %p80 = scmp.ne.s32.totalorder %s63, %s79
      %p81 = scmp.eq.s32.totalorder %s22, 0
      %p82 = por %p80, %p81
      %s83 = ssub.s32 %s24, %s31
      %p84 = scmp.eq.s32.totalorder %s83, 0
      %s86 = sadd.s32 %s85, 1
      %s87 = scalar_select %p84, %s85, %s86
      %p90 = pneg %p84
      %p91 = scmp.eq.s32.totalorder %s16, 3
      %p92 = por %p90, %p91
      %p93 = scmp.ne.s32.totalorder %s85, %s88
      %p94 = scmp.eq.s32.totalorder %s16, 0
      %p95 = por %p93, %p94
      %p96 = scmp.ne.s32.totalorder %s85, %s88
      %p97 = scmp.eq.s32.totalorder %s21, 3
      %p98 = por %p96, %p97
      %p99 = scmp.ne.s32.totalorder %s88, %s89
      %p100 = scmp.eq.s32.totalorder %s21, 0
      %p101 = por %p99, %p100
      %p102 = scmp.ne.s32.totalorder %s88, %s89
      %p103 = scmp.eq.s32.totalorder %s22, 3
      %p104 = por %p102, %p103
      %p106 = scmp.ne.s32.totalorder %s89, %s105
      %p107 = scmp.eq.s32.totalorder %s22, 0
      %p108 = por %p106, %p107
      %s109 = ssub.s32 %s24, %s31
      %s110 = ssub.s32 %s23, %s35
      %s111 = sor.u32 %s109, %s110
      %p112 = scmp.eq.s32.totalorder %s111, 0
      %s114 = sadd.s32 %s113, 1
      %s115 = scalar_select %p112, %s113, %s114
      %p118 = pneg %p112
      %p119 = scmp.eq.s32.totalorder %s16, 3
      %p120 = por %p118, %p119
      %p121 = scmp.ne.s32.totalorder %s113, %s116
      %p122 = scmp.eq.s32.totalorder %s16, 0
      %p123 = por %p121, %p122
      %p124 = scmp.ne.s32.totalorder %s113, %s116
      %p125 = scmp.eq.s32.totalorder %s21, 3
      %p126 = por %p124, %p125
      %p127 = scmp.ne.s32.totalorder %s116, %s117
      %p128 = scmp.eq.s32.totalorder %s21, 0
      %p129 = por %p127, %p128
      %p130 = scmp.ne.s32.totalorder %s116, %s117
      %p131 = scmp.eq.s32.totalorder %s22, 3
      %p132 = por %p130, %p131
      %p134 = scmp.ne.s32.totalorder %s117, %s133
      %p135 = scmp.eq.s32.totalorder %s22, 0
      %p136 = por %p134, %p135
      %p137 = scmp.le.s32.totalorder 1, %s16
      %p138 = scmp.lt.s32.totalorder %s16, 5
      %p139 = pnand %p137, %p138
      %p140 = pneg %p139
      // Predicated region
      $region9: #{tpu_custom_call.1} parent=5 // pred_check
        _
      $region10: #{tpu_custom_call.1} parent=5 // pred_check_branch
        %142 = sbr.rel (%p139) target = $region12
      $region11: #{tpu_custom_call.1} parent=5 // pred_region
        %s143 = ssub.s32 %s16, 1
        // Predicated region
        $region13: #{tpu_custom_call.1} parent=11 // pred_check
          %p144 = pneg %p49
        $region14: #{tpu_custom_call.1} parent=11 // pred_check_branch
          %146 = sbr.rel (%p144) target = $region16
        $region15: #{tpu_custom_call.1} parent=11 // pred_region
          %s148 = ssub.s32 32768, 32768
          %149 = vsyncadd [#allocation4], %s148
          %s150 = sshll.u32 [#allocation3], 4
          %s151 = int_to_ptr.vmem [resolvable:$true] %s150
          %156 = dma.hbm_to_vmem [thread:$0]  %s0, 32768, %s151, [#allocation4], 512, 512, 32
        $region16: #{tpu_custom_call.1} parent=11 // pred_fallthru
          _
      $region12: #{tpu_custom_call.1} parent=5 // pred_fallthru
        _
      %p157 = scmp.lt.s32.totalorder %s16, 4
      // Predicated region
      $region17: #{tpu_custom_call.1} parent=5 // pred_check
        %p158 = pneg %p157
      $region18: #{tpu_custom_call.1} parent=5 // pred_check_branch
        %160 = sbr.rel (%p158) target = $region20
      $region19: #{tpu_custom_call.1} parent=5 // pred_region
        // Predicated region
        $region21: #{tpu_custom_call.1} parent=19 // pred_check
          %p161 = pneg %p69
        $region22: #{tpu_custom_call.1} parent=19 // pred_check_branch
          %163 = sbr.rel (%p161) target = $region24
        $region23: #{tpu_custom_call.1} parent=19 // pred_region
          %s164 = sand.u32 %s16, 1
          %s165 = scalar_lea.sflag [#allocation7], %s164
          %s166 = sand.u32 %s59, 1
          %s167 = smul.addr %s166, 1024
          %s168 = scalar_lea.vmem [#allocation6], %s167
          %s169 = smul.u32 2, %s23
          %s171 = ssub.s32 16384, 16384
          %172 = vsyncadd %s165, %s171
          %s173 = smul.addr %s169, 128
          %s174 = scalar_lea.hbm %s1, %s173
          %s175 = sshll.u32 %s168, 4
          %s176 = int_to_ptr.vmem [resolvable:$true] %s175
          %181 = dma.hbm_to_vmem [thread:$0]  %s174, 16384, %s176, %s165, 512, 256, 16
        $region24: #{tpu_custom_call.1} parent=19 // pred_fallthru
          _
        // Predicated region
        $region25: #{tpu_custom_call.1} parent=19 // pred_check
          %p182 = pneg %p95
        $region26: #{tpu_custom_call.1} parent=19 // pred_check_branch
          %184 = sbr.rel (%p182) target = $region28
        $region27: #{tpu_custom_call.1} parent=19 // pred_region
          %s185 = sand.u32 %s16, 1
          %s186 = scalar_lea.sflag [#allocation7], %s185
          %s187 = sand.u32 %s85, 1
          %s188 = smul.addr %s187, 1024
          %s189 = scalar_lea.vmem [#allocation8], %s188
          %s190 = smul.u32 32, %s24
          %s192 = ssub.s32 16384, 16384
          %193 = vsyncadd %s186, %s192
          %s194 = smul.addr %s190, 4
          %s195 = smul.addr %s194, 128
          %s196 = scalar_lea.hbm %s2, %s195
          %s197 = sshll.u32 %s189, 4
          %s198 = int_to_ptr.vmem [resolvable:$true] %s197
          %203 = dma.hbm_to_vmem [thread:$0]  %s196, 16384, %s198, %s186, 512, 512, 32
        $region28: #{tpu_custom_call.1} parent=19 // pred_fallthru
          _
      $region20: #{tpu_custom_call.1} parent=5 // pred_fallthru
        _
      %p204 = scmp.le.s32.totalorder 1, %s16
      %p205 = scmp.lt.s32.totalorder %s16, 5
      %p206 = pnand %p204, %p205
      %p207 = pneg %p206
      // Predicated region
      $region29: #{tpu_custom_call.1} parent=5 // pred_check
        _
      $region30: #{tpu_custom_call.1} parent=5 // pred_check_branch
        %209 = sbr.rel (%p206) target = $region32
      $region31: #{tpu_custom_call.1} parent=5 // pred_region
        %s210 = ssub.s32 %s16, 1
        // Predicated region
        $region33: #{tpu_custom_call.1} parent=31 // pred_check
          %p211 = pneg %p49
        $region34: #{tpu_custom_call.1} parent=31 // pred_check_branch
          %213 = sbr.rel (%p211) target = $region36
        $region35: #{tpu_custom_call.1} parent=31 // pred_region
          %214 = dma.done [#allocation4], 32768
        $region36: #{tpu_custom_call.1} parent=31 // pred_fallthru
          _
        %s215 = sand.u32 %s21, 1
        %s216 = scalar_lea.sflag [#allocation7], %s215
        %s217 = sand.u32 %s62, 1
        %s218 = smul.addr %s217, 1024
        %s219 = scalar_lea.vmem [#allocation6], %s218
        // Predicated region
        $region37: #{tpu_custom_call.1} parent=31 // pred_check
          %p220 = pneg %p75
        $region38: #{tpu_custom_call.1} parent=31 // pred_check_branch
          %222 = sbr.rel (%p220) target = $region40
        $region39: #{tpu_custom_call.1} parent=31 // pred_region
          %223 = dma.done %s216, 16384
        $region40: #{tpu_custom_call.1} parent=31 // pred_fallthru
          _
        %s224 = sand.u32 %s21, 1
        %s225 = scalar_lea.sflag [#allocation7], %s224
        %s226 = sand.u32 %s88, 1
        %s227 = smul.addr %s226, 1024
        %s228 = scalar_lea.vmem [#allocation8], %s227
        // Predicated region
        $region41: #{tpu_custom_call.1} parent=31 // pred_check
          %p229 = pneg %p101
        $region42: #{tpu_custom_call.1} parent=31 // pred_check_branch
          %231 = sbr.rel (%p229) target = $region44
        $region43: #{tpu_custom_call.1} parent=31 // pred_region
          %232 = dma.done %s225, 16384
        $region44: #{tpu_custom_call.1} parent=31 // pred_fallthru
          _
        %p233 = pneg %p49
        %p234 = pneg %p46
        %s235 = sand.u32 %s21, 1
        %s236 = scalar_lea.sflag [#allocation7], %s235
        %s237 = sand.u32 %s62, 1
        %s238 = smul.addr %s237, 1024
        %s239 = scalar_lea.vmem [#allocation6], %s238
        %p240 = pneg %p75
        %p241 = pneg %p72
        %s242 = sand.u32 %s21, 1
        %s243 = scalar_lea.sflag [#allocation7], %s242
        %s244 = sand.u32 %s88, 1
        %s245 = smul.addr %s244, 1024
        %s246 = scalar_lea.vmem [#allocation8], %s245
        %p247 = pneg %p101
        %p248 = pneg %p98
        %p249 = pneg %p129
        %p250 = pneg %p126
        %s251 = sand.u32 %s116, 1
        %s252 = scalar_lea.sflag [#allocation5], %s251
        %s253 = sand.u32 %s116, 1
        %s254 = smul.addr %s253, 512
        %s255 = scalar_lea.vmem [#allocation9], %s254
        %s256 = smul.u32 2, %s25
        %s257 = smul.u32 32, %s26
        %s258 = smul.u32 32, %s26
        %s259 = smul.u32 2, %s25
        %p260 = scmp.eq.s32.totalorder %s26, 0
        // Predicated region
        $region45: #{tpu_custom_call.1} parent=31 // pred_check
          %p261 = pneg %p260
        $region46: #{tpu_custom_call.1} parent=31 // pred_check_branch
          %263 = sbr.rel (%p261) target = $region48
        $region47: #{tpu_custom_call.1} parent=31 // pred_region
          %v264 = vld [vmem:[#allocation3] sm:$0xff]
          %v265 = vld [vmem:[#allocation3 + $0x8] sm:$0xff]
          %v266 = vld [vmem:[#allocation3 + $0x10] sm:$0xff]
          %v267 = vld [vmem:[#allocation3 + $0x18] sm:$0xff]
          %v268 = vld [vmem:[#allocation3 + $0x20] sm:$0xff]
          %v269 = vld [vmem:[#allocation3 + $0x28] sm:$0xff]
          %v270 = vld [vmem:[#allocation3 + $0x30] sm:$0xff]
          %v271 = vld [vmem:[#allocation3 + $0x38] sm:$0xff]
          %v272 = vld [vmem:[#allocation3 + $0x40] sm:$0xff]
          %v273 = vld [vmem:[#allocation3 + $0x48] sm:$0xff]
          %v274 = vld [vmem:[#allocation3 + $0x50] sm:$0xff]
          %v275 = vld [vmem:[#allocation3 + $0x58] sm:$0xff]
          %v276 = vld [vmem:[#allocation3 + $0x60] sm:$0xff]
          %v277 = vld [vmem:[#allocation3 + $0x68] sm:$0xff]
          %v278 = vld [vmem:[#allocation3 + $0x70] sm:$0xff]
          %v279 = vld [vmem:[#allocation3 + $0x78] sm:$0xff]
          %v280 = vld [vmem:[#allocation3 + $0x80] sm:$0xff]
          %v281 = vld [vmem:[#allocation3 + $0x88] sm:$0xff]
          %v282 = vld [vmem:[#allocation3 + $0x90] sm:$0xff]
          %v283 = vld [vmem:[#allocation3 + $0x98] sm:$0xff]
          %v284 = vld [vmem:[#allocation3 + $0xa0] sm:$0xff]
          %v285 = vld [vmem:[#allocation3 + $0xa8] sm:$0xff]
          %v286 = vld [vmem:[#allocation3 + $0xb0] sm:$0xff]
          %v287 = vld [vmem:[#allocation3 + $0xb8] sm:$0xff]
          %v288 = vld [vmem:[#allocation3 + $0xc0] sm:$0xff]
          %v289 = vld [vmem:[#allocation3 + $0xc8] sm:$0xff]
          %v290 = vld [vmem:[#allocation3 + $0xd0] sm:$0xff]
          %v291 = vld [vmem:[#allocation3 + $0xd8] sm:$0xff]
          %v292 = vld [vmem:[#allocation3 + $0xe0] sm:$0xff]
          %v293 = vld [vmem:[#allocation3 + $0xe8] sm:$0xff]
          %v294 = vld [vmem:[#allocation3 + $0xf0] sm:$0xff]
          %v295 = vld [vmem:[#allocation3 + $0xf8] sm:$0xff]
          %v296 = vld [vmem:[#allocation3 + $0x100] sm:$0xff]
          %v297 = vld [vmem:[#allocation3 + $0x108] sm:$0xff]
          %v298 = vld [vmem:[#allocation3 + $0x110] sm:$0xff]
          %v299 = vld [vmem:[#allocation3 + $0x118] sm:$0xff]
          %v300 = vld [vmem:[#allocation3 + $0x120] sm:$0xff]
          %v301 = vld [vmem:[#allocation3 + $0x128] sm:$0xff]
          %v302 = vld [vmem:[#allocation3 + $0x130] sm:$0xff]
          %v303 = vld [vmem:[#allocation3 + $0x138] sm:$0xff]
          %v304 = vld [vmem:[#allocation3 + $0x140] sm:$0xff]
          %v305 = vld [vmem:[#allocation3 + $0x148] sm:$0xff]
          %v306 = vld [vmem:[#allocation3 + $0x150] sm:$0xff]
          %v307 = vld [vmem:[#allocation3 + $0x158] sm:$0xff]
          %v308 = vld [vmem:[#allocation3 + $0x160] sm:$0xff]
          %v309 = vld [vmem:[#allocation3 + $0x168] sm:$0xff]
          %v310 = vld [vmem:[#allocation3 + $0x170] sm:$0xff]
          %v311 = vld [vmem:[#allocation3 + $0x178] sm:$0xff]
          %v312 = vld [vmem:[#allocation3 + $0x180] sm:$0xff]
          %v313 = vld [vmem:[#allocation3 + $0x188] sm:$0xff]
          %v314 = vld [vmem:[#allocation3 + $0x190] sm:$0xff]
          %v315 = vld [vmem:[#allocation3 + $0x198] sm:$0xff]
          %v316 = vld [vmem:[#allocation3 + $0x1a0] sm:$0xff]
          %v317 = vld [vmem:[#allocation3 + $0x1a8] sm:$0xff]
          %v318 = vld [vmem:[#allocation3 + $0x1b0] sm:$0xff]
          %v319 = vld [vmem:[#allocation3 + $0x1b8] sm:$0xff]
          %v320 = vld [vmem:[#allocation3 + $0x1c0] sm:$0xff]
          %v321 = vld [vmem:[#allocation3 + $0x1c8] sm:$0xff]
          %v322 = vld [vmem:[#allocation3 + $0x1d0] sm:$0xff]
          %v323 = vld [vmem:[#allocation3 + $0x1d8] sm:$0xff]
          %v324 = vld [vmem:[#allocation3 + $0x1e0] sm:$0xff]
          %v325 = vld [vmem:[#allocation3 + $0x1e8] sm:$0xff]
          %v326 = vld [vmem:[#allocation3 + $0x1f0] sm:$0xff]
          %v327 = vld [vmem:[#allocation3 + $0x1f8] sm:$0xff]
          %v328 = vld [vmem:[#allocation3 + $0x200] sm:$0xff]
          %v329 = vld [vmem:[#allocation3 + $0x208] sm:$0xff]
          %v330 = vld [vmem:[#allocation3 + $0x210] sm:$0xff]
          %v331 = vld [vmem:[#allocation3 + $0x218] sm:$0xff]
          %v332 = vld [vmem:[#allocation3 + $0x220] sm:$0xff]
          %v333 = vld [vmem:[#allocation3 + $0x228] sm:$0xff]
          %v334 = vld [vmem:[#allocation3 + $0x230] sm:$0xff]
          %v335 = vld [vmem:[#allocation3 + $0x238] sm:$0xff]
          %v336 = vld [vmem:[#allocation3 + $0x240] sm:$0xff]
          %v337 = vld [vmem:[#allocation3 + $0x248] sm:$0xff]
          %v338 = vld [vmem:[#allocation3 + $0x250] sm:$0xff]
          %v339 = vld [vmem:[#allocation3 + $0x258] sm:$0xff]
          %v340 = vld [vmem:[#allocation3 + $0x260] sm:$0xff]
          %v341 = vld [vmem:[#allocation3 + $0x268] sm:$0xff]
          %v342 = vld [vmem:[#allocation3 + $0x270] sm:$0xff]
          %v343 = vld [vmem:[#allocation3 + $0x278] sm:$0xff]
          %v344 = vld [vmem:[#allocation3 + $0x280] sm:$0xff]
          %v345 = vld [vmem:[#allocation3 + $0x288] sm:$0xff]
          %v346 = vld [vmem:[#allocation3 + $0x290] sm:$0xff]
          %v347 = vld [vmem:[#allocation3 + $0x298] sm:$0xff]
          %v348 = vld [vmem:[#allocation3 + $0x2a0] sm:$0xff]
          %v349 = vld [vmem:[#allocation3 + $0x2a8] sm:$0xff]
          %v350 = vld [vmem:[#allocation3 + $0x2b0] sm:$0xff]
          %v351 = vld [vmem:[#allocation3 + $0x2b8] sm:$0xff]
          %v352 = vld [vmem:[#allocation3 + $0x2c0] sm:$0xff]
          %v353 = vld [vmem:[#allocation3 + $0x2c8] sm:$0xff]
          %v354 = vld [vmem:[#allocation3 + $0x2d0] sm:$0xff]
          %v355 = vld [vmem:[#allocation3 + $0x2d8] sm:$0xff]
          %v356 = vld [vmem:[#allocation3 + $0x2e0] sm:$0xff]
          %v357 = vld [vmem:[#allocation3 + $0x2e8] sm:$0xff]
          %v358 = vld [vmem:[#allocation3 + $0x2f0] sm:$0xff]
          %v359 = vld [vmem:[#allocation3 + $0x2f8] sm:$0xff]
          %v360 = vld [vmem:[#allocation3 + $0x300] sm:$0xff]
          %v361 = vld [vmem:[#allocation3 + $0x308] sm:$0xff]
          %v362 = vld [vmem:[#allocation3 + $0x310] sm:$0xff]
          %v363 = vld [vmem:[#allocation3 + $0x318] sm:$0xff]
          %v364 = vld [vmem:[#allocation3 + $0x320] sm:$0xff]
          %v365 = vld [vmem:[#allocation3 + $0x328] sm:$0xff]
          %v366 = vld [vmem:[#allocation3 + $0x330] sm:$0xff]
          %v367 = vld [vmem:[#allocation3 + $0x338] sm:$0xff]
          %v368 = vld [vmem:[#allocation3 + $0x340] sm:$0xff]
          %v369 = vld [vmem:[#allocation3 + $0x348] sm:$0xff]
          %v370 = vld [vmem:[#allocation3 + $0x350] sm:$0xff]
          %v371 = vld [vmem:[#allocation3 + $0x358] sm:$0xff]
          %v372 = vld [vmem:[#allocation3 + $0x360] sm:$0xff]
          %v373 = vld [vmem:[#allocation3 + $0x368] sm:$0xff]
          %v374 = vld [vmem:[#allocation3 + $0x370] sm:$0xff]
          %v375 = vld [vmem:[#allocation3 + $0x378] sm:$0xff]
          %v376 = vld [vmem:[#allocation3 + $0x380] sm:$0xff]
          %v377 = vld [vmem:[#allocation3 + $0x388] sm:$0xff]
          %v378 = vld [vmem:[#allocation3 + $0x390] sm:$0xff]
          %v379 = vld [vmem:[#allocation3 + $0x398] sm:$0xff]
          %v380 = vld [vmem:[#allocation3 + $0x3a0] sm:$0xff]
          %v381 = vld [vmem:[#allocation3 + $0x3a8] sm:$0xff]
          %v382 = vld [vmem:[#allocation3 + $0x3b0] sm:$0xff]
          %v383 = vld [vmem:[#allocation3 + $0x3b8] sm:$0xff]
          %v384 = vld [vmem:[#allocation3 + $0x3c0] sm:$0xff]
          %v385 = vld [vmem:[#allocation3 + $0x3c8] sm:$0xff]
          %v386 = vld [vmem:[#allocation3 + $0x3d0] sm:$0xff]
          %v387 = vld [vmem:[#allocation3 + $0x3d8] sm:$0xff]
          %v388 = vld [vmem:[#allocation3 + $0x3e0] sm:$0xff]
          %v389 = vld [vmem:[#allocation3 + $0x3e8] sm:$0xff]
          %v390 = vld [vmem:[#allocation3 + $0x3f0] sm:$0xff]
          %v391 = vld [vmem:[#allocation3 + $0x3f8] sm:$0xff]
          %v392 = vld [vmem:[#allocation3 + $0x400] sm:$0xff]
          %v393 = vld [vmem:[#allocation3 + $0x408] sm:$0xff]
          %v394 = vld [vmem:[#allocation3 + $0x410] sm:$0xff]
          %v395 = vld [vmem:[#allocation3 + $0x418] sm:$0xff]
          %v396 = vld [vmem:[#allocation3 + $0x420] sm:$0xff]
          %v397 = vld [vmem:[#allocation3 + $0x428] sm:$0xff]
          %v398 = vld [vmem:[#allocation3 + $0x430] sm:$0xff]
          %v399 = vld [vmem:[#allocation3 + $0x438] sm:$0xff]
          %v400 = vld [vmem:[#allocation3 + $0x440] sm:$0xff]
          %v401 = vld [vmem:[#allocation3 + $0x448] sm:$0xff]
          %v402 = vld [vmem:[#allocation3 + $0x450] sm:$0xff]
          %v403 = vld [vmem:[#allocation3 + $0x458] sm:$0xff]
          %v404 = vld [vmem:[#allocation3 + $0x460] sm:$0xff]
          %v405 = vld [vmem:[#allocation3 + $0x468] sm:$0xff]
          %v406 = vld [vmem:[#allocation3 + $0x470] sm:$0xff]
          %v407 = vld [vmem:[#allocation3 + $0x478] sm:$0xff]
          %v408 = vld [vmem:[#allocation3 + $0x480] sm:$0xff]
          %v409 = vld [vmem:[#allocation3 + $0x488] sm:$0xff]
          %v410 = vld [vmem:[#allocation3 + $0x490] sm:$0xff]
          %v411 = vld [vmem:[#allocation3 + $0x498] sm:$0xff]
          %v412 = vld [vmem:[#allocation3 + $0x4a0] sm:$0xff]
          %v413 = vld [vmem:[#allocation3 + $0x4a8] sm:$0xff]
          %v414 = vld [vmem:[#allocation3 + $0x4b0] sm:$0xff]
          %v415 = vld [vmem:[#allocation3 + $0x4b8] sm:$0xff]
          %v416 = vld [vmem:[#allocation3 + $0x4c0] sm:$0xff]
          %v417 = vld [vmem:[#allocation3 + $0x4c8] sm:$0xff]
          %v418 = vld [vmem:[#allocation3 + $0x4d0] sm:$0xff]
          %v419 = vld [vmem:[#allocation3 + $0x4d8] sm:$0xff]
          %v420 = vld [vmem:[#allocation3 + $0x4e0] sm:$0xff]
          %v421 = vld [vmem:[#allocation3 + $0x4e8] sm:$0xff]
          %v422 = vld [vmem:[#allocation3 + $0x4f0] sm:$0xff]
          %v423 = vld [vmem:[#allocation3 + $0x4f8] sm:$0xff]
          %v424 = vld [vmem:[#allocation3 + $0x500] sm:$0xff]
          %v425 = vld [vmem:[#allocation3 + $0x508] sm:$0xff]
          %v426 = vld [vmem:[#allocation3 + $0x510] sm:$0xff]
          %v427 = vld [vmem:[#allocation3 + $0x518] sm:$0xff]
          %v428 = vld [vmem:[#allocation3 + $0x520] sm:$0xff]
          %v429 = vld [vmem:[#allocation3 + $0x528] sm:$0xff]
          %v430 = vld [vmem:[#allocation3 + $0x530] sm:$0xff]
          %v431 = vld [vmem:[#allocation3 + $0x538] sm:$0xff]
          %v432 = vld [vmem:[#allocation3 + $0x540] sm:$0xff]
          %v433 = vld [vmem:[#allocation3 + $0x548] sm:$0xff]
          %v434 = vld [vmem:[#allocation3 + $0x550] sm:$0xff]
          %v435 = vld [vmem:[#allocation3 + $0x558] sm:$0xff]
          %v436 = vld [vmem:[#allocation3 + $0x560] sm:$0xff]
          %v437 = vld [vmem:[#allocation3 + $0x568] sm:$0xff]
          %v438 = vld [vmem:[#allocation3 + $0x570] sm:$0xff]
          %v439 = vld [vmem:[#allocation3 + $0x578] sm:$0xff]
          %v440 = vld [vmem:[#allocation3 + $0x580] sm:$0xff]
          %v441 = vld [vmem:[#allocation3 + $0x588] sm:$0xff]
          %v442 = vld [vmem:[#allocation3 + $0x590] sm:$0xff]
          %v443 = vld [vmem:[#allocation3 + $0x598] sm:$0xff]
          %v444 = vld [vmem:[#allocation3 + $0x5a0] sm:$0xff]
          %v445 = vld [vmem:[#allocation3 + $0x5a8] sm:$0xff]
          %v446 = vld [vmem:[#allocation3 + $0x5b0] sm:$0xff]
          %v447 = vld [vmem:[#allocation3 + $0x5b8] sm:$0xff]
          %v448 = vld [vmem:[#allocation3 + $0x5c0] sm:$0xff]
          %v449 = vld [vmem:[#allocation3 + $0x5c8] sm:$0xff]
          %v450 = vld [vmem:[#allocation3 + $0x5d0] sm:$0xff]
          %v451 = vld [vmem:[#allocation3 + $0x5d8] sm:$0xff]
          %v452 = vld [vmem:[#allocation3 + $0x5e0] sm:$0xff]
          %v453 = vld [vmem:[#allocation3 + $0x5e8] sm:$0xff]
          %v454 = vld [vmem:[#allocation3 + $0x5f0] sm:$0xff]
          %v455 = vld [vmem:[#allocation3 + $0x5f8] sm:$0xff]
          %v456 = vld [vmem:[#allocation3 + $0x600] sm:$0xff]
          %v457 = vld [vmem:[#allocation3 + $0x608] sm:$0xff]
          %v458 = vld [vmem:[#allocation3 + $0x610] sm:$0xff]
          %v459 = vld [vmem:[#allocation3 + $0x618] sm:$0xff]
          %v460 = vld [vmem:[#allocation3 + $0x620] sm:$0xff]
          %v461 = vld [vmem:[#allocation3 + $0x628] sm:$0xff]
          %v462 = vld [vmem:[#allocation3 + $0x630] sm:$0xff]
          %v463 = vld [vmem:[#allocation3 + $0x638] sm:$0xff]
          %v464 = vld [vmem:[#allocation3 + $0x640] sm:$0xff]
          %v465 = vld [vmem:[#allocation3 + $0x648] sm:$0xff]
          %v466 = vld [vmem:[#allocation3 + $0x650] sm:$0xff]
          %v467 = vld [vmem:[#allocation3 + $0x658] sm:$0xff]
          %v468 = vld [vmem:[#allocation3 + $0x660] sm:$0xff]
          %v469 = vld [vmem:[#allocation3 + $0x668] sm:$0xff]
          %v470 = vld [vmem:[#allocation3 + $0x670] sm:$0xff]
          %v471 = vld [vmem:[#allocation3 + $0x678] sm:$0xff]
          %v472 = vld [vmem:[#allocation3 + $0x680] sm:$0xff]
          %v473 = vld [vmem:[#allocation3 + $0x688] sm:$0xff]
          %v474 = vld [vmem:[#allocation3 + $0x690] sm:$0xff]
          %v475 = vld [vmem:[#allocation3 + $0x698] sm:$0xff]
          %v476 = vld [vmem:[#allocation3 + $0x6a0] sm:$0xff]
          %v477 = vld [vmem:[#allocation3 + $0x6a8] sm:$0xff]
          %v478 = vld [vmem:[#allocation3 + $0x6b0] sm:$0xff]
          %v479 = vld [vmem:[#allocation3 + $0x6b8] sm:$0xff]
          %v480 = vld [vmem:[#allocation3 + $0x6c0] sm:$0xff]
          %v481 = vld [vmem:[#allocation3 + $0x6c8] sm:$0xff]
          %v482 = vld [vmem:[#allocation3 + $0x6d0] sm:$0xff]
          %v483 = vld [vmem:[#allocation3 + $0x6d8] sm:$0xff]
          %v484 = vld [vmem:[#allocation3 + $0x6e0] sm:$0xff]
          %v485 = vld [vmem:[#allocation3 + $0x6e8] sm:$0xff]
          %v486 = vld [vmem:[#allocation3 + $0x6f0] sm:$0xff]
          %v487 = vld [vmem:[#allocation3 + $0x6f8] sm:$0xff]
          %v488 = vld [vmem:[#allocation3 + $0x700] sm:$0xff]
          %v489 = vld [vmem:[#allocation3 + $0x708] sm:$0xff]
          %v490 = vld [vmem:[#allocation3 + $0x710] sm:$0xff]
          %v491 = vld [vmem:[#allocation3 + $0x718] sm:$0xff]
          %v492 = vld [vmem:[#allocation3 + $0x720] sm:$0xff]
          %v493 = vld [vmem:[#allocation3 + $0x728] sm:$0xff]
          %v494 = vld [vmem:[#allocation3 + $0x730] sm:$0xff]
          %v495 = vld [vmem:[#allocation3 + $0x738] sm:$0xff]
          %v496 = vld [vmem:[#allocation3 + $0x740] sm:$0xff]
          %v497 = vld [vmem:[#allocation3 + $0x748] sm:$0xff]
          %v498 = vld [vmem:[#allocation3 + $0x750] sm:$0xff]
          %v499 = vld [vmem:[#allocation3 + $0x758] sm:$0xff]
          %v500 = vld [vmem:[#allocation3 + $0x760] sm:$0xff]
          %v501 = vld [vmem:[#allocation3 + $0x768] sm:$0xff]
          %v502 = vld [vmem:[#allocation3 + $0x770] sm:$0xff]
          %v503 = vld [vmem:[#allocation3 + $0x778] sm:$0xff]
          %v504 = vld [vmem:[#allocation3 + $0x780] sm:$0xff]
          %v505 = vld [vmem:[#allocation3 + $0x788] sm:$0xff]
          %v506 = vld [vmem:[#allocation3 + $0x790] sm:$0xff]
          %v507 = vld [vmem:[#allocation3 + $0x798] sm:$0xff]
          %v508 = vld [vmem:[#allocation3 + $0x7a0] sm:$0xff]
          %v509 = vld [vmem:[#allocation3 + $0x7a8] sm:$0xff]
          %v510 = vld [vmem:[#allocation3 + $0x7b0] sm:$0xff]
          %v511 = vld [vmem:[#allocation3 + $0x7b8] sm:$0xff]
          %v512 = vld [vmem:[#allocation3 + $0x7c0] sm:$0xff]
          %v513 = vld [vmem:[#allocation3 + $0x7c8] sm:$0xff]
          %v514 = vld [vmem:[#allocation3 + $0x7d0] sm:$0xff]
          %v515 = vld [vmem:[#allocation3 + $0x7d8] sm:$0xff]
          %v516 = vld [vmem:[#allocation3 + $0x7e0] sm:$0xff]
          %v517 = vld [vmem:[#allocation3 + $0x7e8] sm:$0xff]
          %v518 = vld [vmem:[#allocation3 + $0x7f0] sm:$0xff]
          %v519 = vld [vmem:[#allocation3 + $0x7f8] sm:$0xff]
          %v520 = vld [vmem:[%s219] sm:$0xff]
          %v521 = vld [vmem:[%s219 + $0x8] sm:$0xff]
          %v522 = vld [vmem:[%s219 + $0x10] sm:$0xff]
          %v523 = vld [vmem:[%s219 + $0x18] sm:$0xff]
          %v524 = vld [vmem:[%s219 + $0x20] sm:$0xff]
          %v525 = vld [vmem:[%s219 + $0x28] sm:$0xff]
          %v526 = vld [vmem:[%s219 + $0x30] sm:$0xff]
          %v527 = vld [vmem:[%s219 + $0x38] sm:$0xff]
          %v528 = vld [vmem:[%s219 + $0x40] sm:$0xff]
          %v529 = vld [vmem:[%s219 + $0x48] sm:$0xff]
          %v530 = vld [vmem:[%s219 + $0x50] sm:$0xff]
          %v531 = vld [vmem:[%s219 + $0x58] sm:$0xff]
          %v532 = vld [vmem:[%s219 + $0x60] sm:$0xff]
          %v533 = vld [vmem:[%s219 + $0x68] sm:$0xff]
          %v534 = vld [vmem:[%s219 + $0x70] sm:$0xff]
          %v535 = vld [vmem:[%s219 + $0x78] sm:$0xff]
          %v536 = vld [vmem:[%s219 + $0x80] sm:$0xff]
          %v537 = vld [vmem:[%s219 + $0x88] sm:$0xff]
          %v538 = vld [vmem:[%s219 + $0x90] sm:$0xff]
          %v539 = vld [vmem:[%s219 + $0x98] sm:$0xff]
          %v540 = vld [vmem:[%s219 + $0xa0] sm:$0xff]
          %v541 = vld [vmem:[%s219 + $0xa8] sm:$0xff]
          %v542 = vld [vmem:[%s219 + $0xb0] sm:$0xff]
          %v543 = vld [vmem:[%s219 + $0xb8] sm:$0xff]
          %v544 = vld [vmem:[%s219 + $0xc0] sm:$0xff]
          %v545 = vld [vmem:[%s219 + $0xc8] sm:$0xff]
          %v546 = vld [vmem:[%s219 + $0xd0] sm:$0xff]
          %v547 = vld [vmem:[%s219 + $0xd8] sm:$0xff]
          %v548 = vld [vmem:[%s219 + $0xe0] sm:$0xff]
          %v549 = vld [vmem:[%s219 + $0xe8] sm:$0xff]
          %v550 = vld [vmem:[%s219 + $0xf0] sm:$0xff]
          %v551 = vld [vmem:[%s219 + $0xf8] sm:$0xff]
          %v552 = vld [vmem:[%s219 + $0x100] sm:$0xff]
          %v553 = vld [vmem:[%s219 + $0x108] sm:$0xff]
          %v554 = vld [vmem:[%s219 + $0x110] sm:$0xff]
          %v555 = vld [vmem:[%s219 + $0x118] sm:$0xff]
          %v556 = vld [vmem:[%s219 + $0x120] sm:$0xff]
          %v557 = vld [vmem:[%s219 + $0x128] sm:$0xff]
          %v558 = vld [vmem:[%s219 + $0x130] sm:$0xff]
          %v559 = vld [vmem:[%s219 + $0x138] sm:$0xff]
          %v560 = vld [vmem:[%s219 + $0x140] sm:$0xff]
          %v561 = vld [vmem:[%s219 + $0x148] sm:$0xff]
          %v562 = vld [vmem:[%s219 + $0x150] sm:$0xff]
          %v563 = vld [vmem:[%s219 + $0x158] sm:$0xff]
          %v564 = vld [vmem:[%s219 + $0x160] sm:$0xff]
          %v565 = vld [vmem:[%s219 + $0x168] sm:$0xff]
          %v566 = vld [vmem:[%s219 + $0x170] sm:$0xff]
          %v567 = vld [vmem:[%s219 + $0x178] sm:$0xff]
          %v568 = vld [vmem:[%s219 + $0x180] sm:$0xff]
          %v569 = vld [vmem:[%s219 + $0x188] sm:$0xff]
          %v570 = vld [vmem:[%s219 + $0x190] sm:$0xff]
          %v571 = vld [vmem:[%s219 + $0x198] sm:$0xff]
          %v572 = vld [vmem:[%s219 + $0x1a0] sm:$0xff]
          %v573 = vld [vmem:[%s219 + $0x1a8] sm:$0xff]
          %v574 = vld [vmem:[%s219 + $0x1b0] sm:$0xff]
          %v575 = vld [vmem:[%s219 + $0x1b8] sm:$0xff]
          %v576 = vld [vmem:[%s219 + $0x1c0] sm:$0xff]
          %v577 = vld [vmem:[%s219 + $0x1c8] sm:$0xff]
          %v578 = vld [vmem:[%s219 + $0x1d0] sm:$0xff]
          %v579 = vld [vmem:[%s219 + $0x1d8] sm:$0xff]
          %v580 = vld [vmem:[%s219 + $0x1e0] sm:$0xff]
          %v581 = vld [vmem:[%s219 + $0x1e8] sm:$0xff]
          %v582 = vld [vmem:[%s219 + $0x1f0] sm:$0xff]
          %v583 = vld [vmem:[%s219 + $0x1f8] sm:$0xff]
          %v584 = vld [vmem:[%s219 + $0x200] sm:$0xff]
          %v585 = vld [vmem:[%s219 + $0x208] sm:$0xff]
          %v586 = vld [vmem:[%s219 + $0x210] sm:$0xff]
          %v587 = vld [vmem:[%s219 + $0x218] sm:$0xff]
          %v588 = vld [vmem:[%s219 + $0x220] sm:$0xff]
          %v589 = vld [vmem:[%s219 + $0x228] sm:$0xff]
          %v590 = vld [vmem:[%s219 + $0x230] sm:$0xff]
          %v591 = vld [vmem:[%s219 + $0x238] sm:$0xff]
          %v592 = vld [vmem:[%s219 + $0x240] sm:$0xff]
          %v593 = vld [vmem:[%s219 + $0x248] sm:$0xff]
          %v594 = vld [vmem:[%s219 + $0x250] sm:$0xff]
          %v595 = vld [vmem:[%s219 + $0x258] sm:$0xff]
          %v596 = vld [vmem:[%s219 + $0x260] sm:$0xff]
          %v597 = vld [vmem:[%s219 + $0x268] sm:$0xff]
          %v598 = vld [vmem:[%s219 + $0x270] sm:$0xff]
          %v599 = vld [vmem:[%s219 + $0x278] sm:$0xff]
          %v600 = vld [vmem:[%s219 + $0x280] sm:$0xff]
          %v601 = vld [vmem:[%s219 + $0x288] sm:$0xff]
          %v602 = vld [vmem:[%s219 + $0x290] sm:$0xff]
          %v603 = vld [vmem:[%s219 + $0x298] sm:$0xff]
          %v604 = vld [vmem:[%s219 + $0x2a0] sm:$0xff]
          %v605 = vld [vmem:[%s219 + $0x2a8] sm:$0xff]
          %v606 = vld [vmem:[%s219 + $0x2b0] sm:$0xff]
          %v607 = vld [vmem:[%s219 + $0x2b8] sm:$0xff]
          %v608 = vld [vmem:[%s219 + $0x2c0] sm:$0xff]
          %v609 = vld [vmem:[%s219 + $0x2c8] sm:$0xff]
          %v610 = vld [vmem:[%s219 + $0x2d0] sm:$0xff]
          %v611 = vld [vmem:[%s219 + $0x2d8] sm:$0xff]
          %v612 = vld [vmem:[%s219 + $0x2e0] sm:$0xff]
          %v613 = vld [vmem:[%s219 + $0x2e8] sm:$0xff]
          %v614 = vld [vmem:[%s219 + $0x2f0] sm:$0xff]
          %v615 = vld [vmem:[%s219 + $0x2f8] sm:$0xff]
          %v616 = vld [vmem:[%s219 + $0x300] sm:$0xff]
          %v617 = vld [vmem:[%s219 + $0x308] sm:$0xff]
          %v618 = vld [vmem:[%s219 + $0x310] sm:$0xff]
          %v619 = vld [vmem:[%s219 + $0x318] sm:$0xff]
          %v620 = vld [vmem:[%s219 + $0x320] sm:$0xff]
          %v621 = vld [vmem:[%s219 + $0x328] sm:$0xff]
          %v622 = vld [vmem:[%s219 + $0x330] sm:$0xff]
          %v623 = vld [vmem:[%s219 + $0x338] sm:$0xff]
          %v624 = vld [vmem:[%s219 + $0x340] sm:$0xff]
          %v625 = vld [vmem:[%s219 + $0x348] sm:$0xff]
          %v626 = vld [vmem:[%s219 + $0x350] sm:$0xff]
          %v627 = vld [vmem:[%s219 + $0x358] sm:$0xff]
          %v628 = vld [vmem:[%s219 + $0x360] sm:$0xff]
          %v629 = vld [vmem:[%s219 + $0x368] sm:$0xff]
          %v630 = vld [vmem:[%s219 + $0x370] sm:$0xff]
          %v631 = vld [vmem:[%s219 + $0x378] sm:$0xff]
          %v632 = vld [vmem:[%s219 + $0x380] sm:$0xff]
          %v633 = vld [vmem:[%s219 + $0x388] sm:$0xff]
          %v634 = vld [vmem:[%s219 + $0x390] sm:$0xff]
          %v635 = vld [vmem:[%s219 + $0x398] sm:$0xff]
          %v636 = vld [vmem:[%s219 + $0x3a0] sm:$0xff]
          %v637 = vld [vmem:[%s219 + $0x3a8] sm:$0xff]
          %v638 = vld [vmem:[%s219 + $0x3b0] sm:$0xff]
          %v639 = vld [vmem:[%s219 + $0x3b8] sm:$0xff]
          %v640 = vld [vmem:[%s219 + $0x3c0] sm:$0xff]
          %v641 = vld [vmem:[%s219 + $0x3c8] sm:$0xff]
          %v642 = vld [vmem:[%s219 + $0x3d0] sm:$0xff]
          %v643 = vld [vmem:[%s219 + $0x3d8] sm:$0xff]
          %v644 = vld [vmem:[%s219 + $0x3e0] sm:$0xff]
          %v645 = vld [vmem:[%s219 + $0x3e8] sm:$0xff]
          %v646 = vld [vmem:[%s219 + $0x3f0] sm:$0xff]
          %v647 = vld [vmem:[%s219 + $0x3f8] sm:$0xff]
          %648 = vmatprep.subr.mxu0 %v521
          %649 = vmatpush1.msra.mxu0 %v520
          %650 = vmatprep.subr.mxu0 %v523
          %651 = vmatpush1.msra.mxu0 %v522
          %652 = vmatprep.subr.mxu0 %v525
          %653 = vmatpush1.msra.mxu0 %v524
          %654 = vmatprep.subr.mxu0 %v527
          %655 = vmatpush1.msra.mxu0 %v526
          %656 = vmatprep.subr.mxu0 %v529
          %657 = vmatpush1.msra.mxu0 %v528
          %658 = vmatprep.subr.mxu0 %v531
          %659 = vmatpush1.msra.mxu0 %v530
          %660 = vmatprep.subr.mxu0 %v533
          %661 = vmatpush1.msra.mxu0 %v532
          %662 = vmatprep.subr.mxu0 %v535
          %663 = vmatpush1.msra.mxu0 %v534
          %664 = vmatprep.subr.mxu0 %v537
          %665 = vmatpush1.msra.mxu0 %v536
          %666 = vmatprep.subr.mxu0 %v539
          %667 = vmatpush1.msra.mxu0 %v538
          %668 = vmatprep.subr.mxu0 %v541
          %669 = vmatpush1.msra.mxu0 %v540
          %670 = vmatprep.subr.mxu0 %v543
          %671 = vmatpush1.msra.mxu0 %v542
          %672 = vmatprep.subr.mxu0 %v545
          %673 = vmatpush1.msra.mxu0 %v544
          %674 = vmatprep.subr.mxu0 %v547
          %675 = vmatpush1.msra.mxu0 %v546
          %676 = vmatprep.subr.mxu0 %v549
          %677 = vmatpush1.msra.mxu0 %v548
          %678 = vmatprep.subr.mxu0 %v551
          %679 = vmatpush1.msra.mxu0 %v550
          %680 = vmatprep.subr.mxu0 %v553
          %681 = vmatpush1.msra.mxu0 %v552
          %682 = vmatprep.subr.mxu0 %v555
          %683 = vmatpush1.msra.mxu0 %v554
          %684 = vmatprep.subr.mxu0 %v557
          %685 = vmatpush1.msra.mxu0 %v556
          %686 = vmatprep.subr.mxu0 %v559
          %687 = vmatpush1.msra.mxu0 %v558
          %688 = vmatprep.subr.mxu0 %v561
          %689 = vmatpush1.msra.mxu0 %v560
          %690 = vmatprep.subr.mxu0 %v563
          %691 = vmatpush1.msra.mxu0 %v562
          %692 = vmatprep.subr.mxu0 %v565
          %693 = vmatpush1.msra.mxu0 %v564
          %694 = vmatprep.subr.mxu0 %v567
          %695 = vmatpush1.msra.mxu0 %v566
          %696 = vmatprep.subr.mxu0 %v569
          %697 = vmatpush1.msra.mxu0 %v568
          %698 = vmatprep.subr.mxu0 %v571
          %699 = vmatpush1.msra.mxu0 %v570
          %700 = vmatprep.subr.mxu0 %v573
          %701 = vmatpush1.msra.mxu0 %v572
          %702 = vmatprep.subr.mxu0 %v575
          %703 = vmatpush1.msra.mxu0 %v574
          %704 = vmatprep.subr.mxu0 %v577
          %705 = vmatpush1.msra.mxu0 %v576
          %706 = vmatprep.subr.mxu0 %v579
          %707 = vmatpush1.msra.mxu0 %v578
          %708 = vmatprep.subr.mxu0 %v581
          %709 = vmatpush1.msra.mxu0 %v580
          %710 = vmatprep.subr.mxu0 %v583
          %711 = vmatpush1.msra.mxu0 %v582
          %712 = vmatprep.mubr.f32.mxu0 %v265
          %713 = vmatmul.mubr.f32.gmra.mrb[0].mxu0 %v264
          %v714 = vpop.f32.mrb[0].mxu0
          %v715 = vadd.f32 0.0, %v714
          %v716 = vpop.f32.mrb[0].mxu0
          %v717 = vadd.f32 0.0, %v716
          %718 = vmatprep.mubr.f32.mxu0 %v269
          %719 = vmatmul.mubr.f32.gmra.mrb[0].mxu0 %v268
          %v720 = vpop.f32.mrb[0].mxu0
          %v721 = vadd.f32 0.0, %v720
          %v722 = vpop.f32.mrb[0].mxu0
          %v723 = vadd.f32 0.0, %v722
          %724 = vmatprep.mubr.f32.mxu0 %v273
          %725 = vmatmul.mubr.f32.gmra.mrb[0].mxu0 %v272
          %v726 = vpop.f32.mrb[0].mxu0
          %v727 = vadd.f32 0.0, %v726
          %v728 = vpop.f32.mrb[0].mxu0
          %v729 = vadd.f32 0.0, %v728
          %730 = vmatprep.mubr.f32.mxu0 %v277
          %731 = vmatmul.mubr.f32.gmra.mrb[0].mxu0 %v276
          %v732 = vpop.f32.mrb[0].mxu0
          %v733 = vadd.f32 0.0, %v732
          %v734 = vpop.f32.mrb[0].mxu0
          %v735 = vadd.f32 0.0, %v734
          %736 = vmatprep.mubr.f32.mxu0 %v281
          %737 = vmatmul.mubr.f32.gmra.mrb[0].mxu0 %v280
          %v738 = vpop.f32.mrb[0].mxu0
          %v739 = vadd.f32 0.0, %v738
          %v740 = vpop.f32.mrb[0].mxu0
          %v741 = vadd.f32 0.0, %v740
          %742 = vmatprep.mubr.f32.mxu0 %v285
          %743 = vmatmul.mubr.f32.gmra.mrb[0].mxu0 %v284
          %v744 = vpop.f32.mrb[0].mxu0
          %v745 = vadd.f32 0.0, %v744
          %v746 = vpop.f32.mrb[0].mxu0
          %v747 = vadd.f32 0.0, %v746
          %748 = vmatprep.mubr.f32.mxu0 %v289
          %749 = vmatmul.mubr.f32.gmra.mrb[0].mxu0 %v288
          %v750 = vpop.f32.mrb[0].mxu0
          %v751 = vadd.f32 0.0, %v750
          %v752 = vpop.f32.mrb[0].mxu0
          %v753 = vadd.f32 0.0, %v752
          %754 = vmatprep.mubr.f32.mxu0 %v293
          %755 = vmatmul.mubr.f32.gmra.mrb[0].mxu0 %v292
          %v756 = vpop.f32.mrb[0].mxu0
          %v757 = vadd.f32 0.0, %v756
          %v758 = vpop.f32.mrb[0].mxu0
          %v759 = vadd.f32 0.0, %v758
          %760 = vmatprep.mubr.f32.mxu0 %v297
          %761 = vmatmul.mubr.f32.gmra.mrb[0].mxu0 %v296
          %v762 = vpop.f32.mrb[0].mxu0
          %v763 = vadd.f32 0.0, %v762
          %v764 = vpop.f32.mrb[0].mxu0
          %v765 = vadd.f32 0.0, %v764
          %766 = vmatprep.mubr.f32.mxu0 %v301
          %767 = vmatmul.mubr.f32.gmra.mrb[0].mxu0 %v300
          %v768 = vpop.f32.mrb[0].mxu0
          %v769 = vadd.f32 0.0, %v768
          %v770 = vpop.f32.mrb[0].mxu0
          %v771 = vadd.f32 0.0, %v770
          %772 = vmatprep.mubr.f32.mxu0 %v305
          %773 = vmatmul.mubr.f32.gmra.mrb[0].mxu0 %v304
          %v774 = vpop.f32.mrb[0].mxu0
          %v775 = vadd.f32 0.0, %v774
          %v776 = vpop.f32.mrb[0].mxu0
          %v777 = vadd.f32 0.0, %v776
          %778 = vmatprep.mubr.f32.mxu0 %v309
          %779 = vmatmul.mubr.f32.gmra.mrb[0].mxu0 %v308
          %v780 = vpop.f32.mrb[0].mxu0
          %v781 = vadd.f32 0.0, %v780
          %v782 = vpop.f32.mrb[0].mxu0
          %v783 = vadd.f32 0.0, %v782
          %784 = vmatprep.mubr.f32.mxu0 %v313
          %785 = vmatmul.mubr.f32.gmra.mrb[0].mxu0 %v312
          %v786 = vpop.f32.mrb[0].mxu0
          %v787 = vadd.f32 0.0, %v786
          %v788 = vpop.f32.mrb[0].mxu0
          %v789 = vadd.f32 0.0, %v788
          %790 = vmatprep.mubr.f32.mxu0 %v317
          %791 = vmatmul.mubr.f32.gmra.mrb[0].mxu0 %v316
          %v792 = vpop.f32.mrb[0].mxu0
          %v793 = vadd.f32 0.0, %v792
          %v794 = vpop.f32.mrb[0].mxu0
          %v795 = vadd.f32 0.0, %v794
          %796 = vmatprep.mubr.f32.mxu0 %v321
          %797 = vmatmul.mubr.f32.gmra.mrb[0].mxu0 %v320
          %v798 = vpop.f32.mrb[0].mxu0
          %v799 = vadd.f32 0.0, %v798
          %v800 = vpop.f32.mrb[0].mxu0
          %v801 = vadd.f32 0.0, %v800
          %802 = vmatprep.mubr.f32.mxu0 %v325
          %803 = vmatmul.mubr.f32.gmra.mrb[0].mxu0 %v324
          %v804 = vpop.f32.mrb[0].mxu0
          %v805 = vadd.f32 0.0, %v804
          %v806 = vpop.f32.mrb[0].mxu0
          %v807 = vadd.f32 0.0, %v806
          %808 = vmatprep.mubr.f32.mxu0 %v329
          %809 = vmatmul.mubr.f32.gmra.mrb[0].mxu0 %v328
          %v810 = vpop.f32.mrb[0].mxu0
          %v811 = vadd.f32 0.0, %v810
          %v812 = vpop.f32.mrb[0].mxu0
          %v813 = vadd.f32 0.0, %v812
          %814 = vmatprep.mubr.f32.mxu0 %v333
          %815 = vmatmul.mubr.f32.gmra.mrb[0].mxu0 %v332
          %v816 = vpop.f32.mrb[0].mxu0
          %v817 = vadd.f32 0.0, %v816
          %v818 = vpop.f32.mrb[0].mxu0
          %v819 = vadd.f32 0.0, %v818
          %820 = vmatprep.mubr.f32.mxu0 %v337
          %821 = vmatmul.mubr.f32.gmra.mrb[0].mxu0 %v336
          %v822 = vpop.f32.mrb[0].mxu0
          %v823 = vadd.f32 0.0, %v822
          %v824 = vpop.f32.mrb[0].mxu0
          %v825 = vadd.f32 0.0, %v824
          %826 = vmatprep.mubr.f32.mxu0 %v341
          %827 = vmatmul.mubr.f32.gmra.mrb[0].mxu0 %v340
          %v828 = vpop.f32.mrb[0].mxu0
          %v829 = vadd.f32 0.0, %v828
          %v830 = vpop.f32.mrb[0].mxu0
          %v831 = vadd.f32 0.0, %v830
          %832 = vmatprep.mubr.f32.mxu0 %v345
          %833 = vmatmul.mubr.f32.gmra.mrb[0].mxu0 %v344
          %v834 = vpop.f32.mrb[0].mxu0
          %v835 = vadd.f32 0.0, %v834
          %v836 = vpop.f32.mrb[0].mxu0
          %v837 = vadd.f32 0.0, %v836
          %838 = vmatprep.mubr.f32.mxu0 %v349
          %839 = vmatmul.mubr.f32.gmra.mrb[0].mxu0 %v348
          %v840 = vpop.f32.mrb[0].mxu0
          %v841 = vadd.f32 0.0, %v840
          %v842 = vpop.f32.mrb[0].mxu0
          %v843 = vadd.f32 0.0, %v842
          %844 = vmatprep.mubr.f32.mxu0 %v353
          %845 = vmatmul.mubr.f32.gmra.mrb[0].mxu0 %v352
          %v846 = vpop.f32.mrb[0].mxu0
          %v847 = vadd.f32 0.0, %v846
          %v848 = vpop.f32.mrb[0].mxu0
          %v849 = vadd.f32 0.0, %v848
          %850 = vmatprep.mubr.f32.mxu0 %v357
          %851 = vmatmul.mubr.f32.gmra.mrb[0].mxu0 %v356
          %v852 = vpop.f32.mrb[0].mxu0
          %v853 = vadd.f32 0.0, %v852
          %v854 = vpop.f32.mrb[0].mxu0
          %v855 = vadd.f32 0.0, %v854
          %856 = vmatprep.mubr.f32.mxu0 %v361
          %857 = vmatmul.mubr.f32.gmra.mrb[0].mxu0 %v360
          %v858 = vpop.f32.mrb[0].mxu0
          %v859 = vadd.f32 0.0, %v858
          %v860 = vpop.f32.mrb[0].mxu0
          %v861 = vadd.f32 0.0, %v860
          %862 = vmatprep.mubr.f32.mxu0 %v365
          %863 = vmatmul.mubr.f32.gmra.mrb[0].mxu0 %v364
          %v864 = vpop.f32.mrb[0].mxu0
          %v865 = vadd.f32 0.0, %v864
          %v866 = vpop.f32.mrb[0].mxu0
          %v867 = vadd.f32 0.0, %v866
          %868 = vmatprep.mubr.f32.mxu0 %v369
          %869 = vmatmul.mubr.f32.gmra.mrb[0].mxu0 %v368
          %v870 = vpop.f32.mrb[0].mxu0
          %v871 = vadd.f32 0.0, %v870
          %v872 = vpop.f32.mrb[0].mxu0
          %v873 = vadd.f32 0.0, %v872
          %874 = vmatprep.mubr.f32.mxu0 %v373
          %875 = vmatmul.mubr.f32.gmra.mrb[0].mxu0 %v372
          %v876 = vpop.f32.mrb[0].mxu0
          %v877 = vadd.f32 0.0, %v876
          %v878 = vpop.f32.mrb[0].mxu0
          %v879 = vadd.f32 0.0, %v878
          %880 = vmatprep.mubr.f32.mxu0 %v377
          %881 = vmatmul.mubr.f32.gmra.mrb[0].mxu0 %v376
          %v882 = vpop.f32.mrb[0].mxu0
          %v883 = vadd.f32 0.0, %v882
          %v884 = vpop.f32.mrb[0].mxu0
          %v885 = vadd.f32 0.0, %v884
          %886 = vmatprep.mubr.f32.mxu0 %v381
          %887 = vmatmul.mubr.f32.gmra.mrb[0].mxu0 %v380
          %v888 = vpop.f32.mrb[0].mxu0
          %v889 = vadd.f32 0.0, %v888
          %v890 = vpop.f32.mrb[0].mxu0
          %v891 = vadd.f32 0.0, %v890
          %892 = vmatprep.mubr.f32.mxu0 %v385
          %893 = vmatmul.mubr.f32.gmra.mrb[0].mxu0 %v384
          %v894 = vpop.f32.mrb[0].mxu0
          %v895 = vadd.f32 0.0, %v894
          %v896 = vpop.f32.mrb[0].mxu0
          %v897 = vadd.f32 0.0, %v896
          %898 = vmatprep.mubr.f32.mxu0 %v389
          %899 = vmatmul.mubr.f32.gmra.mrb[0].mxu0 %v388
          %v900 = vpop.f32.mrb[0].mxu0
          %v901 = vadd.f32 0.0, %v900
          %v902 = vpop.f32.mrb[0].mxu0
          %v903 = vadd.f32 0.0, %v902
          %904 = vmatprep.mubr.f32.mxu0 %v393
          %905 = vmatmul.mubr.f32.gmra.mrb[0].mxu0 %v392
          %v906 = vpop.f32.mrb[0].mxu0
          %v907 = vadd.f32 0.0, %v906
          %v908 = vpop.f32.mrb[0].mxu0
          %v909 = vadd.f32 0.0, %v908
          %910 = vmatprep.mubr.f32.mxu0 %v397
          %911 = vmatmul.mubr.f32.gmra.mrb[0].mxu0 %v396
          %v912 = vpop.f32.mrb[0].mxu0
          %v913 = vadd.f32 0.0, %v912
          %v914 = vpop.f32.mrb[0].mxu0
          %v915 = vadd.f32 0.0, %v914
          %916 = vmatprep.mubr.f32.mxu0 %v401
          %917 = vmatmul.mubr.f32.gmra.mrb[0].mxu0 %v400
          %v918 = vpop.f32.mrb[0].mxu0
          %v919 = vadd.f32 0.0, %v918
          %v920 = vpop.f32.mrb[0].mxu0
          %v921 = vadd.f32 0.0, %v920
          %922 = vmatprep.mubr.f32.mxu0 %v405
          %923 = vmatmul.mubr.f32.gmra.mrb[0].mxu0 %v404
          %v924 = vpop.f32.mrb[0].mxu0
          %v925 = vadd.f32 0.0, %v924
          %v926 = vpop.f32.mrb[0].mxu0
          %v927 = vadd.f32 0.0, %v926
          %928 = vmatprep.mubr.f32.mxu0 %v409
          %929 = vmatmul.mubr.f32.gmra.mrb[0].mxu0 %v408
          %v930 = vpop.f32.mrb[0].mxu0
          %v931 = vadd.f32 0.0, %v930
          %v932 = vpop.f32.mrb[0].mxu0
          %v933 = vadd.f32 0.0, %v932
          %934 = vmatprep.mubr.f32.mxu0 %v413
          %935 = vmatmul.mubr.f32.gmra.mrb[0].mxu0 %v412
          %v936 = vpop.f32.mrb[0].mxu0
          %v937 = vadd.f32 0.0, %v936
          %v938 = vpop.f32.mrb[0].mxu0
          %v939 = vadd.f32 0.0, %v938
          %940 = vmatprep.mubr.f32.mxu0 %v417
          %941 = vmatmul.mubr.f32.gmra.mrb[0].mxu0 %v416
          %v942 = vpop.f32.mrb[0].mxu0
          %v943 = vadd.f32 0.0, %v942
          %v944 = vpop.f32.mrb[0].mxu0
          %v945 = vadd.f32 0.0, %v944
          %946 = vmatprep.mubr.f32.mxu0 %v421
          %947 = vmatmul.mubr.f32.gmra.mrb[0].mxu0 %v420
          %v948 = vpop.f32.mrb[0].mxu0
          %v949 = vadd.f32 0.0, %v948
          %v950 = vpop.f32.mrb[0].mxu0
          %v951 = vadd.f32 0.0, %v950
          %952 = vmatprep.mubr.f32.mxu0 %v425
          %953 = vmatmul.mubr.f32.gmra.mrb[0].mxu0 %v424
          %v954 = vpop.f32.mrb[0].mxu0
          %v955 = vadd.f32 0.0, %v954
          %v956 = vpop.f32.mrb[0].mxu0
          %v957 = vadd.f32 0.0, %v956
          %958 = vmatprep.mubr.f32.mxu0 %v429
          %959 = vmatmul.mubr.f32.gmra.mrb[0].mxu0 %v428
          %v960 = vpop.f32.mrb[0].mxu0
          %v961 = vadd.f32 0.0, %v960
          %v962 = vpop.f32.mrb[0].mxu0
          %v963 = vadd.f32 0.0, %v962
          %964 = vmatprep.mubr.f32.mxu0 %v433
          %965 = vmatmul.mubr.f32.gmra.mrb[0].mxu0 %v432
          %v966 = vpop.f32.mrb[0].mxu0
          %v967 = vadd.f32 0.0, %v966
          %v968 = vpop.f32.mrb[0].mxu0
          %v969 = vadd.f32 0.0, %v968
          %970 = vmatprep.mubr.f32.mxu0 %v437
          %971 = vmatmul.mubr.f32.gmra.mrb[0].mxu0 %v436
          %v972 = vpop.f32.mrb[0].mxu0
          %v973 = vadd.f32 0.0, %v972
          %v974 = vpop.f32.mrb[0].mxu0
          %v975 = vadd.f32 0.0, %v974
          %976 = vmatprep.mubr.f32.mxu0 %v441
          %977 = vmatmul.mubr.f32.gmra.mrb[0].mxu0 %v440
          %v978 = vpop.f32.mrb[0].mxu0
          %v979 = vadd.f32 0.0, %v978
          %v980 = vpop.f32.mrb[0].mxu0
          %v981 = vadd.f32 0.0, %v980
          %982 = vmatprep.mubr.f32.mxu0 %v445
          %983 = vmatmul.mubr.f32.gmra.mrb[0].mxu0 %v444
          %v984 = vpop.f32.mrb[0].mxu0
          %v985 = vadd.f32 0.0, %v984
          %v986 = vpop.f32.mrb[0].mxu0
          %v987 = vadd.f32 0.0, %v986
          %988 = vmatprep.mubr.f32.mxu0 %v449
          %989 = vmatmul.mubr.f32.gmra.mrb[0].mxu0 %v448
          %v990 = vpop.f32.mrb[0].mxu0
          %v991 = vadd.f32 0.0, %v990
          %v992 = vpop.f32.mrb[0].mxu0
          %v993 = vadd.f32 0.0, %v992
          %994 = vmatprep.mubr.f32.mxu0 %v453
          %995 = vmatmul.mubr.f32.gmra.mrb[0].mxu0 %v452
          %v996 = vpop.f32.mrb[0].mxu0
          %v997 = vadd.f32 0.0, %v996
          %v998 = vpop.f32.mrb[0].mxu0
          %v999 = vadd.f32 0.0, %v998
          %1000 = vmatprep.mubr.f32.mxu0 %v457
          %1001 = vmatmul.mubr.f32.gmra.mrb[0].mxu0 %v456
          %v1002 = vpop.f32.mrb[0].mxu0
          %v1003 = vadd.f32 0.0, %v1002
          %v1004 = vpop.f32.mrb[0].mxu0
          %v1005 = vadd.f32 0.0, %v1004
          %1006 = vmatprep.mubr.f32.mxu0 %v461
          %1007 = vmatmul.mubr.f32.gmra.mrb[0].mxu0 %v460
          %v1008 = vpop.f32.mrb[0].mxu0
          %v1009 = vadd.f32 0.0, %v1008
          %v1010 = vpop.f32.mrb[0].mxu0
          %v1011 = vadd.f32 0.0, %v1010
          %1012 = vmatprep.mubr.f32.mxu0 %v465
          %1013 = vmatmul.mubr.f32.gmra.mrb[0].mxu0 %v464
          %v1014 = vpop.f32.mrb[0].mxu0
          %v1015 = vadd.f32 0.0, %v1014
          %v1016 = vpop.f32.mrb[0].mxu0
          %v1017 = vadd.f32 0.0, %v1016
          %1018 = vmatprep.mubr.f32.mxu0 %v469
          %1019 = vmatmul.mubr.f32.gmra.mrb[0].mxu0 %v468
          %v1020 = vpop.f32.mrb[0].mxu0
          %v1021 = vadd.f32 0.0, %v1020
          %v1022 = vpop.f32.mrb[0].mxu0
          %v1023 = vadd.f32 0.0, %v1022
          %1024 = vmatprep.mubr.f32.mxu0 %v473
          %1025 = vmatmul.mubr.f32.gmra.mrb[0].mxu0 %v472
          %v1026 = vpop.f32.mrb[0].mxu0
          %v1027 = vadd.f32 0.0, %v1026
          %v1028 = vpop.f32.mrb[0].mxu0
          %v1029 = vadd.f32 0.0, %v1028
          %1030 = vmatprep.mubr.f32.mxu0 %v477
          %1031 = vmatmul.mubr.f32.gmra.mrb[0].mxu0 %v476
          %v1032 = vpop.f32.mrb[0].mxu0
          %v1033 = vadd.f32 0.0, %v1032
          %v1034 = vpop.f32.mrb[0].mxu0
          %v1035 = vadd.f32 0.0, %v1034
          %1036 = vmatprep.mubr.f32.mxu0 %v481
          %1037 = vmatmul.mubr.f32.gmra.mrb[0].mxu0 %v480
          %v1038 = vpop.f32.mrb[0].mxu0
          %v1039 = vadd.f32 0.0, %v1038
          %v1040 = vpop.f32.mrb[0].mxu0
          %v1041 = vadd.f32 0.0, %v1040
          %1042 = vmatprep.mubr.f32.mxu0 %v485
          %1043 = vmatmul.mubr.f32.gmra.mrb[0].mxu0 %v484
          %v1044 = vpop.f32.mrb[0].mxu0
          %v1045 = vadd.f32 0.0, %v1044
          %v1046 = vpop.f32.mrb[0].mxu0
          %v1047 = vadd.f32 0.0, %v1046
          %1048 = vmatprep.mubr.f32.mxu0 %v489
          %1049 = vmatmul.mubr.f32.gmra.mrb[0].mxu0 %v488
          %v1050 = vpop.f32.mrb[0].mxu0
          %v1051 = vadd.f32 0.0, %v1050
          %v1052 = vpop.f32.mrb[0].mxu0
          %v1053 = vadd.f32 0.0, %v1052
          %1054 = vmatprep.mubr.f32.mxu0 %v493
          %1055 = vmatmul.mubr.f32.gmra.mrb[0].mxu0 %v492
          %v1056 = vpop.f32.mrb[0].mxu0
          %v1057 = vadd.f32 0.0, %v1056
          %v1058 = vpop.f32.mrb[0].mxu0
          %v1059 = vadd.f32 0.0, %v1058
          %1060 = vmatprep.mubr.f32.mxu0 %v497
          %1061 = vmatmul.mubr.f32.gmra.mrb[0].mxu0 %v496
          %v1062 = vpop.f32.mrb[0].mxu0
          %v1063 = vadd.f32 0.0, %v1062
          %v1064 = vpop.f32.mrb[0].mxu0
          %v1065 = vadd.f32 0.0, %v1064
          %1066 = vmatprep.mubr.f32.mxu0 %v501
          %1067 = vmatmul.mubr.f32.gmra.mrb[0].mxu0 %v500
          %v1068 = vpop.f32.mrb[0].mxu0
          %v1069 = vadd.f32 0.0, %v1068
          %v1070 = vpop.f32.mrb[0].mxu0
          %v1071 = vadd.f32 0.0, %v1070
          %1072 = vmatprep.mubr.f32.mxu0 %v505
          %1073 = vmatmul.mubr.f32.gmra.mrb[0].mxu0 %v504
          %v1074 = vpop.f32.mrb[0].mxu0
          %v1075 = vadd.f32 0.0, %v1074
          %v1076 = vpop.f32.mrb[0].mxu0
          %v1077 = vadd.f32 0.0, %v1076
          %1078 = vmatprep.mubr.f32.mxu0 %v509
          %1079 = vmatmul.mubr.f32.gmra.mrb[0].mxu0 %v508
          %v1080 = vpop.f32.mrb[0].mxu0
          %v1081 = vadd.f32 0.0, %v1080
          %v1082 = vpop.f32.mrb[0].mxu0
          %v1083 = vadd.f32 0.0, %v1082
          %1084 = vmatprep.mubr.f32.mxu0 %v513
          %1085 = vmatmul.mubr.f32.gmra.mrb[0].mxu0 %v512
          %v1086 = vpop.f32.mrb[0].mxu0
          %v1087 = vadd.f32 0.0, %v1086
          %v1088 = vpop.f32.mrb[0].mxu0
          %v1089 = vadd.f32 0.0, %v1088
          %1090 = vmatprep.mubr.f32.mxu0 %v517
          %1091 = vmatmul.mubr.f32.gmra.mrb[0].mxu0 %v516
          %v1092 = vpop.f32.mrb[0].mxu0
          %v1093 = vadd.f32 0.0, %v1092
          %v1094 = vpop.f32.mrb[0].mxu0
          %v1095 = vadd.f32 0.0, %v1094
          %1096 = vdwg.mxu0
          %1097 = vmatprep.subr.mxu0 %v585
          %1098 = vmatpush1.msra.mxu0 %v584
          %1099 = vmatprep.subr.mxu0 %v587
          %1100 = vmatpush1.msra.mxu0 %v586
          %1101 = vmatprep.subr.mxu0 %v589
          %1102 = vmatpush1.msra.mxu0 %v588
          %1103 = vmatprep.subr.mxu0 %v591
          %1104 = vmatpush1.msra.mxu0 %v590
          %1105 = vmatprep.subr.mxu0 %v593
          %1106 = vmatpush1.msra.mxu0 %v592
          %1107 = vmatprep.subr.mxu0 %v595
          %1108 = vmatpush1.msra.mxu0 %v594
          %1109 = vmatprep.subr.mxu0 %v597
          %1110 = vmatpush1.msra.mxu0 %v596
          %1111 = vmatprep.subr.mxu0 %v599
          %1112 = vmatpush1.msra.mxu0 %v598
          %1113 = vmatprep.subr.mxu0 %v601
          %1114 = vmatpush1.msra.mxu0 %v600
          %1115 = vmatprep.subr.mxu0 %v603
          %1116 = vmatpush1.msra.mxu0 %v602
          %1117 = vmatprep.subr.mxu0 %v605
          %1118 = vmatpush1.msra.mxu0 %v604
          %1119 = vmatprep.subr.mxu0 %v607
          %1120 = vmatpush1.msra.mxu0 %v606
          %1121 = vmatprep.subr.mxu0 %v609
          %1122 = vmatpush1.msra.mxu0 %v608
          %1123 = vmatprep.subr.mxu0 %v611
          %1124 = vmatpush1.msra.mxu0 %v610
          %1125 = vmatprep.subr.mxu0 %v613
          %1126 = vmatpush1.msra.mxu0 %v612
          %1127 = vmatprep.subr.mxu0 %v615
          %1128 = vmatpush1.msra.mxu0 %v614
          %1129 = vmatprep.subr.mxu0 %v617
          %1130 = vmatpush1.msra.mxu0 %v616
          %1131 = vmatprep.subr.mxu0 %v619
          %1132 = vmatpush1.msra.mxu0 %v618
          %1133 = vmatprep.subr.mxu0 %v621
          %1134 = vmatpush1.msra.mxu0 %v620
          %1135 = vmatprep.subr.mxu0 %v623
          %1136 = vmatpush1.msra.mxu0 %v622
          %1137 = vmatprep.subr.mxu0 %v625
          %1138 = vmatpush1.msra.mxu0 %v624
          %1139 = vmatprep.subr.mxu0 %v627
          %1140 = vmatpush1.msra.mxu0 %v626
          %1141 = vmatprep.subr.mxu0 %v629
          %1142 = vmatpush1.msra.mxu0 %v628
          %1143 = vmatprep.subr.mxu0 %v631
          %1144 = vmatpush1.msra.mxu0 %v630
          %1145 = vmatprep.subr.mxu0 %v633
          %1146 = vmatpush1.msra.mxu0 %v632
          %1147 = vmatprep.subr.mxu0 %v635
          %1148 = vmatpush1.msra.mxu0 %v634
          %1149 = vmatprep.subr.mxu0 %v637
          %1150 = vmatpush1.msra.mxu0 %v636
          %1151 = vmatprep.subr.mxu0 %v639
          %1152 = vmatpush1.msra.mxu0 %v638
          %1153 = vmatprep.subr.mxu0 %v641
          %1154 = vmatpush1.msra.mxu0 %v640
          %1155 = vmatprep.subr.mxu0 %v643
          %1156 = vmatpush1.msra.mxu0 %v642
          %1157 = vmatprep.subr.mxu0 %v645
          %1158 = vmatpush1.msra.mxu0 %v644
          %1159 = vmatprep.subr.mxu0 %v647
          %1160 = vmatpush1.msra.mxu0 %v646
          %1161 = vmatprep.mubr.f32.mxu0 %v267
          %1162 = vmatmul.mubr.f32.gmra.mrb[0].mxu0 %v266
          %v1163 = vpop.f32.mrb[0].mxu0
          %v1164 = vadd.f32 %v715, %v1163
          %v1165 = vpop.f32.mrb[0].mxu0
          %v1166 = vadd.f32 %v717, %v1165
          %1167 = vmatprep.mubr.f32.mxu0 %v271
          %1168 = vmatmul.mubr.f32.gmra.mrb[0].mxu0 %v270
          %v1169 = vpop.f32.mrb[0].mxu0
          %v1170 = vadd.f32 %v721, %v1169
          %v1171 = vpop.f32.mrb[0].mxu0
          %v1172 = vadd.f32 %v723, %v1171
          %1173 = vmatprep.mubr.f32.mxu0 %v275
          %1174 = vmatmul.mubr.f32.gmra.mrb[0].mxu0 %v274
          %v1175 = vpop.f32.mrb[0].mxu0
          %v1176 = vadd.f32 %v727, %v1175
          %v1177 = vpop.f32.mrb[0].mxu0
          %v1178 = vadd.f32 %v729, %v1177
          %1179 = vmatprep.mubr.f32.mxu0 %v279
          %1180 = vmatmul.mubr.f32.gmra.mrb[0].mxu0 %v278
          %v1181 = vpop.f32.mrb[0].mxu0
          %v1182 = vadd.f32 %v733, %v1181
          %v1183 = vpop.f32.mrb[0].mxu0
          %v1184 = vadd.f32 %v735, %v1183
          %1185 = vmatprep.mubr.f32.mxu0 %v283
          %1186 = vmatmul.mubr.f32.gmra.mrb[0].mxu0 %v282
          %v1187 = vpop.f32.mrb[0].mxu0
          %v1188 = vadd.f32 %v739, %v1187
          %v1189 = vpop.f32.mrb[0].mxu0
          %v1190 = vadd.f32 %v741, %v1189
          %1191 = vmatprep.mubr.f32.mxu0 %v287
          %1192 = vmatmul.mubr.f32.gmra.mrb[0].mxu0 %v286
          %v1193 = vpop.f32.mrb[0].mxu0
          %v1194 = vadd.f32 %v745, %v1193
          %v1195 = vpop.f32.mrb[0].mxu0
          %v1196 = vadd.f32 %v747, %v1195
          %1197 = vmatprep.mubr.f32.mxu0 %v291
          %1198 = vmatmul.mubr.f32.gmra.mrb[0].mxu0 %v290
          %v1199 = vpop.f32.mrb[0].mxu0
          %v1200 = vadd.f32 %v751, %v1199
          %v1201 = vpop.f32.mrb[0].mxu0
          %v1202 = vadd.f32 %v753, %v1201
          %1203 = vmatprep.mubr.f32.mxu0 %v295
          %1204 = vmatmul.mubr.f32.gmra.mrb[0].mxu0 %v294
          %v1205 = vpop.f32.mrb[0].mxu0
          %v1206 = vadd.f32 %v757, %v1205
          %v1207 = vpop.f32.mrb[0].mxu0
          %v1208 = vadd.f32 %v759, %v1207
          %1209 = vmatprep.mubr.f32.mxu0 %v299
          %1210 = vmatmul.mubr.f32.gmra.mrb[0].mxu0 %v298
          %v1211 = vpop.f32.mrb[0].mxu0
          %v1212 = vadd.f32 %v763, %v1211
          %v1213 = vpop.f32.mrb[0].mxu0
          %v1214 = vadd.f32 %v765, %v1213
          %1215 = vmatprep.mubr.f32.mxu0 %v303
          %1216 = vmatmul.mubr.f32.gmra.mrb[0].mxu0 %v302
          %v1217 = vpop.f32.mrb[0].mxu0
          %v1218 = vadd.f32 %v769, %v1217
          %v1219 = vpop.f32.mrb[0].mxu0
          %v1220 = vadd.f32 %v771, %v1219
          %1221 = vmatprep.mubr.f32.mxu0 %v307
          %1222 = vmatmul.mubr.f32.gmra.mrb[0].mxu0 %v306
          %v1223 = vpop.f32.mrb[0].mxu0
          %v1224 = vadd.f32 %v775, %v1223
          %v1225 = vpop.f32.mrb[0].mxu0
          %v1226 = vadd.f32 %v777, %v1225
          %1227 = vmatprep.mubr.f32.mxu0 %v311
          %1228 = vmatmul.mubr.f32.gmra.mrb[0].mxu0 %v310
          %v1229 = vpop.f32.mrb[0].mxu0
          %v1230 = vadd.f32 %v781, %v1229
          %v1231 = vpop.f32.mrb[0].mxu0
          %v1232 = vadd.f32 %v783, %v1231
          %1233 = vmatprep.mubr.f32.mxu0 %v315
          %1234 = vmatmul.mubr.f32.gmra.mrb[0].mxu0 %v314
          %v1235 = vpop.f32.mrb[0].mxu0
          %v1236 = vadd.f32 %v787, %v1235
          %v1237 = vpop.f32.mrb[0].mxu0
          %v1238 = vadd.f32 %v789, %v1237
          %1239 = vmatprep.mubr.f32.mxu0 %v319
          %1240 = vmatmul.mubr.f32.gmra.mrb[0].mxu0 %v318
          %v1241 = vpop.f32.mrb[0].mxu0
          %v1242 = vadd.f32 %v793, %v1241
          %v1243 = vpop.f32.mrb[0].mxu0
          %v1244 = vadd.f32 %v795, %v1243
          %1245 = vmatprep.mubr.f32.mxu0 %v323
          %1246 = vmatmul.mubr.f32.gmra.mrb[0].mxu0 %v322
          %v1247 = vpop.f32.mrb[0].mxu0
          %v1248 = vadd.f32 %v799, %v1247
          %v1249 = vpop.f32.mrb[0].mxu0
          %v1250 = vadd.f32 %v801, %v1249
          %1251 = vmatprep.mubr.f32.mxu0 %v327
          %1252 = vmatmul.mubr.f32.gmra.mrb[0].mxu0 %v326
          %v1253 = vpop.f32.mrb[0].mxu0
          %v1254 = vadd.f32 %v805, %v1253
          %v1255 = vpop.f32.mrb[0].mxu0
          %v1256 = vadd.f32 %v807, %v1255
          %1257 = vmatprep.mubr.f32.mxu0 %v331
          %1258 = vmatmul.mubr.f32.gmra.mrb[0].mxu0 %v330
          %v1259 = vpop.f32.mrb[0].mxu0
          %v1260 = vadd.f32 %v811, %v1259
          %v1261 = vpop.f32.mrb[0].mxu0
          %v1262 = vadd.f32 %v813, %v1261
          %1263 = vmatprep.mubr.f32.mxu0 %v335
          %1264 = vmatmul.mubr.f32.gmra.mrb[0].mxu0 %v334
          %v1265 = vpop.f32.mrb[0].mxu0
          %v1266 = vadd.f32 %v817, %v1265
          %v1267 = vpop.f32.mrb[0].mxu0
          %v1268 = vadd.f32 %v819, %v1267
          %1269 = vmatprep.mubr.f32.mxu0 %v339
          %1270 = vmatmul.mubr.f32.gmra.mrb[0].mxu0 %v338
          %v1271 = vpop.f32.mrb[0].mxu0
          %v1272 = vadd.f32 %v823, %v1271
          %v1273 = vpop.f32.mrb[0].mxu0
          %v1274 = vadd.f32 %v825, %v1273
          %1275 = vmatprep.mubr.f32.mxu0 %v343
          %1276 = vmatmul.mubr.f32.gmra.mrb[0].mxu0 %v342
          %v1277 = vpop.f32.mrb[0].mxu0
          %v1278 = vadd.f32 %v829, %v1277
          %v1279 = vpop.f32.mrb[0].mxu0
          %v1280 = vadd.f32 %v831, %v1279
          %1281 = vmatprep.mubr.f32.mxu0 %v347
          %1282 = vmatmul.mubr.f32.gmra.mrb[0].mxu0 %v346
          %v1283 = vpop.f32.mrb[0].mxu0
          %v1284 = vadd.f32 %v835, %v1283
          %v1285 = vpop.f32.mrb[0].mxu0
          %v1286 = vadd.f32 %v837, %v1285
          %1287 = vmatprep.mubr.f32.mxu0 %v351
          %1288 = vmatmul.mubr.f32.gmra.mrb[0].mxu0 %v350
          %v1289 = vpop.f32.mrb[0].mxu0
          %v1290 = vadd.f32 %v841, %v1289
          %v1291 = vpop.f32.mrb[0].mxu0
          %v1292 = vadd.f32 %v843, %v1291
          %1293 = vmatprep.mubr.f32.mxu0 %v355
          %1294 = vmatmul.mubr.f32.gmra.mrb[0].mxu0 %v354
          %v1295 = vpop.f32.mrb[0].mxu0
          %v1296 = vadd.f32 %v847, %v1295
          %v1297 = vpop.f32.mrb[0].mxu0
          %v1298 = vadd.f32 %v849, %v1297
          %1299 = vmatprep.mubr.f32.mxu0 %v359
          %1300 = vmatmul.mubr.f32.gmra.mrb[0].mxu0 %v358
          %v1301 = vpop.f32.mrb[0].mxu0
          %v1302 = vadd.f32 %v853, %v1301
          %v1303 = vpop.f32.mrb[0].mxu0
          %v1304 = vadd.f32 %v855, %v1303
          %1305 = vmatprep.mubr.f32.mxu0 %v363
          %1306 = vmatmul.mubr.f32.gmra.mrb[0].mxu0 %v362
          %v1307 = vpop.f32.mrb[0].mxu0
          %v1308 = vadd.f32 %v859, %v1307
          %v1309 = vpop.f32.mrb[0].mxu0
          %v1310 = vadd.f32 %v861, %v1309
          %1311 = vmatprep.mubr.f32.mxu0 %v367
          %1312 = vmatmul.mubr.f32.gmra.mrb[0].mxu0 %v366
          %v1313 = vpop.f32.mrb[0].mxu0
          %v1314 = vadd.f32 %v865, %v1313
          %v1315 = vpop.f32.mrb[0].mxu0
          %v1316 = vadd.f32 %v867, %v1315
          %1317 = vmatprep.mubr.f32.mxu0 %v371
          %1318 = vmatmul.mubr.f32.gmra.mrb[0].mxu0 %v370
          %v1319 = vpop.f32.mrb[0].mxu0
          %v1320 = vadd.f32 %v871, %v1319
          %v1321 = vpop.f32.mrb[0].mxu0
          %v1322 = vadd.f32 %v873, %v1321
          %1323 = vmatprep.mubr.f32.mxu0 %v375
          %1324 = vmatmul.mubr.f32.gmra.mrb[0].mxu0 %v374
          %v1325 = vpop.f32.mrb[0].mxu0
          %v1326 = vadd.f32 %v877, %v1325
          %v1327 = vpop.f32.mrb[0].mxu0
          %v1328 = vadd.f32 %v879, %v1327
          %1329 = vmatprep.mubr.f32.mxu0 %v379
          %1330 = vmatmul.mubr.f32.gmra.mrb[0].mxu0 %v378
          %v1331 = vpop.f32.mrb[0].mxu0
          %v1332 = vadd.f32 %v883, %v1331
          %v1333 = vpop.f32.mrb[0].mxu0
          %v1334 = vadd.f32 %v885, %v1333
          %1335 = vmatprep.mubr.f32.mxu0 %v383
          %1336 = vmatmul.mubr.f32.gmra.mrb[0].mxu0 %v382
          %v1337 = vpop.f32.mrb[0].mxu0
          %v1338 = vadd.f32 %v889, %v1337
          %v1339 = vpop.f32.mrb[0].mxu0
          %v1340 = vadd.f32 %v891, %v1339
          %1341 = vmatprep.mubr.f32.mxu0 %v387
          %1342 = vmatmul.mubr.f32.gmra.mrb[0].mxu0 %v386
          %v1343 = vpop.f32.mrb[0].mxu0
          %v1344 = vadd.f32 %v895, %v1343
          %v1345 = vpop.f32.mrb[0].mxu0
          %v1346 = vadd.f32 %v897, %v1345
          %1347 = vmatprep.mubr.f32.mxu0 %v391
          %1348 = vmatmul.mubr.f32.gmra.mrb[0].mxu0 %v390
          %v1349 = vpop.f32.mrb[0].mxu0
          %v1350 = vadd.f32 %v901, %v1349
          %v1351 = vpop.f32.mrb[0].mxu0
          %v1352 = vadd.f32 %v903, %v1351
          %1353 = vmatprep.mubr.f32.mxu0 %v395
          %1354 = vmatmul.mubr.f32.gmra.mrb[0].mxu0 %v394
          %v1355 = vpop.f32.mrb[0].mxu0
          %v1356 = vadd.f32 %v907, %v1355
          %v1357 = vpop.f32.mrb[0].mxu0
          %v1358 = vadd.f32 %v909, %v1357
          %1359 = vmatprep.mubr.f32.mxu0 %v399
          %1360 = vmatmul.mubr.f32.gmra.mrb[0].mxu0 %v398
          %v1361 = vpop.f32.mrb[0].mxu0
          %v1362 = vadd.f32 %v913, %v1361
          %v1363 = vpop.f32.mrb[0].mxu0
          %v1364 = vadd.f32 %v915, %v1363
          %1365 = vmatprep.mubr.f32.mxu0 %v403
          %1366 = vmatmul.mubr.f32.gmra.mrb[0].mxu0 %v402
          %v1367 = vpop.f32.mrb[0].mxu0
          %v1368 = vadd.f32 %v919, %v1367
          %v1369 = vpop.f32.mrb[0].mxu0
          %v1370 = vadd.f32 %v921, %v1369
          %1371 = vmatprep.mubr.f32.mxu0 %v407
          %1372 = vmatmul.mubr.f32.gmra.mrb[0].mxu0 %v406
          %v1373 = vpop.f32.mrb[0].mxu0
          %v1374 = vadd.f32 %v925, %v1373
          %v1375 = vpop.f32.mrb[0].mxu0
          %v1376 = vadd.f32 %v927, %v1375
          %1377 = vmatprep.mubr.f32.mxu0 %v411
          %1378 = vmatmul.mubr.f32.gmra.mrb[0].mxu0 %v410
          %v1379 = vpop.f32.mrb[0].mxu0
          %v1380 = vadd.f32 %v931, %v1379
          %v1381 = vpop.f32.mrb[0].mxu0
          %v1382 = vadd.f32 %v933, %v1381
          %1383 = vmatprep.mubr.f32.mxu0 %v415
          %1384 = vmatmul.mubr.f32.gmra.mrb[0].mxu0 %v414
          %v1385 = vpop.f32.mrb[0].mxu0
          %v1386 = vadd.f32 %v937, %v1385
          %v1387 = vpop.f32.mrb[0].mxu0
          %v1388 = vadd.f32 %v939, %v1387
          %1389 = vmatprep.mubr.f32.mxu0 %v419
          %1390 = vmatmul.mubr.f32.gmra.mrb[0].mxu0 %v418
          %v1391 = vpop.f32.mrb[0].mxu0
          %v1392 = vadd.f32 %v943, %v1391
          %v1393 = vpop.f32.mrb[0].mxu0
          %v1394 = vadd.f32 %v945, %v1393
          %1395 = vmatprep.mubr.f32.mxu0 %v423
          %1396 = vmatmul.mubr.f32.gmra.mrb[0].mxu0 %v422
          %v1397 = vpop.f32.mrb[0].mxu0
          %v1398 = vadd.f32 %v949, %v1397
          %v1399 = vpop.f32.mrb[0].mxu0
          %v1400 = vadd.f32 %v951, %v1399
          %1401 = vmatprep.mubr.f32.mxu0 %v427
          %1402 = vmatmul.mubr.f32.gmra.mrb[0].mxu0 %v426
          %v1403 = vpop.f32.mrb[0].mxu0
          %v1404 = vadd.f32 %v955, %v1403
          %v1405 = vpop.f32.mrb[0].mxu0
          %v1406 = vadd.f32 %v957, %v1405
          %1407 = vmatprep.mubr.f32.mxu0 %v431
          %1408 = vmatmul.mubr.f32.gmra.mrb[0].mxu0 %v430
          %v1409 = vpop.f32.mrb[0].mxu0
          %v1410 = vadd.f32 %v961, %v1409
          %v1411 = vpop.f32.mrb[0].mxu0
          %v1412 = vadd.f32 %v963, %v1411
          %1413 = vmatprep.mubr.f32.mxu0 %v435
          %1414 = vmatmul.mubr.f32.gmra.mrb[0].mxu0 %v434
          %v1415 = vpop.f32.mrb[0].mxu0
          %v1416 = vadd.f32 %v967, %v1415
          %v1417 = vpop.f32.mrb[0].mxu0
          %v1418 = vadd.f32 %v969, %v1417
          %1419 = vmatprep.mubr.f32.mxu0 %v439
          %1420 = vmatmul.mubr.f32.gmra.mrb[0].mxu0 %v438
          %v1421 = vpop.f32.mrb[0].mxu0
          %v1422 = vadd.f32 %v973, %v1421
          %v1423 = vpop.f32.mrb[0].mxu0
          %v1424 = vadd.f32 %v975, %v1423
          %1425 = vmatprep.mubr.f32.mxu0 %v443
          %1426 = vmatmul.mubr.f32.gmra.mrb[0].mxu0 %v442
          %v1427 = vpop.f32.mrb[0].mxu0
          %v1428 = vadd.f32 %v979, %v1427
          %v1429 = vpop.f32.mrb[0].mxu0
          %v1430 = vadd.f32 %v981, %v1429
          %1431 = vmatprep.mubr.f32.mxu0 %v447
          %1432 = vmatmul.mubr.f32.gmra.mrb[0].mxu0 %v446
          %v1433 = vpop.f32.mrb[0].mxu0
          %v1434 = vadd.f32 %v985, %v1433
          %v1435 = vpop.f32.mrb[0].mxu0
          %v1436 = vadd.f32 %v987, %v1435
          %1437 = vmatprep.mubr.f32.mxu0 %v451
          %1438 = vmatmul.mubr.f32.gmra.mrb[0].mxu0 %v450
          %v1439 = vpop.f32.mrb[0].mxu0
          %v1440 = vadd.f32 %v991, %v1439
          %v1441 = vpop.f32.mrb[0].mxu0
          %v1442 = vadd.f32 %v993, %v1441
          %1443 = vmatprep.mubr.f32.mxu0 %v455
          %1444 = vmatmul.mubr.f32.gmra.mrb[0].mxu0 %v454
          %v1445 = vpop.f32.mrb[0].mxu0
          %v1446 = vadd.f32 %v997, %v1445
          %v1447 = vpop.f32.mrb[0].mxu0
          %v1448 = vadd.f32 %v999, %v1447
          %1449 = vmatprep.mubr.f32.mxu0 %v459
          %1450 = vmatmul.mubr.f32.gmra.mrb[0].mxu0 %v458
          %v1451 = vpop.f32.mrb[0].mxu0
          %v1452 = vadd.f32 %v1003, %v1451
          %v1453 = vpop.f32.mrb[0].mxu0
          %v1454 = vadd.f32 %v1005, %v1453
          %1455 = vmatprep.mubr.f32.mxu0 %v463
          %1456 = vmatmul.mubr.f32.gmra.mrb[0].mxu0 %v462
          %v1457 = vpop.f32.mrb[0].mxu0
          %v1458 = vadd.f32 %v1009, %v1457
          %v1459 = vpop.f32.mrb[0].mxu0
          %v1460 = vadd.f32 %v1011, %v1459
          %1461 = vmatprep.mubr.f32.mxu0 %v467
          %1462 = vmatmul.mubr.f32.gmra.mrb[0].mxu0 %v466
          %v1463 = vpop.f32.mrb[0].mxu0
          %v1464 = vadd.f32 %v1015, %v1463
          %v1465 = vpop.f32.mrb[0].mxu0
          %v1466 = vadd.f32 %v1017, %v1465
          %1467 = vmatprep.mubr.f32.mxu0 %v471
          %1468 = vmatmul.mubr.f32.gmra.mrb[0].mxu0 %v470
          %v1469 = vpop.f32.mrb[0].mxu0
          %v1470 = vadd.f32 %v1021, %v1469
          %v1471 = vpop.f32.mrb[0].mxu0
          %v1472 = vadd.f32 %v1023, %v1471
          %1473 = vmatprep.mubr.f32.mxu0 %v475
          %1474 = vmatmul.mubr.f32.gmra.mrb[0].mxu0 %v474
          %v1475 = vpop.f32.mrb[0].mxu0
          %v1476 = vadd.f32 %v1027, %v1475
          %v1477 = vpop.f32.mrb[0].mxu0
          %v1478 = vadd.f32 %v1029, %v1477
          %1479 = vmatprep.mubr.f32.mxu0 %v479
          %1480 = vmatmul.mubr.f32.gmra.mrb[0].mxu0 %v478
          %v1481 = vpop.f32.mrb[0].mxu0
          %v1482 = vadd.f32 %v1033, %v1481
          %v1483 = vpop.f32.mrb[0].mxu0
          %v1484 = vadd.f32 %v1035, %v1483
          %1485 = vmatprep.mubr.f32.mxu0 %v483
          %1486 = vmatmul.mubr.f32.gmra.mrb[0].mxu0 %v482
          %v1487 = vpop.f32.mrb[0].mxu0
          %v1488 = vadd.f32 %v1039, %v1487
          %v1489 = vpop.f32.mrb[0].mxu0
          %v1490 = vadd.f32 %v1041, %v1489
          %1491 = vmatprep.mubr.f32.mxu0 %v487
          %1492 = vmatmul.mubr.f32.gmra.mrb[0].mxu0 %v486
          %v1493 = vpop.f32.mrb[0].mxu0
          %v1494 = vadd.f32 %v1045, %v1493
          %v1495 = vpop.f32.mrb[0].mxu0
          %v1496 = vadd.f32 %v1047, %v1495
          %1497 = vmatprep.mubr.f32.mxu0 %v491
          %1498 = vmatmul.mubr.f32.gmra.mrb[0].mxu0 %v490
          %v1499 = vpop.f32.mrb[0].mxu0
          %v1500 = vadd.f32 %v1051, %v1499
          %v1501 = vpop.f32.mrb[0].mxu0
          %v1502 = vadd.f32 %v1053, %v1501
          %1503 = vmatprep.mubr.f32.mxu0 %v495
          %1504 = vmatmul.mubr.f32.gmra.mrb[0].mxu0 %v494
          %v1505 = vpop.f32.mrb[0].mxu0
          %v1506 = vadd.f32 %v1057, %v1505
          %v1507 = vpop.f32.mrb[0].mxu0
          %v1508 = vadd.f32 %v1059, %v1507
          %1509 = vmatprep.mubr.f32.mxu0 %v499
          %1510 = vmatmul.mubr.f32.gmra.mrb[0].mxu0 %v498
          %v1511 = vpop.f32.mrb[0].mxu0
          %v1512 = vadd.f32 %v1063, %v1511
          %v1513 = vpop.f32.mrb[0].mxu0
          %v1514 = vadd.f32 %v1065, %v1513
          %1515 = vmatprep.mubr.f32.mxu0 %v503
          %1516 = vmatmul.mubr.f32.gmra.mrb[0].mxu0 %v502
          %v1517 = vpop.f32.mrb[0].mxu0
          %v1518 = vadd.f32 %v1069, %v1517
          %v1519 = vpop.f32.mrb[0].mxu0
          %v1520 = vadd.f32 %v1071, %v1519
          %1521 = vmatprep.mubr.f32.mxu0 %v507
          %1522 = vmatmul.mubr.f32.gmra.mrb[0].mxu0 %v506
          %v1523 = vpop.f32.mrb[0].mxu0
          %v1524 = vadd.f32 %v1075, %v1523
          %v1525 = vpop.f32.mrb[0].mxu0
          %v1526 = vadd.f32 %v1077, %v1525
          %1527 = vmatprep.mubr.f32.mxu0 %v511
          %1528 = vmatmul.mubr.f32.gmra.mrb[0].mxu0 %v510
          %v1529 = vpop.f32.mrb[0].mxu0
          %v1530 = vadd.f32 %v1081, %v1529
          %v1531 = vpop.f32.mrb[0].mxu0
          %v1532 = vadd.f32 %v1083, %v1531
          %1533 = vmatprep.mubr.f32.mxu0 %v515
          %1534 = vmatmul.mubr.f32.gmra.mrb[0].mxu0 %v514
          %v1535 = vpop.f32.mrb[0].mxu0
          %v1536 = vadd.f32 %v1087, %v1535
          %v1537 = vpop.f32.mrb[0].mxu0
          %v1538 = vadd.f32 %v1089, %v1537
          %1539 = vmatprep.mubr.f32.mxu0 %v519
          %1540 = vmatmul.mubr.f32.gmra.mrb[0].mxu0 %v518
          %v1541 = vpop.f32.mrb[0].mxu0
          %v1542 = vadd.f32 %v1093, %v1541
          %v1543 = vpop.f32.mrb[0].mxu0
          %v1544 = vadd.f32 %v1095, %v1543
          %1545 = vdwg.mxu0
          %1546 = vst [vmem:[#allocation2] sm:$0xff] %v1164
          %1547 = vst [vmem:[#allocation2 + $0x8] sm:$0xff] %v1166
          %1548 = vst [vmem:[#allocation2 + $0x10] sm:$0xff] %v1170
          %1549 = vst [vmem:[#allocation2 + $0x18] sm:$0xff] %v1172
          %1550 = vst [vmem:[#allocation2 + $0x20] sm:$0xff] %v1176
          %1551 = vst [vmem:[#allocation2 + $0x28] sm:$0xff] %v1178
          %1552 = vst [vmem:[#allocation2 + $0x30] sm:$0xff] %v1182
          %1553 = vst [vmem:[#allocation2 + $0x38] sm:$0xff] %v1184
          %1554 = vst [vmem:[#allocation2 + $0x40] sm:$0xff] %v1188
          %1555 = vst [vmem:[#allocation2 + $0x48] sm:$0xff] %v1190
          %1556 = vst [vmem:[#allocation2 + $0x50] sm:$0xff] %v1194
          %1557 = vst [vmem:[#allocation2 + $0x58] sm:$0xff] %v1196
          %1558 = vst [vmem:[#allocation2 + $0x60] sm:$0xff] %v1200
          %1559 = vst [vmem:[#allocation2 + $0x68] sm:$0xff] %v1202
          %1560 = vst [vmem:[#allocation2 + $0x70] sm:$0xff] %v1206
          %1561 = vst [vmem:[#allocation2 + $0x78] sm:$0xff] %v1208
          %1562 = vst [vmem:[#allocation2 + $0x80] sm:$0xff] %v1212
          %1563 = vst [vmem:[#allocation2 + $0x88] sm:$0xff] %v1214
          %1564 = vst [vmem:[#allocation2 + $0x90] sm:$0xff] %v1218
          %1565 = vst [vmem:[#allocation2 + $0x98] sm:$0xff] %v1220
          %1566 = vst [vmem:[#allocation2 + $0xa0] sm:$0xff] %v1224
          %1567 = vst [vmem:[#allocation2 + $0xa8] sm:$0xff] %v1226
          %1568 = vst [vmem:[#allocation2 + $0xb0] sm:$0xff] %v1230
          %1569 = vst [vmem:[#allocation2 + $0xb8] sm:$0xff] %v1232
          %1570 = vst [vmem:[#allocation2 + $0xc0] sm:$0xff] %v1236
          %1571 = vst [vmem:[#allocation2 + $0xc8] sm:$0xff] %v1238
          %1572 = vst [vmem:[#allocation2 + $0xd0] sm:$0xff] %v1242
          %1573 = vst [vmem:[#allocation2 + $0xd8] sm:$0xff] %v1244
          %1574 = vst [vmem:[#allocation2 + $0xe0] sm:$0xff] %v1248
          %1575 = vst [vmem:[#allocation2 + $0xe8] sm:$0xff] %v1250
          %1576 = vst [vmem:[#allocation2 + $0xf0] sm:$0xff] %v1254
          %1577 = vst [vmem:[#allocation2 + $0xf8] sm:$0xff] %v1256
          %1578 = vst [vmem:[#allocation2 + $0x100] sm:$0xff] %v1260
          %1579 = vst [vmem:[#allocation2 + $0x108] sm:$0xff] %v1262
          %1580 = vst [vmem:[#allocation2 + $0x110] sm:$0xff] %v1266
          %1581 = vst [vmem:[#allocation2 + $0x118] sm:$0xff] %v1268
          %1582 = vst [vmem:[#allocation2 + $0x120] sm:$0xff] %v1272
          %1583 = vst [vmem:[#allocation2 + $0x128] sm:$0xff] %v1274
          %1584 = vst [vmem:[#allocation2 + $0x130] sm:$0xff] %v1278
          %1585 = vst [vmem:[#allocation2 + $0x138] sm:$0xff] %v1280
          %1586 = vst [vmem:[#allocation2 + $0x140] sm:$0xff] %v1284
          %1587 = vst [vmem:[#allocation2 + $0x148] sm:$0xff] %v1286
          %1588 = vst [vmem:[#allocation2 + $0x150] sm:$0xff] %v1290
          %1589 = vst [vmem:[#allocation2 + $0x158] sm:$0xff] %v1292
          %1590 = vst [vmem:[#allocation2 + $0x160] sm:$0xff] %v1296
          %1591 = vst [vmem:[#allocation2 + $0x168] sm:$0xff] %v1298
          %1592 = vst [vmem:[#allocation2 + $0x170] sm:$0xff] %v1302
          %1593 = vst [vmem:[#allocation2 + $0x178] sm:$0xff] %v1304
          %1594 = vst [vmem:[#allocation2 + $0x180] sm:$0xff] %v1308
          %1595 = vst [vmem:[#allocation2 + $0x188] sm:$0xff] %v1310
          %1596 = vst [vmem:[#allocation2 + $0x190] sm:$0xff] %v1314
          %1597 = vst [vmem:[#allocation2 + $0x198] sm:$0xff] %v1316
          %1598 = vst [vmem:[#allocation2 + $0x1a0] sm:$0xff] %v1320
          %1599 = vst [vmem:[#allocation2 + $0x1a8] sm:$0xff] %v1322
          %1600 = vst [vmem:[#allocation2 + $0x1b0] sm:$0xff] %v1326
          %1601 = vst [vmem:[#allocation2 + $0x1b8] sm:$0xff] %v1328
          %1602 = vst [vmem:[#allocation2 + $0x1c0] sm:$0xff] %v1332
          %1603 = vst [vmem:[#allocation2 + $0x1c8] sm:$0xff] %v1334
          %1604 = vst [vmem:[#allocation2 + $0x1d0] sm:$0xff] %v1338
          %1605 = vst [vmem:[#allocation2 + $0x1d8] sm:$0xff] %v1340
          %1606 = vst [vmem:[#allocation2 + $0x1e0] sm:$0xff] %v1344
          %1607 = vst [vmem:[#allocation2 + $0x1e8] sm:$0xff] %v1346
          %1608 = vst [vmem:[#allocation2 + $0x1f0] sm:$0xff] %v1350
          %1609 = vst [vmem:[#allocation2 + $0x1f8] sm:$0xff] %v1352
          %1610 = vst [vmem:[#allocation2 + $0x200] sm:$0xff] %v1356
          %1611 = vst [vmem:[#allocation2 + $0x208] sm:$0xff] %v1358
          %1612 = vst [vmem:[#allocation2 + $0x210] sm:$0xff] %v1362
          %1613 = vst [vmem:[#allocation2 + $0x218] sm:$0xff] %v1364
          %1614 = vst [vmem:[#allocation2 + $0x220] sm:$0xff] %v1368
          %1615 = vst [vmem:[#allocation2 + $0x228] sm:$0xff] %v1370
          %1616 = vst [vmem:[#allocation2 + $0x230] sm:$0xff] %v1374
          %1617 = vst [vmem:[#allocation2 + $0x238] sm:$0xff] %v1376
          %1618 = vst [vmem:[#allocation2 + $0x240] sm:$0xff] %v1380
          %1619 = vst [vmem:[#allocation2 + $0x248] sm:$0xff] %v1382
          %1620 = vst [vmem:[#allocation2 + $0x250] sm:$0xff] %v1386
          %1621 = vst [vmem:[#allocation2 + $0x258] sm:$0xff] %v1388
          %1622 = vst [vmem:[#allocation2 + $0x260] sm:$0xff] %v1392
          %1623 = vst [vmem:[#allocation2 + $0x268] sm:$0xff] %v1394
          %1624 = vst [vmem:[#allocation2 + $0x270] sm:$0xff] %v1398
          %1625 = vst [vmem:[#allocation2 + $0x278] sm:$0xff] %v1400
          %1626 = vst [vmem:[#allocation2 + $0x280] sm:$0xff] %v1404
          %1627 = vst [vmem:[#allocation2 + $0x288] sm:$0xff] %v1406
          %1628 = vst [vmem:[#allocation2 + $0x290] sm:$0xff] %v1410
          %1629 = vst [vmem:[#allocation2 + $0x298] sm:$0xff] %v1412
          %1630 = vst [vmem:[#allocation2 + $0x2a0] sm:$0xff] %v1416
          %1631 = vst [vmem:[#allocation2 + $0x2a8] sm:$0xff] %v1418
          %1632 = vst [vmem:[#allocation2 + $0x2b0] sm:$0xff] %v1422
          %1633 = vst [vmem:[#allocation2 + $0x2b8] sm:$0xff] %v1424
          %1634 = vst [vmem:[#allocation2 + $0x2c0] sm:$0xff] %v1428
          %1635 = vst [vmem:[#allocation2 + $0x2c8] sm:$0xff] %v1430
          %1636 = vst [vmem:[#allocation2 + $0x2d0] sm:$0xff] %v1434
          %1637 = vst [vmem:[#allocation2 + $0x2d8] sm:$0xff] %v1436
          %1638 = vst [vmem:[#allocation2 + $0x2e0] sm:$0xff] %v1440
          %1639 = vst [vmem:[#allocation2 + $0x2e8] sm:$0xff] %v1442
          %1640 = vst [vmem:[#allocation2 + $0x2f0] sm:$0xff] %v1446
          %1641 = vst [vmem:[#allocation2 + $0x2f8] sm:$0xff] %v1448
          %1642 = vst [vmem:[#allocation2 + $0x300] sm:$0xff] %v1452
          %1643 = vst [vmem:[#allocation2 + $0x308] sm:$0xff] %v1454
          %1644 = vst [vmem:[#allocation2 + $0x310] sm:$0xff] %v1458
          %1645 = vst [vmem:[#allocation2 + $0x318] sm:$0xff] %v1460
          %1646 = vst [vmem:[#allocation2 + $0x320] sm:$0xff] %v1464
          %1647 = vst [vmem:[#allocation2 + $0x328] sm:$0xff] %v1466
          %1648 = vst [vmem:[#allocation2 + $0x330] sm:$0xff] %v1470
          %1649 = vst [vmem:[#allocation2 + $0x338] sm:$0xff] %v1472
          %1650 = vst [vmem:[#allocation2 + $0x340] sm:$0xff] %v1476
          %1651 = vst [vmem:[#allocation2 + $0x348] sm:$0xff] %v1478
          %1652 = vst [vmem:[#allocation2 + $0x350] sm:$0xff] %v1482
          %1653 = vst [vmem:[#allocation2 + $0x358] sm:$0xff] %v1484
          %1654 = vst [vmem:[#allocation2 + $0x360] sm:$0xff] %v1488
          %1655 = vst [vmem:[#allocation2 + $0x368] sm:$0xff] %v1490
          %1656 = vst [vmem:[#allocation2 + $0x370] sm:$0xff] %v1494
          %1657 = vst [vmem:[#allocation2 + $0x378] sm:$0xff] %v1496
          %1658 = vst [vmem:[#allocation2 + $0x380] sm:$0xff] %v1500
          %1659 = vst [vmem:[#allocation2 + $0x388] sm:$0xff] %v1502
          %1660 = vst [vmem:[#allocation2 + $0x390] sm:$0xff] %v1506
          %1661 = vst [vmem:[#allocation2 + $0x398] sm:$0xff] %v1508
          %1662 = vst [vmem:[#allocation2 + $0x3a0] sm:$0xff] %v1512
          %1663 = vst [vmem:[#allocation2 + $0x3a8] sm:$0xff] %v1514
          %1664 = vst [vmem:[#allocation2 + $0x3b0] sm:$0xff] %v1518
          %1665 = vst [vmem:[#allocation2 + $0x3b8] sm:$0xff] %v1520
          %1666 = vst [vmem:[#allocation2 + $0x3c0] sm:$0xff] %v1524
          %1667 = vst [vmem:[#allocation2 + $0x3c8] sm:$0xff] %v1526
          %1668 = vst [vmem:[#allocation2 + $0x3d0] sm:$0xff] %v1530
          %1669 = vst [vmem:[#allocation2 + $0x3d8] sm:$0xff] %v1532
          %1670 = vst [vmem:[#allocation2 + $0x3e0] sm:$0xff] %v1536
          %1671 = vst [vmem:[#allocation2 + $0x3e8] sm:$0xff] %v1538
          %1672 = vst [vmem:[#allocation2 + $0x3f0] sm:$0xff] %v1542
          %1673 = vst [vmem:[#allocation2 + $0x3f8] sm:$0xff] %v1544
        $region48: #{tpu_custom_call.1} parent=31 // pred_fallthru
          _
        %s1674 = smul.u32 %s26, 256
        %s1675 = sshra.s32 %s1674, 3
        %s1676 = sand.u32 %s1674, 7
        %s1677 = smul.u32 %s1675, 2
        %s1678 = smul.addr %s1677, 8
        %s1679 = scalar_lea.vmem [#allocation2], %s1678
        %v1680 = vld [vmem:[%s1679] sm:$0xff]
        %v1681 = vld [vmem:[%s1679 + $0x8] sm:$0xff]
        %v1682 = vld [vmem:[%s1679 + $0x10] sm:$0xff]
        %v1683 = vld [vmem:[%s1679 + $0x18] sm:$0xff]
        %v1684 = vld [vmem:[%s1679 + $0x20] sm:$0xff]
        %v1685 = vld [vmem:[%s1679 + $0x28] sm:$0xff]
        %v1686 = vld [vmem:[%s1679 + $0x30] sm:$0xff]
        %v1687 = vld [vmem:[%s1679 + $0x38] sm:$0xff]
        %v1688 = vld [vmem:[%s1679 + $0x40] sm:$0xff]
        %v1689 = vld [vmem:[%s1679 + $0x48] sm:$0xff]
        %v1690 = vld [vmem:[%s1679 + $0x50] sm:$0xff]
        %v1691 = vld [vmem:[%s1679 + $0x58] sm:$0xff]
        %v1692 = vld [vmem:[%s1679 + $0x60] sm:$0xff]
        %v1693 = vld [vmem:[%s1679 + $0x68] sm:$0xff]
        %v1694 = vld [vmem:[%s1679 + $0x70] sm:$0xff]
        %v1695 = vld [vmem:[%s1679 + $0x78] sm:$0xff]
        %v1696 = vld [vmem:[%s1679 + $0x80] sm:$0xff]
        %v1697 = vld [vmem:[%s1679 + $0x88] sm:$0xff]
        %v1698 = vld [vmem:[%s1679 + $0x90] sm:$0xff]
        %v1699 = vld [vmem:[%s1679 + $0x98] sm:$0xff]
        %v1700 = vld [vmem:[%s1679 + $0xa0] sm:$0xff]
        %v1701 = vld [vmem:[%s1679 + $0xa8] sm:$0xff]
        %v1702 = vld [vmem:[%s1679 + $0xb0] sm:$0xff]
        %v1703 = vld [vmem:[%s1679 + $0xb8] sm:$0xff]
        %v1704 = vld [vmem:[%s1679 + $0xc0] sm:$0xff]
        %v1705 = vld [vmem:[%s1679 + $0xc8] sm:$0xff]
        %v1706 = vld [vmem:[%s1679 + $0xd0] sm:$0xff]
        %v1707 = vld [vmem:[%s1679 + $0xd8] sm:$0xff]
        %v1708 = vld [vmem:[%s1679 + $0xe0] sm:$0xff]
        %v1709 = vld [vmem:[%s1679 + $0xe8] sm:$0xff]
        %v1710 = vld [vmem:[%s1679 + $0xf0] sm:$0xff]
        %v1711 = vld [vmem:[%s1679 + $0xf8] sm:$0xff]
        %v1712 = vld [vmem:[%s1679 + $0x100] sm:$0xff]
        %v1713 = vld [vmem:[%s1679 + $0x108] sm:$0xff]
        %v1714 = vld [vmem:[%s1679 + $0x110] sm:$0xff]
        %v1715 = vld [vmem:[%s1679 + $0x118] sm:$0xff]
        %v1716 = vld [vmem:[%s1679 + $0x120] sm:$0xff]
        %v1717 = vld [vmem:[%s1679 + $0x128] sm:$0xff]
        %v1718 = vld [vmem:[%s1679 + $0x130] sm:$0xff]
        %v1719 = vld [vmem:[%s1679 + $0x138] sm:$0xff]
        %v1720 = vld [vmem:[%s1679 + $0x140] sm:$0xff]
        %v1721 = vld [vmem:[%s1679 + $0x148] sm:$0xff]
        %v1722 = vld [vmem:[%s1679 + $0x150] sm:$0xff]
        %v1723 = vld [vmem:[%s1679 + $0x158] sm:$0xff]
        %v1724 = vld [vmem:[%s1679 + $0x160] sm:$0xff]
        %v1725 = vld [vmem:[%s1679 + $0x168] sm:$0xff]
        %v1726 = vld [vmem:[%s1679 + $0x170] sm:$0xff]
        %v1727 = vld [vmem:[%s1679 + $0x178] sm:$0xff]
        %v1728 = vld [vmem:[%s1679 + $0x180] sm:$0xff]
        %v1729 = vld [vmem:[%s1679 + $0x188] sm:$0xff]
        %v1730 = vld [vmem:[%s1679 + $0x190] sm:$0xff]
        %v1731 = vld [vmem:[%s1679 + $0x198] sm:$0xff]
        %v1732 = vld [vmem:[%s1679 + $0x1a0] sm:$0xff]
        %v1733 = vld [vmem:[%s1679 + $0x1a8] sm:$0xff]
        %v1734 = vld [vmem:[%s1679 + $0x1b0] sm:$0xff]
        %v1735 = vld [vmem:[%s1679 + $0x1b8] sm:$0xff]
        %v1736 = vld [vmem:[%s1679 + $0x1c0] sm:$0xff]
        %v1737 = vld [vmem:[%s1679 + $0x1c8] sm:$0xff]
        %v1738 = vld [vmem:[%s1679 + $0x1d0] sm:$0xff]
        %v1739 = vld [vmem:[%s1679 + $0x1d8] sm:$0xff]
        %v1740 = vld [vmem:[%s1679 + $0x1e0] sm:$0xff]
        %v1741 = vld [vmem:[%s1679 + $0x1e8] sm:$0xff]
        %v1742 = vld [vmem:[%s1679 + $0x1f0] sm:$0xff]
        %v1743 = vld [vmem:[%s1679 + $0x1f8] sm:$0xff]
        %v1744 = vld [vmem:[%s228] sm:$0xff]
        %v1745 = vld [vmem:[%s228 + $0x8] sm:$0xff]
        %v1746 = vld [vmem:[%s228 + $0x10] sm:$0xff]
        %v1747 = vld [vmem:[%s228 + $0x18] sm:$0xff]
        %v1748 = vld [vmem:[%s228 + $0x20] sm:$0xff]
        %v1749 = vld [vmem:[%s228 + $0x28] sm:$0xff]
        %v1750 = vld [vmem:[%s228 + $0x30] sm:$0xff]
        %v1751 = vld [vmem:[%s228 + $0x38] sm:$0xff]
        %v1752 = vld [vmem:[%s228 + $0x40] sm:$0xff]
        %v1753 = vld [vmem:[%s228 + $0x48] sm:$0xff]
        %v1754 = vld [vmem:[%s228 + $0x50] sm:$0xff]
        %v1755 = vld [vmem:[%s228 + $0x58] sm:$0xff]
        %v1756 = vld [vmem:[%s228 + $0x60] sm:$0xff]
        %v1757 = vld [vmem:[%s228 + $0x68] sm:$0xff]
        %v1758 = vld [vmem:[%s228 + $0x70] sm:$0xff]
        %v1759 = vld [vmem:[%s228 + $0x78] sm:$0xff]
        %v1760 = vld [vmem:[%s228 + $0x80] sm:$0xff]
        %v1761 = vld [vmem:[%s228 + $0x88] sm:$0xff]
        %v1762 = vld [vmem:[%s228 + $0x90] sm:$0xff]
        %v1763 = vld [vmem:[%s228 + $0x98] sm:$0xff]
        %v1764 = vld [vmem:[%s228 + $0xa0] sm:$0xff]
        %v1765 = vld [vmem:[%s228 + $0xa8] sm:$0xff]
        %v1766 = vld [vmem:[%s228 + $0xb0] sm:$0xff]
        %v1767 = vld [vmem:[%s228 + $0xb8] sm:$0xff]
        %v1768 = vld [vmem:[%s228 + $0xc0] sm:$0xff]
        %v1769 = vld [vmem:[%s228 + $0xc8] sm:$0xff]
        %v1770 = vld [vmem:[%s228 + $0xd0] sm:$0xff]
        %v1771 = vld [vmem:[%s228 + $0xd8] sm:$0xff]
        %v1772 = vld [vmem:[%s228 + $0xe0] sm:$0xff]
        %v1773 = vld [vmem:[%s228 + $0xe8] sm:$0xff]
        %v1774 = vld [vmem:[%s228 + $0xf0] sm:$0xff]
        %v1775 = vld [vmem:[%s228 + $0xf8] sm:$0xff]
        %v1776 = vld [vmem:[%s228 + $0x100] sm:$0xff]
        %v1777 = vld [vmem:[%s228 + $0x108] sm:$0xff]
        %v1778 = vld [vmem:[%s228 + $0x110] sm:$0xff]
        %v1779 = vld [vmem:[%s228 + $0x118] sm:$0xff]
        %v1780 = vld [vmem:[%s228 + $0x120] sm:$0xff]
        %v1781 = vld [vmem:[%s228 + $0x128] sm:$0xff]
        %v1782 = vld [vmem:[%s228 + $0x130] sm:$0xff]
        %v1783 = vld [vmem:[%s228 + $0x138] sm:$0xff]
        %v1784 = vld [vmem:[%s228 + $0x140] sm:$0xff]
        %v1785 = vld [vmem:[%s228 + $0x148] sm:$0xff]
        %v1786 = vld [vmem:[%s228 + $0x150] sm:$0xff]
        %v1787 = vld [vmem:[%s228 + $0x158] sm:$0xff]
        %v1788 = vld [vmem:[%s228 + $0x160] sm:$0xff]
        %v1789 = vld [vmem:[%s228 + $0x168] sm:$0xff]
        %v1790 = vld [vmem:[%s228 + $0x170] sm:$0xff]
        %v1791 = vld [vmem:[%s228 + $0x178] sm:$0xff]
        %v1792 = vld [vmem:[%s228 + $0x180] sm:$0xff]
        %v1793 = vld [vmem:[%s228 + $0x188] sm:$0xff]
        %v1794 = vld [vmem:[%s228 + $0x190] sm:$0xff]
        %v1795 = vld [vmem:[%s228 + $0x198] sm:$0xff]
        %v1796 = vld [vmem:[%s228 + $0x1a0] sm:$0xff]
        %v1797 = vld [vmem:[%s228 + $0x1a8] sm:$0xff]
        %v1798 = vld [vmem:[%s228 + $0x1b0] sm:$0xff]
        %v1799 = vld [vmem:[%s228 + $0x1b8] sm:$0xff]
        %v1800 = vld [vmem:[%s228 + $0x1c0] sm:$0xff]
        %v1801 = vld [vmem:[%s228 + $0x1c8] sm:$0xff]
        %v1802 = vld [vmem:[%s228 + $0x1d0] sm:$0xff]
        %v1803 = vld [vmem:[%s228 + $0x1d8] sm:$0xff]
        %v1804 = vld [vmem:[%s228 + $0x1e0] sm:$0xff]
        %v1805 = vld [vmem:[%s228 + $0x1e8] sm:$0xff]
        %v1806 = vld [vmem:[%s228 + $0x1f0] sm:$0xff]
        %v1807 = vld [vmem:[%s228 + $0x1f8] sm:$0xff]
        %v1808 = vld [vmem:[%s228 + $0x200] sm:$0xff]
        %v1809 = vld [vmem:[%s228 + $0x208] sm:$0xff]
        %v1810 = vld [vmem:[%s228 + $0x210] sm:$0xff]
        %v1811 = vld [vmem:[%s228 + $0x218] sm:$0xff]
        %v1812 = vld [vmem:[%s228 + $0x220] sm:$0xff]
        %v1813 = vld [vmem:[%s228 + $0x228] sm:$0xff]
        %v1814 = vld [vmem:[%s228 + $0x230] sm:$0xff]
        %v1815 = vld [vmem:[%s228 + $0x238] sm:$0xff]
        %v1816 = vld [vmem:[%s228 + $0x240] sm:$0xff]
        %v1817 = vld [vmem:[%s228 + $0x248] sm:$0xff]
        %v1818 = vld [vmem:[%s228 + $0x250] sm:$0xff]
        %v1819 = vld [vmem:[%s228 + $0x258] sm:$0xff]
        %v1820 = vld [vmem:[%s228 + $0x260] sm:$0xff]
        %v1821 = vld [vmem:[%s228 + $0x268] sm:$0xff]
        %v1822 = vld [vmem:[%s228 + $0x270] sm:$0xff]
        %v1823 = vld [vmem:[%s228 + $0x278] sm:$0xff]
        %v1824 = vld [vmem:[%s228 + $0x280] sm:$0xff]
        %v1825 = vld [vmem:[%s228 + $0x288] sm:$0xff]
        %v1826 = vld [vmem:[%s228 + $0x290] sm:$0xff]
        %v1827 = vld [vmem:[%s228 + $0x298] sm:$0xff]
        %v1828 = vld [vmem:[%s228 + $0x2a0] sm:$0xff]
        %v1829 = vld [vmem:[%s228 + $0x2a8] sm:$0xff]
        %v1830 = vld [vmem:[%s228 + $0x2b0] sm:$0xff]
        %v1831 = vld [vmem:[%s228 + $0x2b8] sm:$0xff]
        %v1832 = vld [vmem:[%s228 + $0x2c0] sm:$0xff]
        %v1833 = vld [vmem:[%s228 + $0x2c8] sm:$0xff]
        %v1834 = vld [vmem:[%s228 + $0x2d0] sm:$0xff]
        %v1835 = vld [vmem:[%s228 + $0x2d8] sm:$0xff]
        %v1836 = vld [vmem:[%s228 + $0x2e0] sm:$0xff]
        %v1837 = vld [vmem:[%s228 + $0x2e8] sm:$0xff]
        %v1838 = vld [vmem:[%s228 + $0x2f0] sm:$0xff]
        %v1839 = vld [vmem:[%s228 + $0x2f8] sm:$0xff]
        %v1840 = vld [vmem:[%s228 + $0x300] sm:$0xff]
        %v1841 = vld [vmem:[%s228 + $0x308] sm:$0xff]
        %v1842 = vld [vmem:[%s228 + $0x310] sm:$0xff]
        %v1843 = vld [vmem:[%s228 + $0x318] sm:$0xff]
        %v1844 = vld [vmem:[%s228 + $0x320] sm:$0xff]
        %v1845 = vld [vmem:[%s228 + $0x328] sm:$0xff]
        %v1846 = vld [vmem:[%s228 + $0x330] sm:$0xff]
        %v1847 = vld [vmem:[%s228 + $0x338] sm:$0xff]
        %v1848 = vld [vmem:[%s228 + $0x340] sm:$0xff]
        %v1849 = vld [vmem:[%s228 + $0x348] sm:$0xff]
        %v1850 = vld [vmem:[%s228 + $0x350] sm:$0xff]
        %v1851 = vld [vmem:[%s228 + $0x358] sm:$0xff]
        %v1852 = vld [vmem:[%s228 + $0x360] sm:$0xff]
        %v1853 = vld [vmem:[%s228 + $0x368] sm:$0xff]
        %v1854 = vld [vmem:[%s228 + $0x370] sm:$0xff]
        %v1855 = vld [vmem:[%s228 + $0x378] sm:$0xff]
        %v1856 = vld [vmem:[%s228 + $0x380] sm:$0xff]
        %v1857 = vld [vmem:[%s228 + $0x388] sm:$0xff]
        %v1858 = vld [vmem:[%s228 + $0x390] sm:$0xff]
        %v1859 = vld [vmem:[%s228 + $0x398] sm:$0xff]
        %v1860 = vld [vmem:[%s228 + $0x3a0] sm:$0xff]
        %v1861 = vld [vmem:[%s228 + $0x3a8] sm:$0xff]
        %v1862 = vld [vmem:[%s228 + $0x3b0] sm:$0xff]
        %v1863 = vld [vmem:[%s228 + $0x3b8] sm:$0xff]
        %v1864 = vld [vmem:[%s228 + $0x3c0] sm:$0xff]
        %v1865 = vld [vmem:[%s228 + $0x3c8] sm:$0xff]
        %v1866 = vld [vmem:[%s228 + $0x3d0] sm:$0xff]
        %v1867 = vld [vmem:[%s228 + $0x3d8] sm:$0xff]
        %v1868 = vld [vmem:[%s228 + $0x3e0] sm:$0xff]
        %v1869 = vld [vmem:[%s228 + $0x3e8] sm:$0xff]
        %v1870 = vld [vmem:[%s228 + $0x3f0] sm:$0xff]
        %v1871 = vld [vmem:[%s228 + $0x3f8] sm:$0xff]
        %v1872 = vld [vmem:[#allocation2] sm:$0xff]
        %v1873 = vld [vmem:[#allocation2 + $0x8] sm:$0xff]
        %v1874 = vld [vmem:[#allocation2 + $0x10] sm:$0xff]
        %v1875 = vld [vmem:[#allocation2 + $0x18] sm:$0xff]
        %v1876 = vld [vmem:[#allocation2 + $0x20] sm:$0xff]
        %v1877 = vld [vmem:[#allocation2 + $0x28] sm:$0xff]
        %v1878 = vld [vmem:[#allocation2 + $0x30] sm:$0xff]
        %v1879 = vld [vmem:[#allocation2 + $0x38] sm:$0xff]
        %v1880 = vld [vmem:[#allocation2 + $0x40] sm:$0xff]
        %v1881 = vld [vmem:[#allocation2 + $0x48] sm:$0xff]
        %v1882 = vld [vmem:[#allocation2 + $0x50] sm:$0xff]
        %v1883 = vld [vmem:[#allocation2 + $0x58] sm:$0xff]
        %v1884 = vld [vmem:[#allocation2 + $0x60] sm:$0xff]
        %v1885 = vld [vmem:[#allocation2 + $0x68] sm:$0xff]
        %v1886 = vld [vmem:[#allocation2 + $0x70] sm:$0xff]
        %v1887 = vld [vmem:[#allocation2 + $0x78] sm:$0xff]
        %v1888 = vld [vmem:[#allocation2 + $0x80] sm:$0xff]
        %v1889 = vld [vmem:[#allocation2 + $0x88] sm:$0xff]
        %v1890 = vld [vmem:[#allocation2 + $0x90] sm:$0xff]
        %v1891 = vld [vmem:[#allocation2 + $0x98] sm:$0xff]
        %v1892 = vld [vmem:[#allocation2 + $0xa0] sm:$0xff]
        %v1893 = vld [vmem:[#allocation2 + $0xa8] sm:$0xff]
        %v1894 = vld [vmem:[#allocation2 + $0xb0] sm:$0xff]
        %v1895 = vld [vmem:[#allocation2 + $0xb8] sm:$0xff]
        %v1896 = vld [vmem:[#allocation2 + $0xc0] sm:$0xff]
        %v1897 = vld [vmem:[#allocation2 + $0xc8] sm:$0xff]
        %v1898 = vld [vmem:[#allocation2 + $0xd0] sm:$0xff]
        %v1899 = vld [vmem:[#allocation2 + $0xd8] sm:$0xff]
        %v1900 = vld [vmem:[#allocation2 + $0xe0] sm:$0xff]
        %v1901 = vld [vmem:[#allocation2 + $0xe8] sm:$0xff]
        %v1902 = vld [vmem:[#allocation2 + $0xf0] sm:$0xff]
        %v1903 = vld [vmem:[#allocation2 + $0xf8] sm:$0xff]
        %v1904 = vld [vmem:[#allocation2 + $0x100] sm:$0xff]
        %v1905 = vld [vmem:[#allocation2 + $0x108] sm:$0xff]
        %v1906 = vld [vmem:[#allocation2 + $0x110] sm:$0xff]
        %v1907 = vld [vmem:[#allocation2 + $0x118] sm:$0xff]
        %v1908 = vld [vmem:[#allocation2 + $0x120] sm:$0xff]
        %v1909 = vld [vmem:[#allocation2 + $0x128] sm:$0xff]
        %v1910 = vld [vmem:[#allocation2 + $0x130] sm:$0xff]
        %v1911 = vld [vmem:[#allocation2 + $0x138] sm:$0xff]
        %v1912 = vld [vmem:[#allocation2 + $0x140] sm:$0xff]
        %v1913 = vld [vmem:[#allocation2 + $0x148] sm:$0xff]
        %v1914 = vld [vmem:[#allocation2 + $0x150] sm:$0xff]
        %v1915 = vld [vmem:[#allocation2 + $0x158] sm:$0xff]
        %v1916 = vld [vmem:[#allocation2 + $0x160] sm:$0xff]
        %v1917 = vld [vmem:[#allocation2 + $0x168] sm:$0xff]
        %v1918 = vld [vmem:[#allocation2 + $0x170] sm:$0xff]
        %v1919 = vld [vmem:[#allocation2 + $0x178] sm:$0xff]
        %v1920 = vld [vmem:[#allocation2 + $0x180] sm:$0xff]
        %v1921 = vld [vmem:[#allocation2 + $0x188] sm:$0xff]
        %v1922 = vld [vmem:[#allocation2 + $0x190] sm:$0xff]
        %v1923 = vld [vmem:[#allocation2 + $0x198] sm:$0xff]
        %v1924 = vld [vmem:[#allocation2 + $0x1a0] sm:$0xff]
        %v1925 = vld [vmem:[#allocation2 + $0x1a8] sm:$0xff]
        %v1926 = vld [vmem:[#allocation2 + $0x1b0] sm:$0xff]
        %v1927 = vld [vmem:[#allocation2 + $0x1b8] sm:$0xff]
        %v1928 = vld [vmem:[#allocation2 + $0x1c0] sm:$0xff]
        %v1929 = vld [vmem:[#allocation2 + $0x1c8] sm:$0xff]
        %v1930 = vld [vmem:[#allocation2 + $0x1d0] sm:$0xff]
        %v1931 = vld [vmem:[#allocation2 + $0x1d8] sm:$0xff]
        %v1932 = vld [vmem:[#allocation2 + $0x1e0] sm:$0xff]
        %v1933 = vld [vmem:[#allocation2 + $0x1e8] sm:$0xff]
        %v1934 = vld [vmem:[#allocation2 + $0x1f0] sm:$0xff]
        %v1935 = vld [vmem:[#allocation2 + $0x1f8] sm:$0xff]
        %v1936 = vld [vmem:[#allocation2 + $0x200] sm:$0xff]
        %v1937 = vld [vmem:[#allocation2 + $0x208] sm:$0xff]
        %v1938 = vld [vmem:[#allocation2 + $0x210] sm:$0xff]
        %v1939 = vld [vmem:[#allocation2 + $0x218] sm:$0xff]
        %v1940 = vld [vmem:[#allocation2 + $0x220] sm:$0xff]
        %v1941 = vld [vmem:[#allocation2 + $0x228] sm:$0xff]
        %v1942 = vld [vmem:[#allocation2 + $0x230] sm:$0xff]
        %v1943 = vld [vmem:[#allocation2 + $0x238] sm:$0xff]
        %v1944 = vld [vmem:[#allocation2 + $0x240] sm:$0xff]
        %v1945 = vld [vmem:[#allocation2 + $0x248] sm:$0xff]
        %v1946 = vld [vmem:[#allocation2 + $0x250] sm:$0xff]
        %v1947 = vld [vmem:[#allocation2 + $0x258] sm:$0xff]
        %v1948 = vld [vmem:[#allocation2 + $0x260] sm:$0xff]
        %v1949 = vld [vmem:[#allocation2 + $0x268] sm:$0xff]
        %v1950 = vld [vmem:[#allocation2 + $0x270] sm:$0xff]
        %v1951 = vld [vmem:[#allocation2 + $0x278] sm:$0xff]
        %v1952 = vld [vmem:[#allocation2 + $0x280] sm:$0xff]
        %v1953 = vld [vmem:[#allocation2 + $0x288] sm:$0xff]
        %v1954 = vld [vmem:[#allocation2 + $0x290] sm:$0xff]
        %v1955 = vld [vmem:[#allocation2 + $0x298] sm:$0xff]
        %v1956 = vld [vmem:[#allocation2 + $0x2a0] sm:$0xff]
        %v1957 = vld [vmem:[#allocation2 + $0x2a8] sm:$0xff]
        %v1958 = vld [vmem:[#allocation2 + $0x2b0] sm:$0xff]
        %v1959 = vld [vmem:[#allocation2 + $0x2b8] sm:$0xff]
        %v1960 = vld [vmem:[#allocation2 + $0x2c0] sm:$0xff]
        %v1961 = vld [vmem:[#allocation2 + $0x2c8] sm:$0xff]
        %v1962 = vld [vmem:[#allocation2 + $0x2d0] sm:$0xff]
        %v1963 = vld [vmem:[#allocation2 + $0x2d8] sm:$0xff]
        %v1964 = vld [vmem:[#allocation2 + $0x2e0] sm:$0xff]
        %v1965 = vld [vmem:[#allocation2 + $0x2e8] sm:$0xff]
        %v1966 = vld [vmem:[#allocation2 + $0x2f0] sm:$0xff]
        %v1967 = vld [vmem:[#allocation2 + $0x2f8] sm:$0xff]
        %v1968 = vld [vmem:[#allocation2 + $0x300] sm:$0xff]
        %v1969 = vld [vmem:[#allocation2 + $0x308] sm:$0xff]
        %v1970 = vld [vmem:[#allocation2 + $0x310] sm:$0xff]
        %v1971 = vld [vmem:[#allocation2 + $0x318] sm:$0xff]
        %v1972 = vld [vmem:[#allocation2 + $0x320] sm:$0xff]
        %v1973 = vld [vmem:[#allocation2 + $0x328] sm:$0xff]
        %v1974 = vld [vmem:[#allocation2 + $0x330] sm:$0xff]
        %v1975 = vld [vmem:[#allocation2 + $0x338] sm:$0xff]
        %v1976 = vld [vmem:[#allocation2 + $0x340] sm:$0xff]
        %v1977 = vld [vmem:[#allocation2 + $0x348] sm:$0xff]
        %v1978 = vld [vmem:[#allocation2 + $0x350] sm:$0xff]
        %v1979 = vld [vmem:[#allocation2 + $0x358] sm:$0xff]
        %v1980 = vld [vmem:[#allocation2 + $0x360] sm:$0xff]
        %v1981 = vld [vmem:[#allocation2 + $0x368] sm:$0xff]
        %v1982 = vld [vmem:[#allocation2 + $0x370] sm:$0xff]
        %v1983 = vld [vmem:[#allocation2 + $0x378] sm:$0xff]
        %v1984 = vld [vmem:[#allocation2 + $0x380] sm:$0xff]
        %v1985 = vld [vmem:[#allocation2 + $0x388] sm:$0xff]
        %v1986 = vld [vmem:[#allocation2 + $0x390] sm:$0xff]
        %v1987 = vld [vmem:[#allocation2 + $0x398] sm:$0xff]
        %v1988 = vld [vmem:[#allocation2 + $0x3a0] sm:$0xff]
        %v1989 = vld [vmem:[#allocation2 + $0x3a8] sm:$0xff]
        %v1990 = vld [vmem:[#allocation2 + $0x3b0] sm:$0xff]
        %v1991 = vld [vmem:[#allocation2 + $0x3b8] sm:$0xff]
        %v1992 = vld [vmem:[#allocation2 + $0x3c0] sm:$0xff]
        %v1993 = vld [vmem:[#allocation2 + $0x3c8] sm:$0xff]
        %v1994 = vld [vmem:[#allocation2 + $0x3d0] sm:$0xff]
        %v1995 = vld [vmem:[#allocation2 + $0x3d8] sm:$0xff]
        %v1996 = vld [vmem:[#allocation2 + $0x3e0] sm:$0xff]
        %v1997 = vld [vmem:[#allocation2 + $0x3e8] sm:$0xff]
        %v1998 = vld [vmem:[#allocation2 + $0x3f0] sm:$0xff]
        %v1999 = vld [vmem:[#allocation2 + $0x3f8] sm:$0xff]
        %2000 = vmatprep.subr.mxu0 %v1873
        %2001 = vmatpush1.msra.mxu0 %v1872
        %2002 = vmatprep.subr.mxu0 %v1875
        %2003 = vmatpush1.msra.mxu0 %v1874
        %2004 = vmatprep.subr.mxu0 %v1877
        %2005 = vmatpush1.msra.mxu0 %v1876
        %2006 = vmatprep.subr.mxu0 %v1879
        %2007 = vmatpush1.msra.mxu0 %v1878
        %2008 = vmatprep.subr.mxu0 %v1881
        %2009 = vmatpush1.msra.mxu0 %v1880
        %2010 = vmatprep.subr.mxu0 %v1883
        %2011 = vmatpush1.msra.mxu0 %v1882
        %2012 = vmatprep.subr.mxu0 %v1885
        %2013 = vmatpush1.msra.mxu0 %v1884
        %2014 = vmatprep.subr.mxu0 %v1887
        %2015 = vmatpush1.msra.mxu0 %v1886
        %2016 = vmatprep.subr.mxu0 %v1889
        %2017 = vmatpush1.msra.mxu0 %v1888
        %2018 = vmatprep.subr.mxu0 %v1891
        %2019 = vmatpush1.msra.mxu0 %v1890
        %2020 = vmatprep.subr.mxu0 %v1893
        %2021 = vmatpush1.msra.mxu0 %v1892
        %2022 = vmatprep.subr.mxu0 %v1895
        %2023 = vmatpush1.msra.mxu0 %v1894
        %2024 = vmatprep.subr.mxu0 %v1897
        %2025 = vmatpush1.msra.mxu0 %v1896
        %2026 = vmatprep.subr.mxu0 %v1899
        %2027 = vmatpush1.msra.mxu0 %v1898
        %2028 = vmatprep.subr.mxu0 %v1901
        %2029 = vmatpush1.msra.mxu0 %v1900
        %2030 = vmatprep.subr.mxu0 %v1903
        %2031 = vmatpush1.msra.mxu0 %v1902
        %2032 = vmatprep.subr.mxu0 %v1905
        %2033 = vmatpush1.msra.mxu0 %v1904
        %2034 = vmatprep.subr.mxu0 %v1907
        %2035 = vmatpush1.msra.mxu0 %v1906
        %2036 = vmatprep.subr.mxu0 %v1909
        %2037 = vmatpush1.msra.mxu0 %v1908
        %2038 = vmatprep.subr.mxu0 %v1911
        %2039 = vmatpush1.msra.mxu0 %v1910
        %2040 = vmatprep.subr.mxu0 %v1913
        %2041 = vmatpush1.msra.mxu0 %v1912
        %2042 = vmatprep.subr.mxu0 %v1915
        %2043 = vmatpush1.msra.mxu0 %v1914
        %2044 = vmatprep.subr.mxu0 %v1917
        %2045 = vmatpush1.msra.mxu0 %v1916
        %2046 = vmatprep.subr.mxu0 %v1919
        %2047 = vmatpush1.msra.mxu0 %v1918
        %2048 = vmatprep.subr.mxu0 %v1921
        %2049 = vmatpush1.msra.mxu0 %v1920
        %2050 = vmatprep.subr.mxu0 %v1923
        %2051 = vmatpush1.msra.mxu0 %v1922
        %2052 = vmatprep.subr.mxu0 %v1925
        %2053 = vmatpush1.msra.mxu0 %v1924
        %2054 = vmatprep.subr.mxu0 %v1927
        %2055 = vmatpush1.msra.mxu0 %v1926
        %2056 = vmatprep.subr.mxu0 %v1929
        %2057 = vmatpush1.msra.mxu0 %v1928
        %2058 = vmatprep.subr.mxu0 %v1931
        %2059 = vmatpush1.msra.mxu0 %v1930
        %2060 = vmatprep.subr.mxu0 %v1933
        %2061 = vmatpush1.msra.mxu0 %v1932
        %2062 = vmatprep.subr.mxu0 %v1935
        %2063 = vmatpush1.msra.mxu0 %v1934
        %2064 = vmatprep.mubr.f32.mxu0 %v1745
        %2065 = vmatmul.mubr.f32.gmra.mrb[0].mxu0 %v1744
        %v2066 = vpop.f32.mrb[0].mxu0
        %v2067 = vadd.f32 %v1680, %v2066
        %v2068 = vpop.f32.mrb[0].mxu0
        %v2069 = vadd.f32 %v1681, %v2068
        %2070 = vmatprep.mubr.f32.mxu0 %v1749
        %2071 = vmatmul.mubr.f32.gmra.mrb[0].mxu0 %v1748
        %v2072 = vpop.f32.mrb[0].mxu0
        %v2073 = vadd.f32 %v1682, %v2072
        %v2074 = vpop.f32.mrb[0].mxu0
        %v2075 = vadd.f32 %v1683, %v2074
        %2076 = vmatprep.mubr.f32.mxu0 %v1753
        %2077 = vmatmul.mubr.f32.gmra.mrb[0].mxu0 %v1752
        %v2078 = vpop.f32.mrb[0].mxu0
        %v2079 = vadd.f32 %v1684, %v2078
        %v2080 = vpop.f32.mrb[0].mxu0
        %v2081 = vadd.f32 %v1685, %v2080
        %2082 = vmatprep.mubr.f32.mxu0 %v1757
        %2083 = vmatmul.mubr.f32.gmra.mrb[0].mxu0 %v1756
        %v2084 = vpop.f32.mrb[0].mxu0
        %v2085 = vadd.f32 %v1686, %v2084
        %v2086 = vpop.f32.mrb[0].mxu0
        %v2087 = vadd.f32 %v1687, %v2086
        %2088 = vmatprep.mubr.f32.mxu0 %v1761
        %2089 = vmatmul.mubr.f32.gmra.mrb[0].mxu0 %v1760
        %v2090 = vpop.f32.mrb[0].mxu0
        %v2091 = vadd.f32 %v1688, %v2090
        %v2092 = vpop.f32.mrb[0].mxu0
        %v2093 = vadd.f32 %v1689, %v2092
        %2094 = vmatprep.mubr.f32.mxu0 %v1765
        %2095 = vmatmul.mubr.f32.gmra.mrb[0].mxu0 %v1764
        %v2096 = vpop.f32.mrb[0].mxu0
        %v2097 = vadd.f32 %v1690, %v2096
        %v2098 = vpop.f32.mrb[0].mxu0
        %v2099 = vadd.f32 %v1691, %v2098
        %2100 = vmatprep.mubr.f32.mxu0 %v1769
        %2101 = vmatmul.mubr.f32.gmra.mrb[0].mxu0 %v1768
        %v2102 = vpop.f32.mrb[0].mxu0
        %v2103 = vadd.f32 %v1692, %v2102
        %v2104 = vpop.f32.mrb[0].mxu0
        %v2105 = vadd.f32 %v1693, %v2104
        %2106 = vmatprep.mubr.f32.mxu0 %v1773
        %2107 = vmatmul.mubr.f32.gmra.mrb[0].mxu0 %v1772
        %v2108 = vpop.f32.mrb[0].mxu0
        %v2109 = vadd.f32 %v1694, %v2108
        %v2110 = vpop.f32.mrb[0].mxu0
        %v2111 = vadd.f32 %v1695, %v2110
        %2112 = vmatprep.mubr.f32.mxu0 %v1777
        %2113 = vmatmul.mubr.f32.gmra.mrb[0].mxu0 %v1776
        %v2114 = vpop.f32.mrb[0].mxu0
        %v2115 = vadd.f32 %v1696, %v2114
        %v2116 = vpop.f32.mrb[0].mxu0
        %v2117 = vadd.f32 %v1697, %v2116
        %2118 = vmatprep.mubr.f32.mxu0 %v1781
        %2119 = vmatmul.mubr.f32.gmra.mrb[0].mxu0 %v1780
        %v2120 = vpop.f32.mrb[0].mxu0
        %v2121 = vadd.f32 %v1698, %v2120
        %v2122 = vpop.f32.mrb[0].mxu0
        %v2123 = vadd.f32 %v1699, %v2122
        %2124 = vmatprep.mubr.f32.mxu0 %v1785
        %2125 = vmatmul.mubr.f32.gmra.mrb[0].mxu0 %v1784
        %v2126 = vpop.f32.mrb[0].mxu0
        %v2127 = vadd.f32 %v1700, %v2126
        %v2128 = vpop.f32.mrb[0].mxu0
        %v2129 = vadd.f32 %v1701, %v2128
        %2130 = vmatprep.mubr.f32.mxu0 %v1789
        %2131 = vmatmul.mubr.f32.gmra.mrb[0].mxu0 %v1788
        %v2132 = vpop.f32.mrb[0].mxu0
        %v2133 = vadd.f32 %v1702, %v2132
        %v2134 = vpop.f32.mrb[0].mxu0
        %v2135 = vadd.f32 %v1703, %v2134
        %2136 = vmatprep.mubr.f32.mxu0 %v1793
        %2137 = vmatmul.mubr.f32.gmra.mrb[0].mxu0 %v1792
        %v2138 = vpop.f32.mrb[0].mxu0
        %v2139 = vadd.f32 %v1704, %v2138
        %v2140 = vpop.f32.mrb[0].mxu0
        %v2141 = vadd.f32 %v1705, %v2140
        %2142 = vmatprep.mubr.f32.mxu0 %v1797
        %2143 = vmatmul.mubr.f32.gmra.mrb[0].mxu0 %v1796
        %v2144 = vpop.f32.mrb[0].mxu0
        %v2145 = vadd.f32 %v1706, %v2144
        %v2146 = vpop.f32.mrb[0].mxu0
        %v2147 = vadd.f32 %v1707, %v2146
        %2148 = vmatprep.mubr.f32.mxu0 %v1801
        %2149 = vmatmul.mubr.f32.gmra.mrb[0].mxu0 %v1800
        %v2150 = vpop.f32.mrb[0].mxu0
        %v2151 = vadd.f32 %v1708, %v2150
        %v2152 = vpop.f32.mrb[0].mxu0
        %v2153 = vadd.f32 %v1709, %v2152
        %2154 = vmatprep.mubr.f32.mxu0 %v1805
        %2155 = vmatmul.mubr.f32.gmra.mrb[0].mxu0 %v1804
        %v2156 = vpop.f32.mrb[0].mxu0
        %v2157 = vadd.f32 %v1710, %v2156
        %v2158 = vpop.f32.mrb[0].mxu0
        %v2159 = vadd.f32 %v1711, %v2158
        %2160 = vmatprep.mubr.f32.mxu0 %v1809
        %2161 = vmatmul.mubr.f32.gmra.mrb[0].mxu0 %v1808
        %v2162 = vpop.f32.mrb[0].mxu0
        %v2163 = vadd.f32 %v1712, %v2162
        %v2164 = vpop.f32.mrb[0].mxu0
        %v2165 = vadd.f32 %v1713, %v2164
        %2166 = vmatprep.mubr.f32.mxu0 %v1813
        %2167 = vmatmul.mubr.f32.gmra.mrb[0].mxu0 %v1812
        %v2168 = vpop.f32.mrb[0].mxu0
        %v2169 = vadd.f32 %v1714, %v2168
        %v2170 = vpop.f32.mrb[0].mxu0
        %v2171 = vadd.f32 %v1715, %v2170
        %2172 = vmatprep.mubr.f32.mxu0 %v1817
        %2173 = vmatmul.mubr.f32.gmra.mrb[0].mxu0 %v1816
        %v2174 = vpop.f32.mrb[0].mxu0
        %v2175 = vadd.f32 %v1716, %v2174
        %v2176 = vpop.f32.mrb[0].mxu0
        %v2177 = vadd.f32 %v1717, %v2176
        %2178 = vmatprep.mubr.f32.mxu0 %v1821
        %2179 = vmatmul.mubr.f32.gmra.mrb[0].mxu0 %v1820
        %v2180 = vpop.f32.mrb[0].mxu0
        %v2181 = vadd.f32 %v1718, %v2180
        %v2182 = vpop.f32.mrb[0].mxu0
        %v2183 = vadd.f32 %v1719, %v2182
        %2184 = vmatprep.mubr.f32.mxu0 %v1825
        %2185 = vmatmul.mubr.f32.gmra.mrb[0].mxu0 %v1824
        %v2186 = vpop.f32.mrb[0].mxu0
        %v2187 = vadd.f32 %v1720, %v2186
        %v2188 = vpop.f32.mrb[0].mxu0
        %v2189 = vadd.f32 %v1721, %v2188
        %2190 = vmatprep.mubr.f32.mxu0 %v1829
        %2191 = vmatmul.mubr.f32.gmra.mrb[0].mxu0 %v1828
        %v2192 = vpop.f32.mrb[0].mxu0
        %v2193 = vadd.f32 %v1722, %v2192
        %v2194 = vpop.f32.mrb[0].mxu0
        %v2195 = vadd.f32 %v1723, %v2194
        %2196 = vmatprep.mubr.f32.mxu0 %v1833
        %2197 = vmatmul.mubr.f32.gmra.mrb[0].mxu0 %v1832
        %v2198 = vpop.f32.mrb[0].mxu0
        %v2199 = vadd.f32 %v1724, %v2198
        %v2200 = vpop.f32.mrb[0].mxu0
        %v2201 = vadd.f32 %v1725, %v2200
        %2202 = vmatprep.mubr.f32.mxu0 %v1837
        %2203 = vmatmul.mubr.f32.gmra.mrb[0].mxu0 %v1836
        %v2204 = vpop.f32.mrb[0].mxu0
        %v2205 = vadd.f32 %v1726, %v2204
        %v2206 = vpop.f32.mrb[0].mxu0
        %v2207 = vadd.f32 %v1727, %v2206
        %2208 = vmatprep.mubr.f32.mxu0 %v1841
        %2209 = vmatmul.mubr.f32.gmra.mrb[0].mxu0 %v1840
        %v2210 = vpop.f32.mrb[0].mxu0
        %v2211 = vadd.f32 %v1728, %v2210
        %v2212 = vpop.f32.mrb[0].mxu0
        %v2213 = vadd.f32 %v1729, %v2212
        %2214 = vmatprep.mubr.f32.mxu0 %v1845
        %2215 = vmatmul.mubr.f32.gmra.mrb[0].mxu0 %v1844
        %v2216 = vpop.f32.mrb[0].mxu0
        %v2217 = vadd.f32 %v1730, %v2216
        %v2218 = vpop.f32.mrb[0].mxu0
        %v2219 = vadd.f32 %v1731, %v2218
        %2220 = vmatprep.mubr.f32.mxu0 %v1849
        %2221 = vmatmul.mubr.f32.gmra.mrb[0].mxu0 %v1848
        %v2222 = vpop.f32.mrb[0].mxu0
        %v2223 = vadd.f32 %v1732, %v2222
        %v2224 = vpop.f32.mrb[0].mxu0
        %v2225 = vadd.f32 %v1733, %v2224
        %2226 = vmatprep.mubr.f32.mxu0 %v1853
        %2227 = vmatmul.mubr.f32.gmra.mrb[0].mxu0 %v1852
        %v2228 = vpop.f32.mrb[0].mxu0
        %v2229 = vadd.f32 %v1734, %v2228
        %v2230 = vpop.f32.mrb[0].mxu0
        %v2231 = vadd.f32 %v1735, %v2230
        %2232 = vmatprep.mubr.f32.mxu0 %v1857
        %2233 = vmatmul.mubr.f32.gmra.mrb[0].mxu0 %v1856
        %v2234 = vpop.f32.mrb[0].mxu0
        %v2235 = vadd.f32 %v1736, %v2234
        %v2236 = vpop.f32.mrb[0].mxu0
        %v2237 = vadd.f32 %v1737, %v2236
        %2238 = vmatprep.mubr.f32.mxu0 %v1861
        %2239 = vmatmul.mubr.f32.gmra.mrb[0].mxu0 %v1860
        %v2240 = vpop.f32.mrb[0].mxu0
        %v2241 = vadd.f32 %v1738, %v2240
        %v2242 = vpop.f32.mrb[0].mxu0
        %v2243 = vadd.f32 %v1739, %v2242
        %2244 = vmatprep.mubr.f32.mxu0 %v1865
        %2245 = vmatmul.mubr.f32.gmra.mrb[0].mxu0 %v1864
        %v2246 = vpop.f32.mrb[0].mxu0
        %v2247 = vadd.f32 %v1740, %v2246
        %v2248 = vpop.f32.mrb[0].mxu0
        %v2249 = vadd.f32 %v1741, %v2248
        %2250 = vmatprep.mubr.f32.mxu0 %v1869
        %2251 = vmatmul.mubr.f32.gmra.mrb[0].mxu0 %v1868
        %v2252 = vpop.f32.mrb[0].mxu0
        %v2253 = vadd.f32 %v1742, %v2252
        %v2254 = vpop.f32.mrb[0].mxu0
        %v2255 = vadd.f32 %v1743, %v2254
        %2256 = vdwg.mxu0
        %2257 = vmatprep.subr.mxu0 %v1937
        %2258 = vmatpush1.msra.mxu0 %v1936
        %2259 = vmatprep.subr.mxu0 %v1939
        %2260 = vmatpush1.msra.mxu0 %v1938
        %2261 = vmatprep.subr.mxu0 %v1941
        %2262 = vmatpush1.msra.mxu0 %v1940
        %2263 = vmatprep.subr.mxu0 %v1943
        %2264 = vmatpush1.msra.mxu0 %v1942
        %2265 = vmatprep.subr.mxu0 %v1945
        %2266 = vmatpush1.msra.mxu0 %v1944
        %2267 = vmatprep.subr.mxu0 %v1947
        %2268 = vmatpush1.msra.mxu0 %v1946
        %2269 = vmatprep.subr.mxu0 %v1949
        %2270 = vmatpush1.msra.mxu0 %v1948
        %2271 = vmatprep.subr.mxu0 %v1951
        %2272 = vmatpush1.msra.mxu0 %v1950
        %2273 = vmatprep.subr.mxu0 %v1953
        %2274 = vmatpush1.msra.mxu0 %v1952
        %2275 = vmatprep.subr.mxu0 %v1955
        %2276 = vmatpush1.msra.mxu0 %v1954
        %2277 = vmatprep.subr.mxu0 %v1957
        %2278 = vmatpush1.msra.mxu0 %v1956
        %2279 = vmatprep.subr.mxu0 %v1959
        %2280 = vmatpush1.msra.mxu0 %v1958
        %2281 = vmatprep.subr.mxu0 %v1961
        %2282 = vmatpush1.msra.mxu0 %v1960
        %2283 = vmatprep.subr.mxu0 %v1963
        %2284 = vmatpush1.msra.mxu0 %v1962
        %2285 = vmatprep.subr.mxu0 %v1965
        %2286 = vmatpush1.msra.mxu0 %v1964
        %2287 = vmatprep.subr.mxu0 %v1967
        %2288 = vmatpush1.msra.mxu0 %v1966
        %2289 = vmatprep.subr.mxu0 %v1969
        %2290 = vmatpush1.msra.mxu0 %v1968
        %2291 = vmatprep.subr.mxu0 %v1971
        %2292 = vmatpush1.msra.mxu0 %v1970
        %2293 = vmatprep.subr.mxu0 %v1973
        %2294 = vmatpush1.msra.mxu0 %v1972
        %2295 = vmatprep.subr.mxu0 %v1975
        %2296 = vmatpush1.msra.mxu0 %v1974
        %2297 = vmatprep.subr.mxu0 %v1977
        %2298 = vmatpush1.msra.mxu0 %v1976
        %2299 = vmatprep.subr.mxu0 %v1979
        %2300 = vmatpush1.msra.mxu0 %v1978
        %2301 = vmatprep.subr.mxu0 %v1981
        %2302 = vmatpush1.msra.mxu0 %v1980
        %2303 = vmatprep.subr.mxu0 %v1983
        %2304 = vmatpush1.msra.mxu0 %v1982
        %2305 = vmatprep.subr.mxu0 %v1985
        %2306 = vmatpush1.msra.mxu0 %v1984
        %2307 = vmatprep.subr.mxu0 %v1987
        %2308 = vmatpush1.msra.mxu0 %v1986
        %2309 = vmatprep.subr.mxu0 %v1989
        %2310 = vmatpush1.msra.mxu0 %v1988
        %2311 = vmatprep.subr.mxu0 %v1991
        %2312 = vmatpush1.msra.mxu0 %v1990
        %2313 = vmatprep.subr.mxu0 %v1993
        %2314 = vmatpush1.msra.mxu0 %v1992
        %2315 = vmatprep.subr.mxu0 %v1995
        %2316 = vmatpush1.msra.mxu0 %v1994
        %2317 = vmatprep.subr.mxu0 %v1997
        %2318 = vmatpush1.msra.mxu0 %v1996
        %2319 = vmatprep.subr.mxu0 %v1999
        %2320 = vmatpush1.msra.mxu0 %v1998
        %2321 = vmatprep.mubr.f32.mxu0 %v1747
        %2322 = vmatmul.mubr.f32.gmra.mrb[0].mxu0 %v1746
        %v2323 = vpop.f32.mrb[0].mxu0
        %v2324 = vadd.f32 %v2067, %v2323
        %v2325 = vpop.f32.mrb[0].mxu0
        %v2326 = vadd.f32 %v2069, %v2325
        %2327 = vmatprep.mubr.f32.mxu0 %v1751
        %2328 = vmatmul.mubr.f32.gmra.mrb[0].mxu0 %v1750
        %v2329 = vpop.f32.mrb[0].mxu0
        %v2330 = vadd.f32 %v2073, %v2329
        %v2331 = vpop.f32.mrb[0].mxu0
        %v2332 = vadd.f32 %v2075, %v2331
        %2333 = vmatprep.mubr.f32.mxu0 %v1755
        %2334 = vmatmul.mubr.f32.gmra.mrb[0].mxu0 %v1754
        %v2335 = vpop.f32.mrb[0].mxu0
        %v2336 = vadd.f32 %v2079, %v2335
        %v2337 = vpop.f32.mrb[0].mxu0
        %v2338 = vadd.f32 %v2081, %v2337
        %2339 = vmatprep.mubr.f32.mxu0 %v1759
        %2340 = vmatmul.mubr.f32.gmra.mrb[0].mxu0 %v1758
        %v2341 = vpop.f32.mrb[0].mxu0
        %v2342 = vadd.f32 %v2085, %v2341
        %v2343 = vpop.f32.mrb[0].mxu0
        %v2344 = vadd.f32 %v2087, %v2343
        %2345 = vmatprep.mubr.f32.mxu0 %v1763
        %2346 = vmatmul.mubr.f32.gmra.mrb[0].mxu0 %v1762
        %v2347 = vpop.f32.mrb[0].mxu0
        %v2348 = vadd.f32 %v2091, %v2347
        %v2349 = vpop.f32.mrb[0].mxu0
        %v2350 = vadd.f32 %v2093, %v2349
        %2351 = vmatprep.mubr.f32.mxu0 %v1767
        %2352 = vmatmul.mubr.f32.gmra.mrb[0].mxu0 %v1766
        %v2353 = vpop.f32.mrb[0].mxu0
        %v2354 = vadd.f32 %v2097, %v2353
        %v2355 = vpop.f32.mrb[0].mxu0
        %v2356 = vadd.f32 %v2099, %v2355
        %2357 = vmatprep.mubr.f32.mxu0 %v1771
        %2358 = vmatmul.mubr.f32.gmra.mrb[0].mxu0 %v1770
        %v2359 = vpop.f32.mrb[0].mxu0
        %v2360 = vadd.f32 %v2103, %v2359
        %v2361 = vpop.f32.mrb[0].mxu0
        %v2362 = vadd.f32 %v2105, %v2361
        %2363 = vmatprep.mubr.f32.mxu0 %v1775
        %2364 = vmatmul.mubr.f32.gmra.mrb[0].mxu0 %v1774
        %v2365 = vpop.f32.mrb[0].mxu0
        %v2366 = vadd.f32 %v2109, %v2365
        %v2367 = vpop.f32.mrb[0].mxu0
        %v2368 = vadd.f32 %v2111, %v2367
        %2369 = vmatprep.mubr.f32.mxu0 %v1779
        %2370 = vmatmul.mubr.f32.gmra.mrb[0].mxu0 %v1778
        %v2371 = vpop.f32.mrb[0].mxu0
        %v2372 = vadd.f32 %v2115, %v2371
        %v2373 = vpop.f32.mrb[0].mxu0
        %v2374 = vadd.f32 %v2117, %v2373
        %2375 = vmatprep.mubr.f32.mxu0 %v1783
        %2376 = vmatmul.mubr.f32.gmra.mrb[0].mxu0 %v1782
        %v2377 = vpop.f32.mrb[0].mxu0
        %v2378 = vadd.f32 %v2121, %v2377
        %v2379 = vpop.f32.mrb[0].mxu0
        %v2380 = vadd.f32 %v2123, %v2379
        %2381 = vmatprep.mubr.f32.mxu0 %v1787
        %2382 = vmatmul.mubr.f32.gmra.mrb[0].mxu0 %v1786
        %v2383 = vpop.f32.mrb[0].mxu0
        %v2384 = vadd.f32 %v2127, %v2383
        %v2385 = vpop.f32.mrb[0].mxu0
        %v2386 = vadd.f32 %v2129, %v2385
        %2387 = vmatprep.mubr.f32.mxu0 %v1791
        %2388 = vmatmul.mubr.f32.gmra.mrb[0].mxu0 %v1790
        %v2389 = vpop.f32.mrb[0].mxu0
        %v2390 = vadd.f32 %v2133, %v2389
        %v2391 = vpop.f32.mrb[0].mxu0
        %v2392 = vadd.f32 %v2135, %v2391
        %2393 = vmatprep.mubr.f32.mxu0 %v1795
        %2394 = vmatmul.mubr.f32.gmra.mrb[0].mxu0 %v1794
        %v2395 = vpop.f32.mrb[0].mxu0
        %v2396 = vadd.f32 %v2139, %v2395
        %v2397 = vpop.f32.mrb[0].mxu0
        %v2398 = vadd.f32 %v2141, %v2397
        %2399 = vmatprep.mubr.f32.mxu0 %v1799
        %2400 = vmatmul.mubr.f32.gmra.mrb[0].mxu0 %v1798
        %v2401 = vpop.f32.mrb[0].mxu0
        %v2402 = vadd.f32 %v2145, %v2401
        %v2403 = vpop.f32.mrb[0].mxu0
        %v2404 = vadd.f32 %v2147, %v2403
        %2405 = vmatprep.mubr.f32.mxu0 %v1803
        %2406 = vmatmul.mubr.f32.gmra.mrb[0].mxu0 %v1802
        %v2407 = vpop.f32.mrb[0].mxu0
        %v2408 = vadd.f32 %v2151, %v2407
        %v2409 = vpop.f32.mrb[0].mxu0
        %v2410 = vadd.f32 %v2153, %v2409
        %2411 = vmatprep.mubr.f32.mxu0 %v1807
        %2412 = vmatmul.mubr.f32.gmra.mrb[0].mxu0 %v1806
        %v2413 = vpop.f32.mrb[0].mxu0
        %v2414 = vadd.f32 %v2157, %v2413
        %v2415 = vpop.f32.mrb[0].mxu0
        %v2416 = vadd.f32 %v2159, %v2415
        %2417 = vmatprep.mubr.f32.mxu0 %v1811
        %2418 = vmatmul.mubr.f32.gmra.mrb[0].mxu0 %v1810
        %v2419 = vpop.f32.mrb[0].mxu0
        %v2420 = vadd.f32 %v2163, %v2419
        %v2421 = vpop.f32.mrb[0].mxu0
        %v2422 = vadd.f32 %v2165, %v2421
        %2423 = vmatprep.mubr.f32.mxu0 %v1815
        %2424 = vmatmul.mubr.f32.gmra.mrb[0].mxu0 %v1814
        %v2425 = vpop.f32.mrb[0].mxu0
        %v2426 = vadd.f32 %v2169, %v2425
        %v2427 = vpop.f32.mrb[0].mxu0
        %v2428 = vadd.f32 %v2171, %v2427
        %2429 = vmatprep.mubr.f32.mxu0 %v1819
        %2430 = vmatmul.mubr.f32.gmra.mrb[0].mxu0 %v1818
        %v2431 = vpop.f32.mrb[0].mxu0
        %v2432 = vadd.f32 %v2175, %v2431
        %v2433 = vpop.f32.mrb[0].mxu0
        %v2434 = vadd.f32 %v2177, %v2433
        %2435 = vmatprep.mubr.f32.mxu0 %v1823
        %2436 = vmatmul.mubr.f32.gmra.mrb[0].mxu0 %v1822
        %v2437 = vpop.f32.mrb[0].mxu0
        %v2438 = vadd.f32 %v2181, %v2437
        %v2439 = vpop.f32.mrb[0].mxu0
        %v2440 = vadd.f32 %v2183, %v2439
        %2441 = vmatprep.mubr.f32.mxu0 %v1827
        %2442 = vmatmul.mubr.f32.gmra.mrb[0].mxu0 %v1826
        %v2443 = vpop.f32.mrb[0].mxu0
        %v2444 = vadd.f32 %v2187, %v2443
        %v2445 = vpop.f32.mrb[0].mxu0
        %v2446 = vadd.f32 %v2189, %v2445
        %2447 = vmatprep.mubr.f32.mxu0 %v1831
        %2448 = vmatmul.mubr.f32.gmra.mrb[0].mxu0 %v1830
        %v2449 = vpop.f32.mrb[0].mxu0
        %v2450 = vadd.f32 %v2193, %v2449
        %v2451 = vpop.f32.mrb[0].mxu0
        %v2452 = vadd.f32 %v2195, %v2451
        %2453 = vmatprep.mubr.f32.mxu0 %v1835
        %2454 = vmatmul.mubr.f32.gmra.mrb[0].mxu0 %v1834
        %v2455 = vpop.f32.mrb[0].mxu0
        %v2456 = vadd.f32 %v2199, %v2455
        %v2457 = vpop.f32.mrb[0].mxu0
        %v2458 = vadd.f32 %v2201, %v2457
        %2459 = vmatprep.mubr.f32.mxu0 %v1839
        %2460 = vmatmul.mubr.f32.gmra.mrb[0].mxu0 %v1838
        %v2461 = vpop.f32.mrb[0].mxu0
        %v2462 = vadd.f32 %v2205, %v2461
        %v2463 = vpop.f32.mrb[0].mxu0
        %v2464 = vadd.f32 %v2207, %v2463
        %2465 = vmatprep.mubr.f32.mxu0 %v1843
        %2466 = vmatmul.mubr.f32.gmra.mrb[0].mxu0 %v1842
        %v2467 = vpop.f32.mrb[0].mxu0
        %v2468 = vadd.f32 %v2211, %v2467
        %v2469 = vpop.f32.mrb[0].mxu0
        %v2470 = vadd.f32 %v2213, %v2469
        %2471 = vmatprep.mubr.f32.mxu0 %v1847
        %2472 = vmatmul.mubr.f32.gmra.mrb[0].mxu0 %v1846
        %v2473 = vpop.f32.mrb[0].mxu0
        %v2474 = vadd.f32 %v2217, %v2473
        %v2475 = vpop.f32.mrb[0].mxu0
        %v2476 = vadd.f32 %v2219, %v2475
        %2477 = vmatprep.mubr.f32.mxu0 %v1851
        %2478 = vmatmul.mubr.f32.gmra.mrb[0].mxu0 %v1850
        %v2479 = vpop.f32.mrb[0].mxu0
        %v2480 = vadd.f32 %v2223, %v2479
        %v2481 = vpop.f32.mrb[0].mxu0
        %v2482 = vadd.f32 %v2225, %v2481
        %2483 = vmatprep.mubr.f32.mxu0 %v1855
        %2484 = vmatmul.mubr.f32.gmra.mrb[0].mxu0 %v1854
        %v2485 = vpop.f32.mrb[0].mxu0
        %v2486 = vadd.f32 %v2229, %v2485
        %v2487 = vpop.f32.mrb[0].mxu0
        %v2488 = vadd.f32 %v2231, %v2487
        %2489 = vmatprep.mubr.f32.mxu0 %v1859
        %2490 = vmatmul.mubr.f32.gmra.mrb[0].mxu0 %v1858
        %v2491 = vpop.f32.mrb[0].mxu0
        %v2492 = vadd.f32 %v2235, %v2491
        %v2493 = vpop.f32.mrb[0].mxu0
        %v2494 = vadd.f32 %v2237, %v2493
        %2495 = vmatprep.mubr.f32.mxu0 %v1863
        %2496 = vmatmul.mubr.f32.gmra.mrb[0].mxu0 %v1862
        %v2497 = vpop.f32.mrb[0].mxu0
        %v2498 = vadd.f32 %v2241, %v2497
        %v2499 = vpop.f32.mrb[0].mxu0
        %v2500 = vadd.f32 %v2243, %v2499
        %2501 = vmatprep.mubr.f32.mxu0 %v1867
        %2502 = vmatmul.mubr.f32.gmra.mrb[0].mxu0 %v1866
        %v2503 = vpop.f32.mrb[0].mxu0
        %v2504 = vadd.f32 %v2247, %v2503
        %v2505 = vpop.f32.mrb[0].mxu0
        %v2506 = vadd.f32 %v2249, %v2505
        %2507 = vmatprep.mubr.f32.mxu0 %v1871
        %2508 = vmatmul.mubr.f32.gmra.mrb[0].mxu0 %v1870
        %v2509 = vpop.f32.mrb[0].mxu0
        %v2510 = vadd.f32 %v2253, %v2509
        %v2511 = vpop.f32.mrb[0].mxu0
        %v2512 = vadd.f32 %v2255, %v2511
        %2513 = vdwg.mxu0
        %2514 = vst [vmem:[%s255] sm:$0xff] %v2324
        %2515 = vst [vmem:[%s255 + $0x8] sm:$0xff] %v2326
        %2516 = vst [vmem:[%s255 + $0x10] sm:$0xff] %v2330
        %2517 = vst [vmem:[%s255 + $0x18] sm:$0xff] %v2332
        %2518 = vst [vmem:[%s255 + $0x20] sm:$0xff] %v2336
        %2519 = vst [vmem:[%s255 + $0x28] sm:$0xff] %v2338
        %2520 = vst [vmem:[%s255 + $0x30] sm:$0xff] %v2342
        %2521 = vst [vmem:[%s255 + $0x38] sm:$0xff] %v2344
        %2522 = vst [vmem:[%s255 + $0x40] sm:$0xff] %v2348
        %2523 = vst [vmem:[%s255 + $0x48] sm:$0xff] %v2350
        %2524 = vst [vmem:[%s255 + $0x50] sm:$0xff] %v2354
        %2525 = vst [vmem:[%s255 + $0x58] sm:$0xff] %v2356
        %2526 = vst [vmem:[%s255 + $0x60] sm:$0xff] %v2360
        %2527 = vst [vmem:[%s255 + $0x68] sm:$0xff] %v2362
        %2528 = vst [vmem:[%s255 + $0x70] sm:$0xff] %v2366
        %2529 = vst [vmem:[%s255 + $0x78] sm:$0xff] %v2368
        %2530 = vst [vmem:[%s255 + $0x80] sm:$0xff] %v2372
        %2531 = vst [vmem:[%s255 + $0x88] sm:$0xff] %v2374
        %2532 = vst [vmem:[%s255 + $0x90] sm:$0xff] %v2378
        %2533 = vst [vmem:[%s255 + $0x98] sm:$0xff] %v2380
        %2534 = vst [vmem:[%s255 + $0xa0] sm:$0xff] %v2384
        %2535 = vst [vmem:[%s255 + $0xa8] sm:$0xff] %v2386
        %2536 = vst [vmem:[%s255 + $0xb0] sm:$0xff] %v2390
        %2537 = vst [vmem:[%s255 + $0xb8] sm:$0xff] %v2392
        %2538 = vst [vmem:[%s255 + $0xc0] sm:$0xff] %v2396
        %2539 = vst [vmem:[%s255 + $0xc8] sm:$0xff] %v2398
        %2540 = vst [vmem:[%s255 + $0xd0] sm:$0xff] %v2402
        %2541 = vst [vmem:[%s255 + $0xd8] sm:$0xff] %v2404
        %2542 = vst [vmem:[%s255 + $0xe0] sm:$0xff] %v2408
        %2543 = vst [vmem:[%s255 + $0xe8] sm:$0xff] %v2410
        %2544 = vst [vmem:[%s255 + $0xf0] sm:$0xff] %v2414
        %2545 = vst [vmem:[%s255 + $0xf8] sm:$0xff] %v2416
        %2546 = vst [vmem:[%s255 + $0x100] sm:$0xff] %v2420
        %2547 = vst [vmem:[%s255 + $0x108] sm:$0xff] %v2422
        %2548 = vst [vmem:[%s255 + $0x110] sm:$0xff] %v2426
        %2549 = vst [vmem:[%s255 + $0x118] sm:$0xff] %v2428
        %2550 = vst [vmem:[%s255 + $0x120] sm:$0xff] %v2432
        %2551 = vst [vmem:[%s255 + $0x128] sm:$0xff] %v2434
        %2552 = vst [vmem:[%s255 + $0x130] sm:$0xff] %v2438
        %2553 = vst [vmem:[%s255 + $0x138] sm:$0xff] %v2440
        %2554 = vst [vmem:[%s255 + $0x140] sm:$0xff] %v2444
        %2555 = vst [vmem:[%s255 + $0x148] sm:$0xff] %v2446
        %2556 = vst [vmem:[%s255 + $0x150] sm:$0xff] %v2450
        %2557 = vst [vmem:[%s255 + $0x158] sm:$0xff] %v2452
        %2558 = vst [vmem:[%s255 + $0x160] sm:$0xff] %v2456
        %2559 = vst [vmem:[%s255 + $0x168] sm:$0xff] %v2458
        %2560 = vst [vmem:[%s255 + $0x170] sm:$0xff] %v2462
        %2561 = vst [vmem:[%s255 + $0x178] sm:$0xff] %v2464
        %2562 = vst [vmem:[%s255 + $0x180] sm:$0xff] %v2468
        %2563 = vst [vmem:[%s255 + $0x188] sm:$0xff] %v2470
        %2564 = vst [vmem:[%s255 + $0x190] sm:$0xff] %v2474
        %2565 = vst [vmem:[%s255 + $0x198] sm:$0xff] %v2476
        %2566 = vst [vmem:[%s255 + $0x1a0] sm:$0xff] %v2480
        %2567 = vst [vmem:[%s255 + $0x1a8] sm:$0xff] %v2482
        %2568 = vst [vmem:[%s255 + $0x1b0] sm:$0xff] %v2486
        %2569 = vst [vmem:[%s255 + $0x1b8] sm:$0xff] %v2488
        %2570 = vst [vmem:[%s255 + $0x1c0] sm:$0xff] %v2492
        %2571 = vst [vmem:[%s255 + $0x1c8] sm:$0xff] %v2494
        %2572 = vst [vmem:[%s255 + $0x1d0] sm:$0xff] %v2498
        %2573 = vst [vmem:[%s255 + $0x1d8] sm:$0xff] %v2500
        %2574 = vst [vmem:[%s255 + $0x1e0] sm:$0xff] %v2504
        %2575 = vst [vmem:[%s255 + $0x1e8] sm:$0xff] %v2506
        %2576 = vst [vmem:[%s255 + $0x1f0] sm:$0xff] %v2510
        %2577 = vst [vmem:[%s255 + $0x1f8] sm:$0xff] %v2512
        %s2578 = sand.u32 %s116, 1
        %s2579 = scalar_lea.sflag [#allocation5], %s2578
        %s2580 = sand.u32 %s116, 1
        %s2581 = smul.addr %s2580, 512
        %s2582 = scalar_lea.vmem [#allocation9], %s2581
        // Predicated region
        $region49: #{tpu_custom_call.1} parent=31 // pred_check
          %p2583 = pneg %p126
        $region50: #{tpu_custom_call.1} parent=31 // pred_check_branch
          %2585 = sbr.rel (%p2583) target = $region52
        $region51: #{tpu_custom_call.1} parent=31 // pred_region
          %s2586 = smul.u32 32, %s26
          %s2587 = smul.u32 2, %s25
          %s2589 = ssub.s32 8192, 8192
          %2590 = vsyncadd %s2579, %s2589
          %s2591 = smul.addr %s2586, 4
          %s2592 = sadd.s32 %s2587, %s2591
          %s2593 = smul.addr %s2592, 128
          %s2594 = scalar_lea.hbm %s3, %s2593
          %s2595 = sshll.u32 %s2582, 4
          %s2596 = int_to_ptr.vmem [resolvable:$true] %s2595
          %2601 = dma.vmem_to_hbm [thread:$0]  %s2596, 8192, %s2594, %s2579, 256, 512, 16
        $region52: #{tpu_custom_call.1} parent=31 // pred_fallthru
          _
      $region32: #{tpu_custom_call.1} parent=5 // pred_fallthru
        _
      %p2602 = scmp.le.s32.totalorder 2, %s16
      // Predicated region
      $region53: #{tpu_custom_call.1} parent=5 // pred_check
        %p2603 = pneg %p2602
      $region54: #{tpu_custom_call.1} parent=5 // pred_check_branch
        %2605 = sbr.rel (%p2603) target = $region56
      $region55: #{tpu_custom_call.1} parent=5 // pred_region
        %s2606 = ssub.s32 %s16, 2
        // Predicated region
        $region57: #{tpu_custom_call.1} parent=55 // pred_check
          %p2607 = pneg %p132
        $region58: #{tpu_custom_call.1} parent=55 // pred_check_branch
          %2609 = sbr.rel (%p2607) target = $region60
        $region59: #{tpu_custom_call.1} parent=55 // pred_region
          %s2610 = sand.u32 %s117, 1
          %s2611 = scalar_lea.sflag [#allocation5], %s2610
          %s2612 = sand.u32 %s117, 1
          %s2613 = smul.addr %s2612, 512
          %s2614 = scalar_lea.vmem [#allocation9], %s2613
          %2615 = dma.done %s2611, 8192
        $region60: #{tpu_custom_call.1} parent=55 // pred_fallthru
          _
      $region56: #{tpu_custom_call.1} parent=5 // pred_fallthru
        _
    $region6: #{tpu_custom_call.1} parent=1 // loop_footer
      %s20 = sadd.s32 1, %s16
    $region7: #{tpu_custom_call.1} parent=1 // loop_footer_branch
      %15 = sbr.rel target = $region3
    $region8: #{tpu_custom_call.1} parent=1 // loop_exit
      _
    %2616 = vsyncpa [#allocation4], 1
    %s2617 = scalar_lea.sflag [#allocation4], 1
    %2618 = vsyncpa %s2617, 1
    %2619 = vsyncpa [#allocation7], 1
    %s2620 = scalar_lea.sflag [#allocation7], 1
    %2621 = vsyncpa %s2620, 1
    %2622 = vsyncpa [#allocation5], 1
    %s2623 = scalar_lea.sflag [#allocation5], 1
    %2624 = vsyncpa %s2623, 1

// kernel: tpu_custom_call.1
$region0: #{tpu_custom_call.1}
  #allocation0 [shape = 'u32[]', space=smem, size = 0x4, offset = 0x4, fixed_abs, tag = 'smem constant byte address 0x4 - core index']
  #allocation1 [shape = 'u32[144,128]{1,0:T(1,128)}', space=vmem, size = 0x12000, scoped, tag = 'internal scratch']
  #allocation2 [shape = 'f32[512,256]{1,0:T(8,128)}', space=vmem, size = 0x80000, scoped, tag = 'scratch operand']
  %s0 = inlined_call_operand.hbm [shape: f32[512,512], index: 0, kind: input, shape index: {}]
  %s1 = inlined_call_operand.hbm [shape: f32[512,512], index: 1, kind: input, shape index: {}]
  %s2 = inlined_call_operand.hbm [shape: f32[512,512], index: 2, kind: input, shape index: {}]
  %s3 = inlined_call_operand.hbm [shape: f32[512,512], index: 3, kind: output, shape index: {}]
  %s4 = sld [smem:[#allocation0]]
  $region61: #{tpu_custom_call.1} parent=0
    _
  %s6 = ssub.s32 1, %s4
  %s7 = scalar_select 0, %s6, %s4
  $region1: #{tpu_custom_call.1} parent=0
    #allocation3 [shape = 'u8[1048576]{0}', space=vmem, size = 0x100000, scoped, tag = 'input window, operand 0, single buffered']
    #allocation4 [shape = 's32[2]{0}', space=sflag, size = 0x8, scoped, tag = 'scoped memory for tpu_custom_call.1']
    #allocation5 [shape = 's32[2]{0}', space=sflag, size = 0x8, scoped, tag = 'scoped memory for tpu_custom_call.1']
    #allocation6 [shape = 'u8[1048576]{0}', space=vmem, size = 0x100000, scoped, tag = 'input window, operand 1']
    #allocation7 [shape = 's32[2]{0}', space=sflag, size = 0x8, scoped, tag = 'scoped memory for tpu_custom_call.1']
    #allocation8 [shape = 'u8[1048576]{0}', space=vmem, size = 0x100000, scoped, tag = 'input window, operand 2']
    #allocation9 [shape = 'u8[524288]{0}', space=vmem, size = 0x80000, scoped, tag = 'output window, operand 0']
    %8 = vsyncpa [#allocation4], 0
    %9 = vsyncpa [#allocation7], 0
    %s10 = scalar_lea.sflag [#allocation7], 1
    %11 = vsyncpa %s10, 0
    %12 = vsyncpa [#allocation5], 0
    %s13 = scalar_lea.sflag [#allocation5], 1
    %14 = vsyncpa %s13, 0
    loop: start=0, step=1, limit=6
    $region2: #{tpu_custom_call.1} parent=1 // loop_pre_header
      _
    $region3: #{tpu_custom_call.1} parent=1 // loop_header
      %s16 = sphi 0, %s20
      %p17 = scmp.ge.s32.totalorder %s16, 6
      %s23 = sphi 0, %s35
      %s24 = sphi 0, %s31
      %s25 = sphi 0, %s23
      %s26 = sphi 0, %s24
      %s27 = sphi 0, %s25
      %s28 = sphi 0, %s26
      %s36 = sphi 0, %s36
      %s38 = sphi 0, %s36
      %s39 = sphi 0, %s38
      %s53 = sphi 0, %s39
      %s59 = sphi 0, %s61
      %s62 = sphi 0, %s59
      %s63 = sphi 0, %s62
      %s79 = sphi 0, %s63
      %s85 = sphi 0, %s87
      %s88 = sphi 0, %s85
      %s89 = sphi 0, %s88
      %s105 = sphi 0, %s89
      %s113 = sphi 0, %s115
      %s116 = sphi 0, %s113
      %s117 = sphi 0, %s116
      %s133 = sphi 0, %s117
    $region4: #{tpu_custom_call.1} parent=1 // loop_header_branch
      %19 = sbr.rel (%p17) target = $region8
    $region5: #{tpu_custom_call.1} parent=1 // loop_body
      %s21 = ssub.s32 %s16, 1
      %s22 = ssub.s32 %s16, 2
      %s29 = sadd.s32 1, %s24
      %p30 = scmp.ge.s32.totalorder %s29, 2
      %s31 = scalar_select %p30, 0, %s29
      %s32 = sadd.s32 1, %s23
      %s33 = scalar_select %p30, %s32, %s23
      %p34 = scmp.ge.s32.totalorder %s33, 2
      %s35 = scalar_select %p34, 0, %s33
      %s37 = sadd.s32 %s36, 1
      %p40 = scmp.eq.s32.totalorder %s16, 3
      %p41 = scmp.ne.s32.totalorder %s36, %s38
      %p42 = scmp.eq.s32.totalorder %s16, 0
      %p43 = por %p41, %p42
      %p44 = scmp.ne.s32.totalorder %s36, %s38
      %p45 = scmp.eq.s32.totalorder %s21, 3
      %p46 = por %p44, %p45
      %p47 = scmp.ne.s32.totalorder %s38, %s39
      %p48 = scmp.eq.s32.totalorder %s21, 0
      %p49 = por %p47, %p48
      %p50 = scmp.ne.s32.totalorder %s38, %s39
      %p51 = scmp.eq.s32.totalorder %s22, 3
      %p52 = por %p50, %p51
      %p54 = scmp.ne.s32.totalorder %s39, %s53
      %p55 = scmp.eq.s32.totalorder %s22, 0
      %p56 = por %p54, %p55
      %s57 = ssub.s32 %s23, %s35
      %p58 = scmp.eq.s32.totalorder %s57, 0
      %s60 = sadd.s32 %s59, 1
      %s61 = scalar_select %p58, %s59, %s60
      %p64 = pneg %p58
      %p65 = scmp.eq.s32.totalorder %s16, 3
      %p66 = por %p64, %p65
      %p67 = scmp.ne.s32.totalorder %s59, %s62
      %p68 = scmp.eq.s32.totalorder %s16, 0
      %p69 = por %p67, %p68
      %p70 = scmp.ne.s32.totalorder %s59, %s62
      %p71 = scmp.eq.s32.totalorder %s21, 3
      %p72 = por %p70, %p71
      %p73 = scmp.ne.s32.totalorder %s62, %s63
      %p74 = scmp.eq.s32.totalorder %s21, 0
      %p75 = por %p73, %p74
      %p76 = scmp.ne.s32.totalorder %s62, %s63
      %p77 = scmp.eq.s32.totalorder %s22, 3
      %p78 = por %p76, %p77
      %p80 = scmp.ne.s32.totalorder %s63, %s79
      %p81 = scmp.eq.s32.totalorder %s22, 0
      %p82 = por %p80, %p81
      %s83 = ssub.s32 %s24, %s31
      %p84 = scmp.eq.s32.totalorder %s83, 0
      %s86 = sadd.s32 %s85, 1
      %s87 = scalar_select %p84, %s85, %s86
      %p90 = pneg %p84
      %p91 = scmp.eq.s32.totalorder %s16, 3
      %p92 = por %p90, %p91
      %p93 = scmp.ne.s32.totalorder %s85, %s88
      %p94 = scmp.eq.s32.totalorder %s16, 0
      %p95 = por %p93, %p94
      %p96 = scmp.ne.s32.totalorder %s85, %s88
      %p97 = scmp.eq.s32.totalorder %s21, 3
      %p98 = por %p96, %p97
      %p99 = scmp.ne.s32.totalorder %s88, %s89
      %p100 = scmp.eq.s32.totalorder %s21, 0
      %p101 = por %p99, %p100
      %p102 = scmp.ne.s32.totalorder %s88, %s89
      %p103 = scmp.eq.s32.totalorder %s22, 3
      %p104 = por %p102, %p103
      %p106 = scmp.ne.s32.totalorder %s89, %s105
      %p107 = scmp.eq.s32.totalorder %s22, 0
      %p108 = por %p106, %p107
      %s109 = ssub.s32 %s24, %s31
      %s110 = ssub.s32 %s23, %s35
      %s111 = sor.u32 %s109, %s110
      %p112 = scmp.eq.s32.totalorder %s111, 0
      %s114 = sadd.s32 %s113, 1
      %s115 = scalar_select %p112, %s113, %s114
      %p118 = pneg %p112
      %p119 = scmp.eq.s32.totalorder %s16, 3
      %p120 = por %p118, %p119
      %p121 = scmp.ne.s32.totalorder %s113, %s116
      %p122 = scmp.eq.s32.totalorder %s16, 0
      %p123 = por %p121, %p122
      %p124 = scmp.ne.s32.totalorder %s113, %s116
      %p125 = scmp.eq.s32.totalorder %s21, 3
      %p126 = por %p124, %p125
      %p127 = scmp.ne.s32.totalorder %s116, %s117
      %p128 = scmp.eq.s32.totalorder %s21, 0
      %p129 = por %p127, %p128
      %p130 = scmp.ne.s32.totalorder %s116, %s117
      %p131 = scmp.eq.s32.totalorder %s22, 3
      %p132 = por %p130, %p131
      %p134 = scmp.ne.s32.totalorder %s117, %s133
      %p135 = scmp.eq.s32.totalorder %s22, 0
      %p136 = por %p134, %p135
      %p137 = scmp.le.s32.totalorder 1, %s16
      %p138 = scmp.lt.s32.totalorder %s16, 5
      %p139 = pnand %p137, %p138
      %p140 = pneg %p139
      // Predicated region
      $region9: #{tpu_custom_call.1} parent=5 // pred_check
        _
      $region10: #{tpu_custom_call.1} parent=5 // pred_check_branch
        %142 = sbr.rel (%p139) target = $region12
      $region11: #{tpu_custom_call.1} parent=5 // pred_region
        %s143 = ssub.s32 %s16, 1
        // Predicated region
        $region13: #{tpu_custom_call.1} parent=11 // pred_check
          %p144 = pneg %p49
        $region14: #{tpu_custom_call.1} parent=11 // pred_check_branch
          %146 = sbr.rel (%p144) target = $region16
        $region15: #{tpu_custom_call.1} parent=11 // pred_region
          %s148 = ssub.s32 32768, 32768
          %149 = vsyncadd [#allocation4], %s148
          %s150 = sshll.u32 [#allocation3], 4
          %s151 = int_to_ptr.vmem [resolvable:$true] %s150
          %156 = dma.hbm_to_vmem [thread:$0]  %s0, 32768, %s151, [#allocation4], 512, 512, 32
        $region16: #{tpu_custom_call.1} parent=11 // pred_fallthru
          _
      $region12: #{tpu_custom_call.1} parent=5 // pred_fallthru
        _
      %p157 = scmp.lt.s32.totalorder %s16, 4
      // Predicated region
      $region17: #{tpu_custom_call.1} parent=5 // pred_check
        %p158 = pneg %p157
      $region18: #{tpu_custom_call.1} parent=5 // pred_check_branch
        %160 = sbr.rel (%p158) target = $region20
      $region19: #{tpu_custom_call.1} parent=5 // pred_region
        // Predicated region
        $region21: #{tpu_custom_call.1} parent=19 // pred_check
          %p161 = pneg %p69
        $region22: #{tpu_custom_call.1} parent=19 // pred_check_branch
          %163 = sbr.rel (%p161) target = $region24
        $region23: #{tpu_custom_call.1} parent=19 // pred_region
          %s164 = sand.u32 %s16, 1
          %s165 = scalar_lea.sflag [#allocation7], %s164
          %s166 = sand.u32 %s59, 1
          %s167 = smul.addr %s166, 1024
          %s168 = scalar_lea.vmem [#allocation6], %s167
          %s169 = smul.u32 2, %s23
          %s171 = ssub.s32 16384, 16384
          %172 = vsyncadd %s165, %s171
          %s173 = smul.addr %s169, 128
          %s174 = scalar_lea.hbm %s1, %s173
          %s175 = sshll.u32 %s168, 4
          %s176 = int_to_ptr.vmem [resolvable:$true] %s175
          %181 = dma.hbm_to_vmem [thread:$0]  %s174, 16384, %s176, %s165, 512, 256, 16
        $region24: #{tpu_custom_call.1} parent=19 // pred_fallthru
          _
        // Predicated region
        $region25: #{tpu_custom_call.1} parent=19 // pred_check
          %p182 = pneg %p95
        $region26: #{tpu_custom_call.1} parent=19 // pred_check_branch
          %184 = sbr.rel (%p182) target = $region28
        $region27: #{tpu_custom_call.1} parent=19 // pred_region
          %s185 = sand.u32 %s16, 1
          %s186 = scalar_lea.sflag [#allocation7], %s185
          %s187 = sand.u32 %s85, 1
          %s188 = smul.addr %s187, 1024
          %s189 = scalar_lea.vmem [#allocation8], %s188
          %s190 = smul.u32 32, %s24
          %s192 = ssub.s32 16384, 16384
          %193 = vsyncadd %s186, %s192
          %s194 = smul.addr %s190, 4
          %s195 = smul.addr %s194, 128
          %s196 = scalar_lea.hbm %s2, %s195
          %s197 = sshll.u32 %s189, 4
          %s198 = int_to_ptr.vmem [resolvable:$true] %s197
          %203 = dma.hbm_to_vmem [thread:$0]  %s196, 16384, %s198, %s186, 512, 512, 32
        $region28: #{tpu_custom_call.1} parent=19 // pred_fallthru
          _
      $region20: #{tpu_custom_call.1} parent=5 // pred_fallthru
        _
      %p204 = scmp.le.s32.totalorder 1, %s16
      %p205 = scmp.lt.s32.totalorder %s16, 5
      %p206 = pnand %p204, %p205
      %p207 = pneg %p206
      // Predicated region
      $region29: #{tpu_custom_call.1} parent=5 // pred_check
        _
      $region30: #{tpu_custom_call.1} parent=5 // pred_check_branch
        %209 = sbr.rel (%p206) target = $region32
      $region31: #{tpu_custom_call.1} parent=5 // pred_region
        %s210 = ssub.s32 %s16, 1
        // Predicated region
        $region33: #{tpu_custom_call.1} parent=31 // pred_check
          %p211 = pneg %p49
        $region34: #{tpu_custom_call.1} parent=31 // pred_check_branch
          %213 = sbr.rel (%p211) target = $region36
        $region35: #{tpu_custom_call.1} parent=31 // pred_region
          %214 = dma.done [#allocation4], 32768
        $region36: #{tpu_custom_call.1} parent=31 // pred_fallthru
          _
        %s215 = sand.u32 %s21, 1
        %s216 = scalar_lea.sflag [#allocation7], %s215
        %s217 = sand.u32 %s62, 1
        %s218 = smul.addr %s217, 1024
        %s219 = scalar_lea.vmem [#allocation6], %s218
        // Predicated region
        $region37: #{tpu_custom_call.1} parent=31 // pred_check
          %p220 = pneg %p75
        $region38: #{tpu_custom_call.1} parent=31 // pred_check_branch
          %222 = sbr.rel (%p220) target = $region40
        $region39: #{tpu_custom_call.1} parent=31 // pred_region
          %223 = dma.done %s216, 16384
        $region40: #{tpu_custom_call.1} parent=31 // pred_fallthru
          _
        %s224 = sand.u32 %s21, 1
        %s225 = scalar_lea.sflag [#allocation7], %s224
        %s226 = sand.u32 %s88, 1
        %s227 = smul.addr %s226, 1024
        %s228 = scalar_lea.vmem [#allocation8], %s227
        // Predicated region
        $region41: #{tpu_custom_call.1} parent=31 // pred_check
          %p229 = pneg %p101
        $region42: #{tpu_custom_call.1} parent=31 // pred_check_branch
          %231 = sbr.rel (%p229) target = $region44
        $region43: #{tpu_custom_call.1} parent=31 // pred_region
          %232 = dma.done %s225, 16384
        $region44: #{tpu_custom_call.1} parent=31 // pred_fallthru
          _
        %p233 = pneg %p49
        %p234 = pneg %p46
        %s235 = sand.u32 %s21, 1
        %s236 = scalar_lea.sflag [#allocation7], %s235
        %s237 = sand.u32 %s62, 1
        %s238 = smul.addr %s237, 1024
        %s239 = scalar_lea.vmem [#allocation6], %s238
        %p240 = pneg %p75
        %p241 = pneg %p72
        %s242 = sand.u32 %s21, 1
        %s243 = scalar_lea.sflag [#allocation7], %s242
        %s244 = sand.u32 %s88, 1
        %s245 = smul.addr %s244, 1024
        %s246 = scalar_lea.vmem [#allocation8], %s245
        %p247 = pneg %p101
        %p248 = pneg %p98
        %p249 = pneg %p129
        %p250 = pneg %p126
        %s251 = sand.u32 %s116, 1
        %s252 = scalar_lea.sflag [#allocation5], %s251
        %s253 = sand.u32 %s116, 1
        %s254 = smul.addr %s253, 512
        %s255 = scalar_lea.vmem [#allocation9], %s254
        %s256 = smul.u32 2, %s25
        %s257 = smul.u32 32, %s26
        %s258 = smul.u32 32, %s26
        %s259 = smul.u32 2, %s25
        %p260 = scmp.eq.s32.totalorder %s26, 0
        // Predicated region
        $region45: #{tpu_custom_call.1} parent=31 // pred_check
          %p261 = pneg %p260
        $region46: #{tpu_custom_call.1} parent=31 // pred_check_branch
          %263 = sbr.rel (%p261) target = $region48
        $region47: #{tpu_custom_call.1} parent=31 // pred_region
          %v264 = vld [vmem:[#allocation3] sm:$0xff]
          %v265 = vld [vmem:[#allocation3 + $0x8] sm:$0xff]
          %v266 = vld [vmem:[#allocation3 + $0x10] sm:$0xff]
          %v267 = vld [vmem:[#allocation3 + $0x18] sm:$0xff]
          %v268 = vld [vmem:[#allocation3 + $0x20] sm:$0xff]
          %v269 = vld [vmem:[#allocation3 + $0x28] sm:$0xff]
          %v270 = vld [vmem:[#allocation3 + $0x30] sm:$0xff]
          %v271 = vld [vmem:[#allocation3 + $0x38] sm:$0xff]
          %v272 = vld [vmem:[#allocation3 + $0x40] sm:$0xff]
          %v273 = vld [vmem:[#allocation3 + $0x48] sm:$0xff]
          %v274 = vld [vmem:[#allocation3 + $0x50] sm:$0xff]
          %v275 = vld [vmem:[#allocation3 + $0x58] sm:$0xff]
          %v276 = vld [vmem:[#allocation3 + $0x60] sm:$0xff]
          %v277 = vld [vmem:[#allocation3 + $0x68] sm:$0xff]
          %v278 = vld [vmem:[#allocation3 + $0x70] sm:$0xff]
          %v279 = vld [vmem:[#allocation3 + $0x78] sm:$0xff]
          %v280 = vld [vmem:[#allocation3 + $0x80] sm:$0xff]
          %v281 = vld [vmem:[#allocation3 + $0x88] sm:$0xff]
          %v282 = vld [vmem:[#allocation3 + $0x90] sm:$0xff]
          %v283 = vld [vmem:[#allocation3 + $0x98] sm:$0xff]
          %v284 = vld [vmem:[#allocation3 + $0xa0] sm:$0xff]
          %v285 = vld [vmem:[#allocation3 + $0xa8] sm:$0xff]
          %v286 = vld [vmem:[#allocation3 + $0xb0] sm:$0xff]
          %v287 = vld [vmem:[#allocation3 + $0xb8] sm:$0xff]
          %v288 = vld [vmem:[#allocation3 + $0xc0] sm:$0xff]
          %v289 = vld [vmem:[#allocation3 + $0xc8] sm:$0xff]
          %v290 = vld [vmem:[#allocation3 + $0xd0] sm:$0xff]
          %v291 = vld [vmem:[#allocation3 + $0xd8] sm:$0xff]
          %v292 = vld [vmem:[#allocation3 + $0xe0] sm:$0xff]
          %v293 = vld [vmem:[#allocation3 + $0xe8] sm:$0xff]
          %v294 = vld [vmem:[#allocation3 + $0xf0] sm:$0xff]
          %v295 = vld [vmem:[#allocation3 + $0xf8] sm:$0xff]
          %v296 = vld [vmem:[#allocation3 + $0x100] sm:$0xff]
          %v297 = vld [vmem:[#allocation3 + $0x108] sm:$0xff]
          %v298 = vld [vmem:[#allocation3 + $0x110] sm:$0xff]
          %v299 = vld [vmem:[#allocation3 + $0x118] sm:$0xff]
          %v300 = vld [vmem:[#allocation3 + $0x120] sm:$0xff]
          %v301 = vld [vmem:[#allocation3 + $0x128] sm:$0xff]
          %v302 = vld [vmem:[#allocation3 + $0x130] sm:$0xff]
          %v303 = vld [vmem:[#allocation3 + $0x138] sm:$0xff]
          %v304 = vld [vmem:[#allocation3 + $0x140] sm:$0xff]
          %v305 = vld [vmem:[#allocation3 + $0x148] sm:$0xff]
          %v306 = vld [vmem:[#allocation3 + $0x150] sm:$0xff]
          %v307 = vld [vmem:[#allocation3 + $0x158] sm:$0xff]
          %v308 = vld [vmem:[#allocation3 + $0x160] sm:$0xff]
          %v309 = vld [vmem:[#allocation3 + $0x168] sm:$0xff]
          %v310 = vld [vmem:[#allocation3 + $0x170] sm:$0xff]
          %v311 = vld [vmem:[#allocation3 + $0x178] sm:$0xff]
          %v312 = vld [vmem:[#allocation3 + $0x180] sm:$0xff]
          %v313 = vld [vmem:[#allocation3 + $0x188] sm:$0xff]
          %v314 = vld [vmem:[#allocation3 + $0x190] sm:$0xff]
          %v315 = vld [vmem:[#allocation3 + $0x198] sm:$0xff]
          %v316 = vld [vmem:[#allocation3 + $0x1a0] sm:$0xff]
          %v317 = vld [vmem:[#allocation3 + $0x1a8] sm:$0xff]
          %v318 = vld [vmem:[#allocation3 + $0x1b0] sm:$0xff]
          %v319 = vld [vmem:[#allocation3 + $0x1b8] sm:$0xff]
          %v320 = vld [vmem:[#allocation3 + $0x1c0] sm:$0xff]
          %v321 = vld [vmem:[#allocation3 + $0x1c8] sm:$0xff]
          %v322 = vld [vmem:[#allocation3 + $0x1d0] sm:$0xff]
          %v323 = vld [vmem:[#allocation3 + $0x1d8] sm:$0xff]
          %v324 = vld [vmem:[#allocation3 + $0x1e0] sm:$0xff]
          %v325 = vld [vmem:[#allocation3 + $0x1e8] sm:$0xff]
          %v326 = vld [vmem:[#allocation3 + $0x1f0] sm:$0xff]
          %v327 = vld [vmem:[#allocation3 + $0x1f8] sm:$0xff]
          %v328 = vld [vmem:[#allocation3 + $0x200] sm:$0xff]
          %v329 = vld [vmem:[#allocation3 + $0x208] sm:$0xff]
          %v330 = vld [vmem:[#allocation3 + $0x210] sm:$0xff]
          %v331 = vld [vmem:[#allocation3 + $0x218] sm:$0xff]
          %v332 = vld [vmem:[#allocation3 + $0x220] sm:$0xff]
          %v333 = vld [vmem:[#allocation3 + $0x228] sm:$0xff]
          %v334 = vld [vmem:[#allocation3 + $0x230] sm:$0xff]
          %v335 = vld [vmem:[#allocation3 + $0x238] sm:$0xff]
          %v336 = vld [vmem:[#allocation3 + $0x240] sm:$0xff]
          %v337 = vld [vmem:[#allocation3 + $0x248] sm:$0xff]
          %v338 = vld [vmem:[#allocation3 + $0x250] sm:$0xff]
          %v339 = vld [vmem:[#allocation3 + $0x258] sm:$0xff]
          %v340 = vld [vmem:[#allocation3 + $0x260] sm:$0xff]
          %v341 = vld [vmem:[#allocation3 + $0x268] sm:$0xff]
          %v342 = vld [vmem:[#allocation3 + $0x270] sm:$0xff]
          %v343 = vld [vmem:[#allocation3 + $0x278] sm:$0xff]
          %v344 = vld [vmem:[#allocation3 + $0x280] sm:$0xff]
          %v345 = vld [vmem:[#allocation3 + $0x288] sm:$0xff]
          %v346 = vld [vmem:[#allocation3 + $0x290] sm:$0xff]
          %v347 = vld [vmem:[#allocation3 + $0x298] sm:$0xff]
          %v348 = vld [vmem:[#allocation3 + $0x2a0] sm:$0xff]
          %v349 = vld [vmem:[#allocation3 + $0x2a8] sm:$0xff]
          %v350 = vld [vmem:[#allocation3 + $0x2b0] sm:$0xff]
          %v351 = vld [vmem:[#allocation3 + $0x2b8] sm:$0xff]
          %v352 = vld [vmem:[#allocation3 + $0x2c0] sm:$0xff]
          %v353 = vld [vmem:[#allocation3 + $0x2c8] sm:$0xff]
          %v354 = vld [vmem:[#allocation3 + $0x2d0] sm:$0xff]
          %v355 = vld [vmem:[#allocation3 + $0x2d8] sm:$0xff]
          %v356 = vld [vmem:[#allocation3 + $0x2e0] sm:$0xff]
          %v357 = vld [vmem:[#allocation3 + $0x2e8] sm:$0xff]
          %v358 = vld [vmem:[#allocation3 + $0x2f0] sm:$0xff]
          %v359 = vld [vmem:[#allocation3 + $0x2f8] sm:$0xff]
          %v360 = vld [vmem:[#allocation3 + $0x300] sm:$0xff]
          %v361 = vld [vmem:[#allocation3 + $0x308] sm:$0xff]
          %v362 = vld [vmem:[#allocation3 + $0x310] sm:$0xff]
          %v363 = vld [vmem:[#allocation3 + $0x318] sm:$0xff]
          %v364 = vld [vmem:[#allocation3 + $0x320] sm:$0xff]
          %v365 = vld [vmem:[#allocation3 + $0x328] sm:$0xff]
          %v366 = vld [vmem:[#allocation3 + $0x330] sm:$0xff]
          %v367 = vld [vmem:[#allocation3 + $0x338] sm:$0xff]
          %v368 = vld [vmem:[#allocation3 + $0x340] sm:$0xff]
          %v369 = vld [vmem:[#allocation3 + $0x348] sm:$0xff]
          %v370 = vld [vmem:[#allocation3 + $0x350] sm:$0xff]
          %v371 = vld [vmem:[#allocation3 + $0x358] sm:$0xff]
          %v372 = vld [vmem:[#allocation3 + $0x360] sm:$0xff]
          %v373 = vld [vmem:[#allocation3 + $0x368] sm:$0xff]
          %v374 = vld [vmem:[#allocation3 + $0x370] sm:$0xff]
          %v375 = vld [vmem:[#allocation3 + $0x378] sm:$0xff]
          %v376 = vld [vmem:[#allocation3 + $0x380] sm:$0xff]
          %v377 = vld [vmem:[#allocation3 + $0x388] sm:$0xff]
          %v378 = vld [vmem:[#allocation3 + $0x390] sm:$0xff]
          %v379 = vld [vmem:[#allocation3 + $0x398] sm:$0xff]
          %v380 = vld [vmem:[#allocation3 + $0x3a0] sm:$0xff]
          %v381 = vld [vmem:[#allocation3 + $0x3a8] sm:$0xff]
          %v382 = vld [vmem:[#allocation3 + $0x3b0] sm:$0xff]
          %v383 = vld [vmem:[#allocation3 + $0x3b8] sm:$0xff]
          %v384 = vld [vmem:[#allocation3 + $0x3c0] sm:$0xff]
          %v385 = vld [vmem:[#allocation3 + $0x3c8] sm:$0xff]
          %v386 = vld [vmem:[#allocation3 + $0x3d0] sm:$0xff]
          %v387 = vld [vmem:[#allocation3 + $0x3d8] sm:$0xff]
          %v388 = vld [vmem:[#allocation3 + $0x3e0] sm:$0xff]
          %v389 = vld [vmem:[#allocation3 + $0x3e8] sm:$0xff]
          %v390 = vld [vmem:[#allocation3 + $0x3f0] sm:$0xff]
          %v391 = vld [vmem:[#allocation3 + $0x3f8] sm:$0xff]
          %v392 = vld [vmem:[#allocation3 + $0x400] sm:$0xff]
          %v393 = vld [vmem:[#allocation3 + $0x408] sm:$0xff]
          %v394 = vld [vmem:[#allocation3 + $0x410] sm:$0xff]
          %v395 = vld [vmem:[#allocation3 + $0x418] sm:$0xff]
          %v396 = vld [vmem:[#allocation3 + $0x420] sm:$0xff]
          %v397 = vld [vmem:[#allocation3 + $0x428] sm:$0xff]
          %v398 = vld [vmem:[#allocation3 + $0x430] sm:$0xff]
          %v399 = vld [vmem:[#allocation3 + $0x438] sm:$0xff]
          %v400 = vld [vmem:[#allocation3 + $0x440] sm:$0xff]
          %v401 = vld [vmem:[#allocation3 + $0x448] sm:$0xff]
          %v402 = vld [vmem:[#allocation3 + $0x450] sm:$0xff]
          %v403 = vld [vmem:[#allocation3 + $0x458] sm:$0xff]
          %v404 = vld [vmem:[#allocation3 + $0x460] sm:$0xff]
          %v405 = vld [vmem:[#allocation3 + $0x468] sm:$0xff]
          %v406 = vld [vmem:[#allocation3 + $0x470] sm:$0xff]
          %v407 = vld [vmem:[#allocation3 + $0x478] sm:$0xff]
          %v408 = vld [vmem:[#allocation3 + $0x480] sm:$0xff]
          %v409 = vld [vmem:[#allocation3 + $0x488] sm:$0xff]
          %v410 = vld [vmem:[#allocation3 + $0x490] sm:$0xff]
          %v411 = vld [vmem:[#allocation3 + $0x498] sm:$0xff]
          %v412 = vld [vmem:[#allocation3 + $0x4a0] sm:$0xff]
          %v413 = vld [vmem:[#allocation3 + $0x4a8] sm:$0xff]
          %v414 = vld [vmem:[#allocation3 + $0x4b0] sm:$0xff]
          %v415 = vld [vmem:[#allocation3 + $0x4b8] sm:$0xff]
          %v416 = vld [vmem:[#allocation3 + $0x4c0] sm:$0xff]
          %v417 = vld [vmem:[#allocation3 + $0x4c8] sm:$0xff]
          %v418 = vld [vmem:[#allocation3 + $0x4d0] sm:$0xff]
          %v419 = vld [vmem:[#allocation3 + $0x4d8] sm:$0xff]
          %v420 = vld [vmem:[#allocation3 + $0x4e0] sm:$0xff]
          %v421 = vld [vmem:[#allocation3 + $0x4e8] sm:$0xff]
          %v422 = vld [vmem:[#allocation3 + $0x4f0] sm:$0xff]
          %v423 = vld [vmem:[#allocation3 + $0x4f8] sm:$0xff]
          %v424 = vld [vmem:[#allocation3 + $0x500] sm:$0xff]
          %v425 = vld [vmem:[#allocation3 + $0x508] sm:$0xff]
          %v426 = vld [vmem:[#allocation3 + $0x510] sm:$0xff]
          %v427 = vld [vmem:[#allocation3 + $0x518] sm:$0xff]
          %v428 = vld [vmem:[#allocation3 + $0x520] sm:$0xff]
          %v429 = vld [vmem:[#allocation3 + $0x528] sm:$0xff]
          %v430 = vld [vmem:[#allocation3 + $0x530] sm:$0xff]
          %v431 = vld [vmem:[#allocation3 + $0x538] sm:$0xff]
          %v432 = vld [vmem:[#allocation3 + $0x540] sm:$0xff]
          %v433 = vld [vmem:[#allocation3 + $0x548] sm:$0xff]
          %v434 = vld [vmem:[#allocation3 + $0x550] sm:$0xff]
          %v435 = vld [vmem:[#allocation3 + $0x558] sm:$0xff]
          %v436 = vld [vmem:[#allocation3 + $0x560] sm:$0xff]
          %v437 = vld [vmem:[#allocation3 + $0x568] sm:$0xff]
          %v438 = vld [vmem:[#allocation3 + $0x570] sm:$0xff]
          %v439 = vld [vmem:[#allocation3 + $0x578] sm:$0xff]
          %v440 = vld [vmem:[#allocation3 + $0x580] sm:$0xff]
          %v441 = vld [vmem:[#allocation3 + $0x588] sm:$0xff]
          %v442 = vld [vmem:[#allocation3 + $0x590] sm:$0xff]
          %v443 = vld [vmem:[#allocation3 + $0x598] sm:$0xff]
          %v444 = vld [vmem:[#allocation3 + $0x5a0] sm:$0xff]
          %v445 = vld [vmem:[#allocation3 + $0x5a8] sm:$0xff]
          %v446 = vld [vmem:[#allocation3 + $0x5b0] sm:$0xff]
          %v447 = vld [vmem:[#allocation3 + $0x5b8] sm:$0xff]
          %v448 = vld [vmem:[#allocation3 + $0x5c0] sm:$0xff]
          %v449 = vld [vmem:[#allocation3 + $0x5c8] sm:$0xff]
          %v450 = vld [vmem:[#allocation3 + $0x5d0] sm:$0xff]
          %v451 = vld [vmem:[#allocation3 + $0x5d8] sm:$0xff]
          %v452 = vld [vmem:[#allocation3 + $0x5e0] sm:$0xff]
          %v453 = vld [vmem:[#allocation3 + $0x5e8] sm:$0xff]
          %v454 = vld [vmem:[#allocation3 + $0x5f0] sm:$0xff]
          %v455 = vld [vmem:[#allocation3 + $0x5f8] sm:$0xff]
          %v456 = vld [vmem:[#allocation3 + $0x600] sm:$0xff]
          %v457 = vld [vmem:[#allocation3 + $0x608] sm:$0xff]
          %v458 = vld [vmem:[#allocation3 + $0x610] sm:$0xff]
          %v459 = vld [vmem:[#allocation3 + $0x618] sm:$0xff]
          %v460 = vld [vmem:[#allocation3 + $0x620] sm:$0xff]
          %v461 = vld [vmem:[#allocation3 + $0x628] sm:$0xff]
          %v462 = vld [vmem:[#allocation3 + $0x630] sm:$0xff]
          %v463 = vld [vmem:[#allocation3 + $0x638] sm:$0xff]
          %v464 = vld [vmem:[#allocation3 + $0x640] sm:$0xff]
          %v465 = vld [vmem:[#allocation3 + $0x648] sm:$0xff]
          %v466 = vld [vmem:[#allocation3 + $0x650] sm:$0xff]
          %v467 = vld [vmem:[#allocation3 + $0x658] sm:$0xff]
          %v468 = vld [vmem:[#allocation3 + $0x660] sm:$0xff]
          %v469 = vld [vmem:[#allocation3 + $0x668] sm:$0xff]
          %v470 = vld [vmem:[#allocation3 + $0x670] sm:$0xff]
          %v471 = vld [vmem:[#allocation3 + $0x678] sm:$0xff]
          %v472 = vld [vmem:[#allocation3 + $0x680] sm:$0xff]
          %v473 = vld [vmem:[#allocation3 + $0x688] sm:$0xff]
          %v474 = vld [vmem:[#allocation3 + $0x690] sm:$0xff]
          %v475 = vld [vmem:[#allocation3 + $0x698] sm:$0xff]
          %v476 = vld [vmem:[#allocation3 + $0x6a0] sm:$0xff]
          %v477 = vld [vmem:[#allocation3 + $0x6a8] sm:$0xff]
          %v478 = vld [vmem:[#allocation3 + $0x6b0] sm:$0xff]
          %v479 = vld [vmem:[#allocation3 + $0x6b8] sm:$0xff]
          %v480 = vld [vmem:[#allocation3 + $0x6c0] sm:$0xff]
          %v481 = vld [vmem:[#allocation3 + $0x6c8] sm:$0xff]
          %v482 = vld [vmem:[#allocation3 + $0x6d0] sm:$0xff]
          %v483 = vld [vmem:[#allocation3 + $0x6d8] sm:$0xff]
          %v484 = vld [vmem:[#allocation3 + $0x6e0] sm:$0xff]
          %v485 = vld [vmem:[#allocation3 + $0x6e8] sm:$0xff]
          %v486 = vld [vmem:[#allocation3 + $0x6f0] sm:$0xff]
          %v487 = vld [vmem:[#allocation3 + $0x6f8] sm:$0xff]
          %v488 = vld [vmem:[#allocation3 + $0x700] sm:$0xff]
          %v489 = vld [vmem:[#allocation3 + $0x708] sm:$0xff]
          %v490 = vld [vmem:[#allocation3 + $0x710] sm:$0xff]
          %v491 = vld [vmem:[#allocation3 + $0x718] sm:$0xff]
          %v492 = vld [vmem:[#allocation3 + $0x720] sm:$0xff]
          %v493 = vld [vmem:[#allocation3 + $0x728] sm:$0xff]
          %v494 = vld [vmem:[#allocation3 + $0x730] sm:$0xff]
          %v495 = vld [vmem:[#allocation3 + $0x738] sm:$0xff]
          %v496 = vld [vmem:[#allocation3 + $0x740] sm:$0xff]
          %v497 = vld [vmem:[#allocation3 + $0x748] sm:$0xff]
          %v498 = vld [vmem:[#allocation3 + $0x750] sm:$0xff]
          %v499 = vld [vmem:[#allocation3 + $0x758] sm:$0xff]
          %v500 = vld [vmem:[#allocation3 + $0x760] sm:$0xff]
          %v501 = vld [vmem:[#allocation3 + $0x768] sm:$0xff]
          %v502 = vld [vmem:[#allocation3 + $0x770] sm:$0xff]
          %v503 = vld [vmem:[#allocation3 + $0x778] sm:$0xff]
          %v504 = vld [vmem:[#allocation3 + $0x780] sm:$0xff]
          %v505 = vld [vmem:[#allocation3 + $0x788] sm:$0xff]
          %v506 = vld [vmem:[#allocation3 + $0x790] sm:$0xff]
          %v507 = vld [vmem:[#allocation3 + $0x798] sm:$0xff]
          %v508 = vld [vmem:[#allocation3 + $0x7a0] sm:$0xff]
          %v509 = vld [vmem:[#allocation3 + $0x7a8] sm:$0xff]
          %v510 = vld [vmem:[#allocation3 + $0x7b0] sm:$0xff]
          %v511 = vld [vmem:[#allocation3 + $0x7b8] sm:$0xff]
          %v512 = vld [vmem:[#allocation3 + $0x7c0] sm:$0xff]
          %v513 = vld [vmem:[#allocation3 + $0x7c8] sm:$0xff]
          %v514 = vld [vmem:[#allocation3 + $0x7d0] sm:$0xff]
          %v515 = vld [vmem:[#allocation3 + $0x7d8] sm:$0xff]
          %v516 = vld [vmem:[#allocation3 + $0x7e0] sm:$0xff]
          %v517 = vld [vmem:[#allocation3 + $0x7e8] sm:$0xff]
          %v518 = vld [vmem:[#allocation3 + $0x7f0] sm:$0xff]
          %v519 = vld [vmem:[#allocation3 + $0x7f8] sm:$0xff]
          %v520 = vld [vmem:[%s219] sm:$0xff]
          %v521 = vld [vmem:[%s219 + $0x8] sm:$0xff]
          %v522 = vld [vmem:[%s219 + $0x10] sm:$0xff]
          %v523 = vld [vmem:[%s219 + $0x18] sm:$0xff]
          %v524 = vld [vmem:[%s219 + $0x20] sm:$0xff]
          %v525 = vld [vmem:[%s219 + $0x28] sm:$0xff]
          %v526 = vld [vmem:[%s219 + $0x30] sm:$0xff]
          %v527 = vld [vmem:[%s219 + $0x38] sm:$0xff]
          %v528 = vld [vmem:[%s219 + $0x40] sm:$0xff]
          %v529 = vld [vmem:[%s219 + $0x48] sm:$0xff]
          %v530 = vld [vmem:[%s219 + $0x50] sm:$0xff]
          %v531 = vld [vmem:[%s219 + $0x58] sm:$0xff]
          %v532 = vld [vmem:[%s219 + $0x60] sm:$0xff]
          %v533 = vld [vmem:[%s219 + $0x68] sm:$0xff]
          %v534 = vld [vmem:[%s219 + $0x70] sm:$0xff]
          %v535 = vld [vmem:[%s219 + $0x78] sm:$0xff]
          %v536 = vld [vmem:[%s219 + $0x80] sm:$0xff]
          %v537 = vld [vmem:[%s219 + $0x88] sm:$0xff]
          %v538 = vld [vmem:[%s219 + $0x90] sm:$0xff]
          %v539 = vld [vmem:[%s219 + $0x98] sm:$0xff]
          %v540 = vld [vmem:[%s219 + $0xa0] sm:$0xff]
          %v541 = vld [vmem:[%s219 + $0xa8] sm:$0xff]
          %v542 = vld [vmem:[%s219 + $0xb0] sm:$0xff]
          %v543 = vld [vmem:[%s219 + $0xb8] sm:$0xff]
          %v544 = vld [vmem:[%s219 + $0xc0] sm:$0xff]
          %v545 = vld [vmem:[%s219 + $0xc8] sm:$0xff]
          %v546 = vld [vmem:[%s219 + $0xd0] sm:$0xff]
          %v547 = vld [vmem:[%s219 + $0xd8] sm:$0xff]
          %v548 = vld [vmem:[%s219 + $0xe0] sm:$0xff]
          %v549 = vld [vmem:[%s219 + $0xe8] sm:$0xff]
          %v550 = vld [vmem:[%s219 + $0xf0] sm:$0xff]
          %v551 = vld [vmem:[%s219 + $0xf8] sm:$0xff]
          %v552 = vld [vmem:[%s219 + $0x100] sm:$0xff]
          %v553 = vld [vmem:[%s219 + $0x108] sm:$0xff]
          %v554 = vld [vmem:[%s219 + $0x110] sm:$0xff]
          %v555 = vld [vmem:[%s219 + $0x118] sm:$0xff]
          %v556 = vld [vmem:[%s219 + $0x120] sm:$0xff]
          %v557 = vld [vmem:[%s219 + $0x128] sm:$0xff]
          %v558 = vld [vmem:[%s219 + $0x130] sm:$0xff]
          %v559 = vld [vmem:[%s219 + $0x138] sm:$0xff]
          %v560 = vld [vmem:[%s219 + $0x140] sm:$0xff]
          %v561 = vld [vmem:[%s219 + $0x148] sm:$0xff]
          %v562 = vld [vmem:[%s219 + $0x150] sm:$0xff]
          %v563 = vld [vmem:[%s219 + $0x158] sm:$0xff]
          %v564 = vld [vmem:[%s219 + $0x160] sm:$0xff]
          %v565 = vld [vmem:[%s219 + $0x168] sm:$0xff]
          %v566 = vld [vmem:[%s219 + $0x170] sm:$0xff]
          %v567 = vld [vmem:[%s219 + $0x178] sm:$0xff]
          %v568 = vld [vmem:[%s219 + $0x180] sm:$0xff]
          %v569 = vld [vmem:[%s219 + $0x188] sm:$0xff]
          %v570 = vld [vmem:[%s219 + $0x190] sm:$0xff]
          %v571 = vld [vmem:[%s219 + $0x198] sm:$0xff]
          %v572 = vld [vmem:[%s219 + $0x1a0] sm:$0xff]
          %v573 = vld [vmem:[%s219 + $0x1a8] sm:$0xff]
          %v574 = vld [vmem:[%s219 + $0x1b0] sm:$0xff]
          %v575 = vld [vmem:[%s219 + $0x1b8] sm:$0xff]
          %v576 = vld [vmem:[%s219 + $0x1c0] sm:$0xff]
          %v577 = vld [vmem:[%s219 + $0x1c8] sm:$0xff]
          %v578 = vld [vmem:[%s219 + $0x1d0] sm:$0xff]
          %v579 = vld [vmem:[%s219 + $0x1d8] sm:$0xff]
          %v580 = vld [vmem:[%s219 + $0x1e0] sm:$0xff]
          %v581 = vld [vmem:[%s219 + $0x1e8] sm:$0xff]
          %v582 = vld [vmem:[%s219 + $0x1f0] sm:$0xff]
          %v583 = vld [vmem:[%s219 + $0x1f8] sm:$0xff]
          %v584 = vld [vmem:[%s219 + $0x200] sm:$0xff]
          %v585 = vld [vmem:[%s219 + $0x208] sm:$0xff]
          %v586 = vld [vmem:[%s219 + $0x210] sm:$0xff]
          %v587 = vld [vmem:[%s219 + $0x218] sm:$0xff]
          %v588 = vld [vmem:[%s219 + $0x220] sm:$0xff]
          %v589 = vld [vmem:[%s219 + $0x228] sm:$0xff]
          %v590 = vld [vmem:[%s219 + $0x230] sm:$0xff]
          %v591 = vld [vmem:[%s219 + $0x238] sm:$0xff]
          %v592 = vld [vmem:[%s219 + $0x240] sm:$0xff]
          %v593 = vld [vmem:[%s219 + $0x248] sm:$0xff]
          %v594 = vld [vmem:[%s219 + $0x250] sm:$0xff]
          %v595 = vld [vmem:[%s219 + $0x258] sm:$0xff]
          %v596 = vld [vmem:[%s219 + $0x260] sm:$0xff]
          %v597 = vld [vmem:[%s219 + $0x268] sm:$0xff]
          %v598 = vld [vmem:[%s219 + $0x270] sm:$0xff]
          %v599 = vld [vmem:[%s219 + $0x278] sm:$0xff]
          %v600 = vld [vmem:[%s219 + $0x280] sm:$0xff]
          %v601 = vld [vmem:[%s219 + $0x288] sm:$0xff]
          %v602 = vld [vmem:[%s219 + $0x290] sm:$0xff]
          %v603 = vld [vmem:[%s219 + $0x298] sm:$0xff]
          %v604 = vld [vmem:[%s219 + $0x2a0] sm:$0xff]
          %v605 = vld [vmem:[%s219 + $0x2a8] sm:$0xff]
          %v606 = vld [vmem:[%s219 + $0x2b0] sm:$0xff]
          %v607 = vld [vmem:[%s219 + $0x2b8] sm:$0xff]
          %v608 = vld [vmem:[%s219 + $0x2c0] sm:$0xff]
          %v609 = vld [vmem:[%s219 + $0x2c8] sm:$0xff]
          %v610 = vld [vmem:[%s219 + $0x2d0] sm:$0xff]
          %v611 = vld [vmem:[%s219 + $0x2d8] sm:$0xff]
          %v612 = vld [vmem:[%s219 + $0x2e0] sm:$0xff]
          %v613 = vld [vmem:[%s219 + $0x2e8] sm:$0xff]
          %v614 = vld [vmem:[%s219 + $0x2f0] sm:$0xff]
          %v615 = vld [vmem:[%s219 + $0x2f8] sm:$0xff]
          %v616 = vld [vmem:[%s219 + $0x300] sm:$0xff]
          %v617 = vld [vmem:[%s219 + $0x308] sm:$0xff]
          %v618 = vld [vmem:[%s219 + $0x310] sm:$0xff]
          %v619 = vld [vmem:[%s219 + $0x318] sm:$0xff]
          %v620 = vld [vmem:[%s219 + $0x320] sm:$0xff]
          %v621 = vld [vmem:[%s219 + $0x328] sm:$0xff]
          %v622 = vld [vmem:[%s219 + $0x330] sm:$0xff]
          %v623 = vld [vmem:[%s219 + $0x338] sm:$0xff]
          %v624 = vld [vmem:[%s219 + $0x340] sm:$0xff]
          %v625 = vld [vmem:[%s219 + $0x348] sm:$0xff]
          %v626 = vld [vmem:[%s219 + $0x350] sm:$0xff]
          %v627 = vld [vmem:[%s219 + $0x358] sm:$0xff]
          %v628 = vld [vmem:[%s219 + $0x360] sm:$0xff]
          %v629 = vld [vmem:[%s219 + $0x368] sm:$0xff]
          %v630 = vld [vmem:[%s219 + $0x370] sm:$0xff]
          %v631 = vld [vmem:[%s219 + $0x378] sm:$0xff]
          %v632 = vld [vmem:[%s219 + $0x380] sm:$0xff]
          %v633 = vld [vmem:[%s219 + $0x388] sm:$0xff]
          %v634 = vld [vmem:[%s219 + $0x390] sm:$0xff]
          %v635 = vld [vmem:[%s219 + $0x398] sm:$0xff]
          %v636 = vld [vmem:[%s219 + $0x3a0] sm:$0xff]
          %v637 = vld [vmem:[%s219 + $0x3a8] sm:$0xff]
          %v638 = vld [vmem:[%s219 + $0x3b0] sm:$0xff]
          %v639 = vld [vmem:[%s219 + $0x3b8] sm:$0xff]
          %v640 = vld [vmem:[%s219 + $0x3c0] sm:$0xff]
          %v641 = vld [vmem:[%s219 + $0x3c8] sm:$0xff]
          %v642 = vld [vmem:[%s219 + $0x3d0] sm:$0xff]
          %v643 = vld [vmem:[%s219 + $0x3d8] sm:$0xff]
          %v644 = vld [vmem:[%s219 + $0x3e0] sm:$0xff]
          %v645 = vld [vmem:[%s219 + $0x3e8] sm:$0xff]
          %v646 = vld [vmem:[%s219 + $0x3f0] sm:$0xff]
          %v647 = vld [vmem:[%s219 + $0x3f8] sm:$0xff]
          %648 = vmatprep.subr.mxu0 %v521
          %649 = vmatpush1.msra.mxu0 %v520
          %650 = vmatprep.subr.mxu0 %v523
          %651 = vmatpush1.msra.mxu0 %v522
          %652 = vmatprep.subr.mxu0 %v525
          %653 = vmatpush1.msra.mxu0 %v524
          %654 = vmatprep.subr.mxu0 %v527
          %655 = vmatpush1.msra.mxu0 %v526
          %656 = vmatprep.subr.mxu0 %v529
          %657 = vmatpush1.msra.mxu0 %v528
          %658 = vmatprep.subr.mxu0 %v531
          %659 = vmatpush1.msra.mxu0 %v530
          %660 = vmatprep.subr.mxu0 %v533
          %661 = vmatpush1.msra.mxu0 %v532
          %662 = vmatprep.subr.mxu0 %v535
          %663 = vmatpush1.msra.mxu0 %v534
          %664 = vmatprep.subr.mxu0 %v537
          %665 = vmatpush1.msra.mxu0 %v536
          %666 = vmatprep.subr.mxu0 %v539
          %667 = vmatpush1.msra.mxu0 %v538
          %668 = vmatprep.subr.mxu0 %v541
          %669 = vmatpush1.msra.mxu0 %v540
          %670 = vmatprep.subr.mxu0 %v543
          %671 = vmatpush1.msra.mxu0 %v542
          %672 = vmatprep.subr.mxu0 %v545
          %673 = vmatpush1.msra.mxu0 %v544
          %674 = vmatprep.subr.mxu0 %v547
          %675 = vmatpush1.msra.mxu0 %v546
          %676 = vmatprep.subr.mxu0 %v549
          %677 = vmatpush1.msra.mxu0 %v548
          %678 = vmatprep.subr.mxu0 %v551
          %679 = vmatpush1.msra.mxu0 %v550
          %680 = vmatprep.subr.mxu0 %v553
          %681 = vmatpush1.msra.mxu0 %v552
          %682 = vmatprep.subr.mxu0 %v555
          %683 = vmatpush1.msra.mxu0 %v554
          %684 = vmatprep.subr.mxu0 %v557
          %685 = vmatpush1.msra.mxu0 %v556
          %686 = vmatprep.subr.mxu0 %v559
          %687 = vmatpush1.msra.mxu0 %v558
          %688 = vmatprep.subr.mxu0 %v561
          %689 = vmatpush1.msra.mxu0 %v560
          %690 = vmatprep.subr.mxu0 %v563
          %691 = vmatpush1.msra.mxu0 %v562
          %692 = vmatprep.subr.mxu0 %v565
          %693 = vmatpush1.msra.mxu0 %v564
          %694 = vmatprep.subr.mxu0 %v567
          %695 = vmatpush1.msra.mxu0 %v566
          %696 = vmatprep.subr.mxu0 %v569
          %697 = vmatpush1.msra.mxu0 %v568
          %698 = vmatprep.subr.mxu0 %v571
          %699 = vmatpush1.msra.mxu0 %v570
          %700 = vmatprep.subr.mxu0 %v573
          %701 = vmatpush1.msra.mxu0 %v572
          %702 = vmatprep.subr.mxu0 %v575
          %703 = vmatpush1.msra.mxu0 %v574
          %704 = vmatprep.subr.mxu0 %v577
          %705 = vmatpush1.msra.mxu0 %v576
          %706 = vmatprep.subr.mxu0 %v579
          %707 = vmatpush1.msra.mxu0 %v578
          %708 = vmatprep.subr.mxu0 %v581
          %709 = vmatpush1.msra.mxu0 %v580
          %710 = vmatprep.subr.mxu0 %v583
          %711 = vmatpush1.msra.mxu0 %v582
          %712 = vmatprep.mubr.f32.mxu0 %v265
          %713 = vmatmul.mubr.f32.gmra.mrb[0].mxu0 %v264
          %v714 = vpop.f32.mrb[0].mxu0
          %v715 = vadd.f32 0.0, %v714
          %v716 = vpop.f32.mrb[0].mxu0
          %v717 = vadd.f32 0.0, %v716
          %718 = vmatprep.mubr.f32.mxu0 %v269
          %719 = vmatmul.mubr.f32.gmra.mrb[0].mxu0 %v268
          %v720 = vpop.f32.mrb[0].mxu0
          %v721 = vadd.f32 0.0, %v720
          %v722 = vpop.f32.mrb[0].mxu0
          %v723 = vadd.f32 0.0, %v722
          %724 = vmatprep.mubr.f32.mxu0 %v273
          %725 = vmatmul.mubr.f32.gmra.mrb[0].mxu0 %v272
          %v726 = vpop.f32.mrb[0].mxu0
          %v727 = vadd.f32 0.0, %v726
          %v728 = vpop.f32.mrb[0].mxu0
          %v729 = vadd.f32 0.0, %v728
          %730 = vmatprep.mubr.f32.mxu0 %v277
          %731 = vmatmul.mubr.f32.gmra.mrb[0].mxu0 %v276
          %v732 = vpop.f32.mrb[0].mxu0
          %v733 = vadd.f32 0.0, %v732
          %v734 = vpop.f32.mrb[0].mxu0
          %v735 = vadd.f32 0.0, %v734
          %736 = vmatprep.mubr.f32.mxu0 %v281
          %737 = vmatmul.mubr.f32.gmra.mrb[0].mxu0 %v280
          %v738 = vpop.f32.mrb[0].mxu0
          %v739 = vadd.f32 0.0, %v738
          %v740 = vpop.f32.mrb[0].mxu0
          %v741 = vadd.f32 0.0, %v740
          %742 = vmatprep.mubr.f32.mxu0 %v285
          %743 = vmatmul.mubr.f32.gmra.mrb[0].mxu0 %v284
          %v744 = vpop.f32.mrb[0].mxu0
          %v745 = vadd.f32 0.0, %v744
          %v746 = vpop.f32.mrb[0].mxu0
          %v747 = vadd.f32 0.0, %v746
          %748 = vmatprep.mubr.f32.mxu0 %v289
          %749 = vmatmul.mubr.f32.gmra.mrb[0].mxu0 %v288
          %v750 = vpop.f32.mrb[0].mxu0
          %v751 = vadd.f32 0.0, %v750
          %v752 = vpop.f32.mrb[0].mxu0
          %v753 = vadd.f32 0.0, %v752
          %754 = vmatprep.mubr.f32.mxu0 %v293
          %755 = vmatmul.mubr.f32.gmra.mrb[0].mxu0 %v292
          %v756 = vpop.f32.mrb[0].mxu0
          %v757 = vadd.f32 0.0, %v756
          %v758 = vpop.f32.mrb[0].mxu0
          %v759 = vadd.f32 0.0, %v758
          %760 = vmatprep.mubr.f32.mxu0 %v297
          %761 = vmatmul.mubr.f32.gmra.mrb[0].mxu0 %v296
          %v762 = vpop.f32.mrb[0].mxu0
          %v763 = vadd.f32 0.0, %v762
          %v764 = vpop.f32.mrb[0].mxu0
          %v765 = vadd.f32 0.0, %v764
          %766 = vmatprep.mubr.f32.mxu0 %v301
          %767 = vmatmul.mubr.f32.gmra.mrb[0].mxu0 %v300
          %v768 = vpop.f32.mrb[0].mxu0
          %v769 = vadd.f32 0.0, %v768
          %v770 = vpop.f32.mrb[0].mxu0
          %v771 = vadd.f32 0.0, %v770
          %772 = vmatprep.mubr.f32.mxu0 %v305
          %773 = vmatmul.mubr.f32.gmra.mrb[0].mxu0 %v304
          %v774 = vpop.f32.mrb[0].mxu0
          %v775 = vadd.f32 0.0, %v774
          %v776 = vpop.f32.mrb[0].mxu0
          %v777 = vadd.f32 0.0, %v776
          %778 = vmatprep.mubr.f32.mxu0 %v309
          %779 = vmatmul.mubr.f32.gmra.mrb[0].mxu0 %v308
          %v780 = vpop.f32.mrb[0].mxu0
          %v781 = vadd.f32 0.0, %v780
          %v782 = vpop.f32.mrb[0].mxu0
          %v783 = vadd.f32 0.0, %v782
          %784 = vmatprep.mubr.f32.mxu0 %v313
          %785 = vmatmul.mubr.f32.gmra.mrb[0].mxu0 %v312
          %v786 = vpop.f32.mrb[0].mxu0
          %v787 = vadd.f32 0.0, %v786
          %v788 = vpop.f32.mrb[0].mxu0
          %v789 = vadd.f32 0.0, %v788
          %790 = vmatprep.mubr.f32.mxu0 %v317
          %791 = vmatmul.mubr.f32.gmra.mrb[0].mxu0 %v316
          %v792 = vpop.f32.mrb[0].mxu0
          %v793 = vadd.f32 0.0, %v792
          %v794 = vpop.f32.mrb[0].mxu0
          %v795 = vadd.f32 0.0, %v794
          %796 = vmatprep.mubr.f32.mxu0 %v321
          %797 = vmatmul.mubr.f32.gmra.mrb[0].mxu0 %v320
          %v798 = vpop.f32.mrb[0].mxu0
          %v799 = vadd.f32 0.0, %v798
          %v800 = vpop.f32.mrb[0].mxu0
          %v801 = vadd.f32 0.0, %v800
          %802 = vmatprep.mubr.f32.mxu0 %v325
          %803 = vmatmul.mubr.f32.gmra.mrb[0].mxu0 %v324
          %v804 = vpop.f32.mrb[0].mxu0
          %v805 = vadd.f32 0.0, %v804
          %v806 = vpop.f32.mrb[0].mxu0
          %v807 = vadd.f32 0.0, %v806
          %808 = vmatprep.mubr.f32.mxu0 %v329
          %809 = vmatmul.mubr.f32.gmra.mrb[0].mxu0 %v328
          %v810 = vpop.f32.mrb[0].mxu0
          %v811 = vadd.f32 0.0, %v810
          %v812 = vpop.f32.mrb[0].mxu0
          %v813 = vadd.f32 0.0, %v812
          %814 = vmatprep.mubr.f32.mxu0 %v333
          %815 = vmatmul.mubr.f32.gmra.mrb[0].mxu0 %v332
          %v816 = vpop.f32.mrb[0].mxu0
          %v817 = vadd.f32 0.0, %v816
          %v818 = vpop.f32.mrb[0].mxu0
          %v819 = vadd.f32 0.0, %v818
          %820 = vmatprep.mubr.f32.mxu0 %v337
          %821 = vmatmul.mubr.f32.gmra.mrb[0].mxu0 %v336
          %v822 = vpop.f32.mrb[0].mxu0
          %v823 = vadd.f32 0.0, %v822
          %v824 = vpop.f32.mrb[0].mxu0
          %v825 = vadd.f32 0.0, %v824
          %826 = vmatprep.mubr.f32.mxu0 %v341
          %827 = vmatmul.mubr.f32.gmra.mrb[0].mxu0 %v340
          %v828 = vpop.f32.mrb[0].mxu0
          %v829 = vadd.f32 0.0, %v828
          %v830 = vpop.f32.mrb[0].mxu0
          %v831 = vadd.f32 0.0, %v830
          %832 = vmatprep.mubr.f32.mxu0 %v345
          %833 = vmatmul.mubr.f32.gmra.mrb[0].mxu0 %v344
          %v834 = vpop.f32.mrb[0].mxu0
          %v835 = vadd.f32 0.0, %v834
          %v836 = vpop.f32.mrb[0].mxu0
          %v837 = vadd.f32 0.0, %v836
          %838 = vmatprep.mubr.f32.mxu0 %v349
          %839 = vmatmul.mubr.f32.gmra.mrb[0].mxu0 %v348
          %v840 = vpop.f32.mrb[0].mxu0
          %v841 = vadd.f32 0.0, %v840
          %v842 = vpop.f32.mrb[0].mxu0
          %v843 = vadd.f32 0.0, %v842
          %844 = vmatprep.mubr.f32.mxu0 %v353
          %845 = vmatmul.mubr.f32.gmra.mrb[0].mxu0 %v352
          %v846 = vpop.f32.mrb[0].mxu0
          %v847 = vadd.f32 0.0, %v846
          %v848 = vpop.f32.mrb[0].mxu0
          %v849 = vadd.f32 0.0, %v848
          %850 = vmatprep.mubr.f32.mxu0 %v357
          %851 = vmatmul.mubr.f32.gmra.mrb[0].mxu0 %v356
          %v852 = vpop.f32.mrb[0].mxu0
          %v853 = vadd.f32 0.0, %v852
          %v854 = vpop.f32.mrb[0].mxu0
          %v855 = vadd.f32 0.0, %v854
          %856 = vmatprep.mubr.f32.mxu0 %v361
          %857 = vmatmul.mubr.f32.gmra.mrb[0].mxu0 %v360
          %v858 = vpop.f32.mrb[0].mxu0
          %v859 = vadd.f32 0.0, %v858
          %v860 = vpop.f32.mrb[0].mxu0
          %v861 = vadd.f32 0.0, %v860
          %862 = vmatprep.mubr.f32.mxu0 %v365
          %863 = vmatmul.mubr.f32.gmra.mrb[0].mxu0 %v364
          %v864 = vpop.f32.mrb[0].mxu0
          %v865 = vadd.f32 0.0, %v864
          %v866 = vpop.f32.mrb[0].mxu0
          %v867 = vadd.f32 0.0, %v866
          %868 = vmatprep.mubr.f32.mxu0 %v369
          %869 = vmatmul.mubr.f32.gmra.mrb[0].mxu0 %v368
          %v870 = vpop.f32.mrb[0].mxu0
          %v871 = vadd.f32 0.0, %v870
          %v872 = vpop.f32.mrb[0].mxu0
          %v873 = vadd.f32 0.0, %v872
          %874 = vmatprep.mubr.f32.mxu0 %v373
          %875 = vmatmul.mubr.f32.gmra.mrb[0].mxu0 %v372
          %v876 = vpop.f32.mrb[0].mxu0
          %v877 = vadd.f32 0.0, %v876
          %v878 = vpop.f32.mrb[0].mxu0
          %v879 = vadd.f32 0.0, %v878
          %880 = vmatprep.mubr.f32.mxu0 %v377
          %881 = vmatmul.mubr.f32.gmra.mrb[0].mxu0 %v376
          %v882 = vpop.f32.mrb[0].mxu0
          %v883 = vadd.f32 0.0, %v882
          %v884 = vpop.f32.mrb[0].mxu0
          %v885 = vadd.f32 0.0, %v884
          %886 = vmatprep.mubr.f32.mxu0 %v381
          %887 = vmatmul.mubr.f32.gmra.mrb[0].mxu0 %v380
          %v888 = vpop.f32.mrb[0].mxu0
          %v889 = vadd.f32 0.0, %v888
          %v890 = vpop.f32.mrb[0].mxu0
          %v891 = vadd.f32 0.0, %v890
          %892 = vmatprep.mubr.f32.mxu0 %v385
          %893 = vmatmul.mubr.f32.gmra.mrb[0].mxu0 %v384
          %v894 = vpop.f32.mrb[0].mxu0
          %v895 = vadd.f32 0.0, %v894
          %v896 = vpop.f32.mrb[0].mxu0
          %v897 = vadd.f32 0.0, %v896
          %898 = vmatprep.mubr.f32.mxu0 %v389
          %899 = vmatmul.mubr.f32.gmra.mrb[0].mxu0 %v388
          %v900 = vpop.f32.mrb[0].mxu0
          %v901 = vadd.f32 0.0, %v900
          %v902 = vpop.f32.mrb[0].mxu0
          %v903 = vadd.f32 0.0, %v902
          %904 = vmatprep.mubr.f32.mxu0 %v393
          %905 = vmatmul.mubr.f32.gmra.mrb[0].mxu0 %v392
          %v906 = vpop.f32.mrb[0].mxu0
          %v907 = vadd.f32 0.0, %v906
          %v908 = vpop.f32.mrb[0].mxu0
          %v909 = vadd.f32 0.0, %v908
          %910 = vmatprep.mubr.f32.mxu0 %v397
          %911 = vmatmul.mubr.f32.gmra.mrb[0].mxu0 %v396
          %v912 = vpop.f32.mrb[0].mxu0
          %v913 = vadd.f32 0.0, %v912
          %v914 = vpop.f32.mrb[0].mxu0
          %v915 = vadd.f32 0.0, %v914
          %916 = vmatprep.mubr.f32.mxu0 %v401
          %917 = vmatmul.mubr.f32.gmra.mrb[0].mxu0 %v400
          %v918 = vpop.f32.mrb[0].mxu0
          %v919 = vadd.f32 0.0, %v918
          %v920 = vpop.f32.mrb[0].mxu0
          %v921 = vadd.f32 0.0, %v920
          %922 = vmatprep.mubr.f32.mxu0 %v405
          %923 = vmatmul.mubr.f32.gmra.mrb[0].mxu0 %v404
          %v924 = vpop.f32.mrb[0].mxu0
          %v925 = vadd.f32 0.0, %v924
          %v926 = vpop.f32.mrb[0].mxu0
          %v927 = vadd.f32 0.0, %v926
          %928 = vmatprep.mubr.f32.mxu0 %v409
          %929 = vmatmul.mubr.f32.gmra.mrb[0].mxu0 %v408
          %v930 = vpop.f32.mrb[0].mxu0
          %v931 = vadd.f32 0.0, %v930
          %v932 = vpop.f32.mrb[0].mxu0
          %v933 = vadd.f32 0.0, %v932
          %934 = vmatprep.mubr.f32.mxu0 %v413
          %935 = vmatmul.mubr.f32.gmra.mrb[0].mxu0 %v412
          %v936 = vpop.f32.mrb[0].mxu0
          %v937 = vadd.f32 0.0, %v936
          %v938 = vpop.f32.mrb[0].mxu0
          %v939 = vadd.f32 0.0, %v938
          %940 = vmatprep.mubr.f32.mxu0 %v417
          %941 = vmatmul.mubr.f32.gmra.mrb[0].mxu0 %v416
          %v942 = vpop.f32.mrb[0].mxu0
          %v943 = vadd.f32 0.0, %v942
          %v944 = vpop.f32.mrb[0].mxu0
          %v945 = vadd.f32 0.0, %v944
          %946 = vmatprep.mubr.f32.mxu0 %v421
          %947 = vmatmul.mubr.f32.gmra.mrb[0].mxu0 %v420
          %v948 = vpop.f32.mrb[0].mxu0
          %v949 = vadd.f32 0.0, %v948
          %v950 = vpop.f32.mrb[0].mxu0
          %v951 = vadd.f32 0.0, %v950
          %952 = vmatprep.mubr.f32.mxu0 %v425
          %953 = vmatmul.mubr.f32.gmra.mrb[0].mxu0 %v424
          %v954 = vpop.f32.mrb[0].mxu0
          %v955 = vadd.f32 0.0, %v954
          %v956 = vpop.f32.mrb[0].mxu0
          %v957 = vadd.f32 0.0, %v956
          %958 = vmatprep.mubr.f32.mxu0 %v429
          %959 = vmatmul.mubr.f32.gmra.mrb[0].mxu0 %v428
          %v960 = vpop.f32.mrb[0].mxu0
          %v961 = vadd.f32 0.0, %v960
          %v962 = vpop.f32.mrb[0].mxu0
          %v963 = vadd.f32 0.0, %v962
          %964 = vmatprep.mubr.f32.mxu0 %v433
          %965 = vmatmul.mubr.f32.gmra.mrb[0].mxu0 %v432
          %v966 = vpop.f32.mrb[0].mxu0
          %v967 = vadd.f32 0.0, %v966
          %v968 = vpop.f32.mrb[0].mxu0
          %v969 = vadd.f32 0.0, %v968
          %970 = vmatprep.mubr.f32.mxu0 %v437
          %971 = vmatmul.mubr.f32.gmra.mrb[0].mxu0 %v436
          %v972 = vpop.f32.mrb[0].mxu0
          %v973 = vadd.f32 0.0, %v972
          %v974 = vpop.f32.mrb[0].mxu0
          %v975 = vadd.f32 0.0, %v974
          %976 = vmatprep.mubr.f32.mxu0 %v441
          %977 = vmatmul.mubr.f32.gmra.mrb[0].mxu0 %v440
          %v978 = vpop.f32.mrb[0].mxu0
          %v979 = vadd.f32 0.0, %v978
          %v980 = vpop.f32.mrb[0].mxu0
          %v981 = vadd.f32 0.0, %v980
          %982 = vmatprep.mubr.f32.mxu0 %v445
          %983 = vmatmul.mubr.f32.gmra.mrb[0].mxu0 %v444
          %v984 = vpop.f32.mrb[0].mxu0
          %v985 = vadd.f32 0.0, %v984
          %v986 = vpop.f32.mrb[0].mxu0
          %v987 = vadd.f32 0.0, %v986
          %988 = vmatprep.mubr.f32.mxu0 %v449
          %989 = vmatmul.mubr.f32.gmra.mrb[0].mxu0 %v448
          %v990 = vpop.f32.mrb[0].mxu0
          %v991 = vadd.f32 0.0, %v990
          %v992 = vpop.f32.mrb[0].mxu0
          %v993 = vadd.f32 0.0, %v992
          %994 = vmatprep.mubr.f32.mxu0 %v453
          %995 = vmatmul.mubr.f32.gmra.mrb[0].mxu0 %v452
          %v996 = vpop.f32.mrb[0].mxu0
          %v997 = vadd.f32 0.0, %v996
          %v998 = vpop.f32.mrb[0].mxu0
          %v999 = vadd.f32 0.0, %v998
          %1000 = vmatprep.mubr.f32.mxu0 %v457
          %1001 = vmatmul.mubr.f32.gmra.mrb[0].mxu0 %v456
          %v1002 = vpop.f32.mrb[0].mxu0
          %v1003 = vadd.f32 0.0, %v1002
          %v1004 = vpop.f32.mrb[0].mxu0
          %v1005 = vadd.f32 0.0, %v1004
          %1006 = vmatprep.mubr.f32.mxu0 %v461
          %1007 = vmatmul.mubr.f32.gmra.mrb[0].mxu0 %v460
          %v1008 = vpop.f32.mrb[0].mxu0
          %v1009 = vadd.f32 0.0, %v1008
          %v1010 = vpop.f32.mrb[0].mxu0
          %v1011 = vadd.f32 0.0, %v1010
          %1012 = vmatprep.mubr.f32.mxu0 %v465
          %1013 = vmatmul.mubr.f32.gmra.mrb[0].mxu0 %v464
          %v1014 = vpop.f32.mrb[0].mxu0
          %v1015 = vadd.f32 0.0, %v1014
          %v1016 = vpop.f32.mrb[0].mxu0
          %v1017 = vadd.f32 0.0, %v1016
          %1018 = vmatprep.mubr.f32.mxu0 %v469
          %1019 = vmatmul.mubr.f32.gmra.mrb[0].mxu0 %v468
          %v1020 = vpop.f32.mrb[0].mxu0
          %v1021 = vadd.f32 0.0, %v1020
          %v1022 = vpop.f32.mrb[0].mxu0
          %v1023 = vadd.f32 0.0, %v1022
          %1024 = vmatprep.mubr.f32.mxu0 %v473
          %1025 = vmatmul.mubr.f32.gmra.mrb[0].mxu0 %v472
          %v1026 = vpop.f32.mrb[0].mxu0
          %v1027 = vadd.f32 0.0, %v1026
          %v1028 = vpop.f32.mrb[0].mxu0
          %v1029 = vadd.f32 0.0, %v1028
          %1030 = vmatprep.mubr.f32.mxu0 %v477
          %1031 = vmatmul.mubr.f32.gmra.mrb[0].mxu0 %v476
          %v1032 = vpop.f32.mrb[0].mxu0
          %v1033 = vadd.f32 0.0, %v1032
          %v1034 = vpop.f32.mrb[0].mxu0
          %v1035 = vadd.f32 0.0, %v1034
          %1036 = vmatprep.mubr.f32.mxu0 %v481
          %1037 = vmatmul.mubr.f32.gmra.mrb[0].mxu0 %v480
          %v1038 = vpop.f32.mrb[0].mxu0
          %v1039 = vadd.f32 0.0, %v1038
          %v1040 = vpop.f32.mrb[0].mxu0
          %v1041 = vadd.f32 0.0, %v1040
          %1042 = vmatprep.mubr.f32.mxu0 %v485
          %1043 = vmatmul.mubr.f32.gmra.mrb[0].mxu0 %v484
          %v1044 = vpop.f32.mrb[0].mxu0
          %v1045 = vadd.f32 0.0, %v1044
          %v1046 = vpop.f32.mrb[0].mxu0
          %v1047 = vadd.f32 0.0, %v1046
          %1048 = vmatprep.mubr.f32.mxu0 %v489
          %1049 = vmatmul.mubr.f32.gmra.mrb[0].mxu0 %v488
          %v1050 = vpop.f32.mrb[0].mxu0
          %v1051 = vadd.f32 0.0, %v1050
          %v1052 = vpop.f32.mrb[0].mxu0
          %v1053 = vadd.f32 0.0, %v1052
          %1054 = vmatprep.mubr.f32.mxu0 %v493
          %1055 = vmatmul.mubr.f32.gmra.mrb[0].mxu0 %v492
          %v1056 = vpop.f32.mrb[0].mxu0
          %v1057 = vadd.f32 0.0, %v1056
          %v1058 = vpop.f32.mrb[0].mxu0
          %v1059 = vadd.f32 0.0, %v1058
          %1060 = vmatprep.mubr.f32.mxu0 %v497
          %1061 = vmatmul.mubr.f32.gmra.mrb[0].mxu0 %v496
          %v1062 = vpop.f32.mrb[0].mxu0
          %v1063 = vadd.f32 0.0, %v1062
          %v1064 = vpop.f32.mrb[0].mxu0
          %v1065 = vadd.f32 0.0, %v1064
          %1066 = vmatprep.mubr.f32.mxu0 %v501
          %1067 = vmatmul.mubr.f32.gmra.mrb[0].mxu0 %v500
          %v1068 = vpop.f32.mrb[0].mxu0
          %v1069 = vadd.f32 0.0, %v1068
          %v1070 = vpop.f32.mrb[0].mxu0
          %v1071 = vadd.f32 0.0, %v1070
          %1072 = vmatprep.mubr.f32.mxu0 %v505
          %1073 = vmatmul.mubr.f32.gmra.mrb[0].mxu0 %v504
          %v1074 = vpop.f32.mrb[0].mxu0
          %v1075 = vadd.f32 0.0, %v1074
          %v1076 = vpop.f32.mrb[0].mxu0
          %v1077 = vadd.f32 0.0, %v1076
          %1078 = vmatprep.mubr.f32.mxu0 %v509
          %1079 = vmatmul.mubr.f32.gmra.mrb[0].mxu0 %v508
          %v1080 = vpop.f32.mrb[0].mxu0
          %v1081 = vadd.f32 0.0, %v1080
          %v1082 = vpop.f32.mrb[0].mxu0
          %v1083 = vadd.f32 0.0, %v1082
          %1084 = vmatprep.mubr.f32.mxu0 %v513
          %1085 = vmatmul.mubr.f32.gmra.mrb[0].mxu0 %v512
          %v1086 = vpop.f32.mrb[0].mxu0
          %v1087 = vadd.f32 0.0, %v1086
          %v1088 = vpop.f32.mrb[0].mxu0
          %v1089 = vadd.f32 0.0, %v1088
          %1090 = vmatprep.mubr.f32.mxu0 %v517
          %1091 = vmatmul.mubr.f32.gmra.mrb[0].mxu0 %v516
          %v1092 = vpop.f32.mrb[0].mxu0
          %v1093 = vadd.f32 0.0, %v1092
          %v1094 = vpop.f32.mrb[0].mxu0
          %v1095 = vadd.f32 0.0, %v1094
          %1096 = vdwg.mxu0
          %1097 = vmatprep.subr.mxu0 %v585
          %1098 = vmatpush1.msra.mxu0 %v584
          %1099 = vmatprep.subr.mxu0 %v587
          %1100 = vmatpush1.msra.mxu0 %v586
          %1101 = vmatprep.subr.mxu0 %v589
          %1102 = vmatpush1.msra.mxu0 %v588
          %1103 = vmatprep.subr.mxu0 %v591
          %1104 = vmatpush1.msra.mxu0 %v590
          %1105 = vmatprep.subr.mxu0 %v593
          %1106 = vmatpush1.msra.mxu0 %v592
          %1107 = vmatprep.subr.mxu0 %v595
          %1108 = vmatpush1.msra.mxu0 %v594
          %1109 = vmatprep.subr.mxu0 %v597
          %1110 = vmatpush1.msra.mxu0 %v596
          %1111 = vmatprep.subr.mxu0 %v599
          %1112 = vmatpush1.msra.mxu0 %v598
          %1113 = vmatprep.subr.mxu0 %v601
          %1114 = vmatpush1.msra.mxu0 %v600
          %1115 = vmatprep.subr.mxu0 %v603
          %1116 = vmatpush1.msra.mxu0 %v602
          %1117 = vmatprep.subr.mxu0 %v605
          %1118 = vmatpush1.msra.mxu0 %v604
          %1119 = vmatprep.subr.mxu0 %v607
          %1120 = vmatpush1.msra.mxu0 %v606
          %1121 = vmatprep.subr.mxu0 %v609
          %1122 = vmatpush1.msra.mxu0 %v608
          %1123 = vmatprep.subr.mxu0 %v611
          %1124 = vmatpush1.msra.mxu0 %v610
          %1125 = vmatprep.subr.mxu0 %v613
          %1126 = vmatpush1.msra.mxu0 %v612
          %1127 = vmatprep.subr.mxu0 %v615
          %1128 = vmatpush1.msra.mxu0 %v614
          %1129 = vmatprep.subr.mxu0 %v617
          %1130 = vmatpush1.msra.mxu0 %v616
          %1131 = vmatprep.subr.mxu0 %v619
          %1132 = vmatpush1.msra.mxu0 %v618
          %1133 = vmatprep.subr.mxu0 %v621
          %1134 = vmatpush1.msra.mxu0 %v620
          %1135 = vmatprep.subr.mxu0 %v623
          %1136 = vmatpush1.msra.mxu0 %v622
          %1137 = vmatprep.subr.mxu0 %v625
          %1138 = vmatpush1.msra.mxu0 %v624
          %1139 = vmatprep.subr.mxu0 %v627
          %1140 = vmatpush1.msra.mxu0 %v626
          %1141 = vmatprep.subr.mxu0 %v629
          %1142 = vmatpush1.msra.mxu0 %v628
          %1143 = vmatprep.subr.mxu0 %v631
          %1144 = vmatpush1.msra.mxu0 %v630
          %1145 = vmatprep.subr.mxu0 %v633
          %1146 = vmatpush1.msra.mxu0 %v632
          %1147 = vmatprep.subr.mxu0 %v635
          %1148 = vmatpush1.msra.mxu0 %v634
          %1149 = vmatprep.subr.mxu0 %v637
          %1150 = vmatpush1.msra.mxu0 %v636
          %1151 = vmatprep.subr.mxu0 %v639
          %1152 = vmatpush1.msra.mxu0 %v638
          %1153 = vmatprep.subr.mxu0 %v641
          %1154 = vmatpush1.msra.mxu0 %v640
          %1155 = vmatprep.subr.mxu0 %v643
          %1156 = vmatpush1.msra.mxu0 %v642
          %1157 = vmatprep.subr.mxu0 %v645
          %1158 = vmatpush1.msra.mxu0 %v644
          %1159 = vmatprep.subr.mxu0 %v647
          %1160 = vmatpush1.msra.mxu0 %v646
          %1161 = vmatprep.mubr.f32.mxu0 %v267
          %1162 = vmatmul.mubr.f32.gmra.mrb[0].mxu0 %v266
          %v1163 = vpop.f32.mrb[0].mxu0
          %v1164 = vadd.f32 %v715, %v1163
          %v1165 = vpop.f32.mrb[0].mxu0
          %v1166 = vadd.f32 %v717, %v1165
          %1167 = vmatprep.mubr.f32.mxu0 %v271
          %1168 = vmatmul.mubr.f32.gmra.mrb[0].mxu0 %v270
          %v1169 = vpop.f32.mrb[0].mxu0
          %v1170 = vadd.f32 %v721, %v1169
          %v1171 = vpop.f32.mrb[0].mxu0
          %v1172 = vadd.f32 %v723, %v1171
          %1173 = vmatprep.mubr.f32.mxu0 %v275
          %1174 = vmatmul.mubr.f32.gmra.mrb[0].mxu0 %v274
          %v1175 = vpop.f32.mrb[0].mxu0
          %v1176 = vadd.f32 %v727, %v1175
          %v1177 = vpop.f32.mrb[0].mxu0
          %v1178 = vadd.f32 %v729, %v1177
          %1179 = vmatprep.mubr.f32.mxu0 %v279
          %1180 = vmatmul.mubr.f32.gmra.mrb[0].mxu0 %v278
          %v1181 = vpop.f32.mrb[0].mxu0
          %v1182 = vadd.f32 %v733, %v1181
          %v1183 = vpop.f32.mrb[0].mxu0
          %v1184 = vadd.f32 %v735, %v1183
          %1185 = vmatprep.mubr.f32.mxu0 %v283
          %1186 = vmatmul.mubr.f32.gmra.mrb[0].mxu0 %v282
          %v1187 = vpop.f32.mrb[0].mxu0
          %v1188 = vadd.f32 %v739, %v1187
          %v1189 = vpop.f32.mrb[0].mxu0
          %v1190 = vadd.f32 %v741, %v1189
          %1191 = vmatprep.mubr.f32.mxu0 %v287
          %1192 = vmatmul.mubr.f32.gmra.mrb[0].mxu0 %v286
          %v1193 = vpop.f32.mrb[0].mxu0
          %v1194 = vadd.f32 %v745, %v1193
          %v1195 = vpop.f32.mrb[0].mxu0
          %v1196 = vadd.f32 %v747, %v1195
          %1197 = vmatprep.mubr.f32.mxu0 %v291
          %1198 = vmatmul.mubr.f32.gmra.mrb[0].mxu0 %v290
          %v1199 = vpop.f32.mrb[0].mxu0
          %v1200 = vadd.f32 %v751, %v1199
          %v1201 = vpop.f32.mrb[0].mxu0
          %v1202 = vadd.f32 %v753, %v1201
          %1203 = vmatprep.mubr.f32.mxu0 %v295
          %1204 = vmatmul.mubr.f32.gmra.mrb[0].mxu0 %v294
          %v1205 = vpop.f32.mrb[0].mxu0
          %v1206 = vadd.f32 %v757, %v1205
          %v1207 = vpop.f32.mrb[0].mxu0
          %v1208 = vadd.f32 %v759, %v1207
          %1209 = vmatprep.mubr.f32.mxu0 %v299
          %1210 = vmatmul.mubr.f32.gmra.mrb[0].mxu0 %v298
          %v1211 = vpop.f32.mrb[0].mxu0
          %v1212 = vadd.f32 %v763, %v1211
          %v1213 = vpop.f32.mrb[0].mxu0
          %v1214 = vadd.f32 %v765, %v1213
          %1215 = vmatprep.mubr.f32.mxu0 %v303
          %1216 = vmatmul.mubr.f32.gmra.mrb[0].mxu0 %v302
          %v1217 = vpop.f32.mrb[0].mxu0
          %v1218 = vadd.f32 %v769, %v1217
          %v1219 = vpop.f32.mrb[0].mxu0
          %v1220 = vadd.f32 %v771, %v1219
          %1221 = vmatprep.mubr.f32.mxu0 %v307
          %1222 = vmatmul.mubr.f32.gmra.mrb[0].mxu0 %v306
          %v1223 = vpop.f32.mrb[0].mxu0
          %v1224 = vadd.f32 %v775, %v1223
          %v1225 = vpop.f32.mrb[0].mxu0
          %v1226 = vadd.f32 %v777, %v1225
          %1227 = vmatprep.mubr.f32.mxu0 %v311
          %1228 = vmatmul.mubr.f32.gmra.mrb[0].mxu0 %v310
          %v1229 = vpop.f32.mrb[0].mxu0
          %v1230 = vadd.f32 %v781, %v1229
          %v1231 = vpop.f32.mrb[0].mxu0
          %v1232 = vadd.f32 %v783, %v1231
          %1233 = vmatprep.mubr.f32.mxu0 %v315
          %1234 = vmatmul.mubr.f32.gmra.mrb[0].mxu0 %v314
          %v1235 = vpop.f32.mrb[0].mxu0
          %v1236 = vadd.f32 %v787, %v1235
          %v1237 = vpop.f32.mrb[0].mxu0
          %v1238 = vadd.f32 %v789, %v1237
          %1239 = vmatprep.mubr.f32.mxu0 %v319
          %1240 = vmatmul.mubr.f32.gmra.mrb[0].mxu0 %v318
          %v1241 = vpop.f32.mrb[0].mxu0
          %v1242 = vadd.f32 %v793, %v1241
          %v1243 = vpop.f32.mrb[0].mxu0
          %v1244 = vadd.f32 %v795, %v1243
          %1245 = vmatprep.mubr.f32.mxu0 %v323
          %1246 = vmatmul.mubr.f32.gmra.mrb[0].mxu0 %v322
          %v1247 = vpop.f32.mrb[0].mxu0
          %v1248 = vadd.f32 %v799, %v1247
          %v1249 = vpop.f32.mrb[0].mxu0
          %v1250 = vadd.f32 %v801, %v1249
          %1251 = vmatprep.mubr.f32.mxu0 %v327
          %1252 = vmatmul.mubr.f32.gmra.mrb[0].mxu0 %v326
          %v1253 = vpop.f32.mrb[0].mxu0
          %v1254 = vadd.f32 %v805, %v1253
          %v1255 = vpop.f32.mrb[0].mxu0
          %v1256 = vadd.f32 %v807, %v1255
          %1257 = vmatprep.mubr.f32.mxu0 %v331
          %1258 = vmatmul.mubr.f32.gmra.mrb[0].mxu0 %v330
          %v1259 = vpop.f32.mrb[0].mxu0
          %v1260 = vadd.f32 %v811, %v1259
          %v1261 = vpop.f32.mrb[0].mxu0
          %v1262 = vadd.f32 %v813, %v1261
          %1263 = vmatprep.mubr.f32.mxu0 %v335
          %1264 = vmatmul.mubr.f32.gmra.mrb[0].mxu0 %v334
          %v1265 = vpop.f32.mrb[0].mxu0
          %v1266 = vadd.f32 %v817, %v1265
          %v1267 = vpop.f32.mrb[0].mxu0
          %v1268 = vadd.f32 %v819, %v1267
          %1269 = vmatprep.mubr.f32.mxu0 %v339
          %1270 = vmatmul.mubr.f32.gmra.mrb[0].mxu0 %v338
          %v1271 = vpop.f32.mrb[0].mxu0
          %v1272 = vadd.f32 %v823, %v1271
          %v1273 = vpop.f32.mrb[0].mxu0
          %v1274 = vadd.f32 %v825, %v1273
          %1275 = vmatprep.mubr.f32.mxu0 %v343
          %1276 = vmatmul.mubr.f32.gmra.mrb[0].mxu0 %v342
          %v1277 = vpop.f32.mrb[0].mxu0
          %v1278 = vadd.f32 %v829, %v1277
          %v1279 = vpop.f32.mrb[0].mxu0
          %v1280 = vadd.f32 %v831, %v1279
          %1281 = vmatprep.mubr.f32.mxu0 %v347
          %1282 = vmatmul.mubr.f32.gmra.mrb[0].mxu0 %v346
          %v1283 = vpop.f32.mrb[0].mxu0
          %v1284 = vadd.f32 %v835, %v1283
          %v1285 = vpop.f32.mrb[0].mxu0
          %v1286 = vadd.f32 %v837, %v1285
          %1287 = vmatprep.mubr.f32.mxu0 %v351
          %1288 = vmatmul.mubr.f32.gmra.mrb[0].mxu0 %v350
          %v1289 = vpop.f32.mrb[0].mxu0
          %v1290 = vadd.f32 %v841, %v1289
          %v1291 = vpop.f32.mrb[0].mxu0
          %v1292 = vadd.f32 %v843, %v1291
          %1293 = vmatprep.mubr.f32.mxu0 %v355
          %1294 = vmatmul.mubr.f32.gmra.mrb[0].mxu0 %v354
          %v1295 = vpop.f32.mrb[0].mxu0
          %v1296 = vadd.f32 %v847, %v1295
          %v1297 = vpop.f32.mrb[0].mxu0
          %v1298 = vadd.f32 %v849, %v1297
          %1299 = vmatprep.mubr.f32.mxu0 %v359
          %1300 = vmatmul.mubr.f32.gmra.mrb[0].mxu0 %v358
          %v1301 = vpop.f32.mrb[0].mxu0
          %v1302 = vadd.f32 %v853, %v1301
          %v1303 = vpop.f32.mrb[0].mxu0
          %v1304 = vadd.f32 %v855, %v1303
          %1305 = vmatprep.mubr.f32.mxu0 %v363
          %1306 = vmatmul.mubr.f32.gmra.mrb[0].mxu0 %v362
          %v1307 = vpop.f32.mrb[0].mxu0
          %v1308 = vadd.f32 %v859, %v1307
          %v1309 = vpop.f32.mrb[0].mxu0
          %v1310 = vadd.f32 %v861, %v1309
          %1311 = vmatprep.mubr.f32.mxu0 %v367
          %1312 = vmatmul.mubr.f32.gmra.mrb[0].mxu0 %v366
          %v1313 = vpop.f32.mrb[0].mxu0
          %v1314 = vadd.f32 %v865, %v1313
          %v1315 = vpop.f32.mrb[0].mxu0
          %v1316 = vadd.f32 %v867, %v1315
          %1317 = vmatprep.mubr.f32.mxu0 %v371
          %1318 = vmatmul.mubr.f32.gmra.mrb[0].mxu0 %v370
          %v1319 = vpop.f32.mrb[0].mxu0
          %v1320 = vadd.f32 %v871, %v1319
          %v1321 = vpop.f32.mrb[0].mxu0
          %v1322 = vadd.f32 %v873, %v1321
          %1323 = vmatprep.mubr.f32.mxu0 %v375
          %1324 = vmatmul.mubr.f32.gmra.mrb[0].mxu0 %v374
          %v1325 = vpop.f32.mrb[0].mxu0
          %v1326 = vadd.f32 %v877, %v1325
          %v1327 = vpop.f32.mrb[0].mxu0
          %v1328 = vadd.f32 %v879, %v1327
          %1329 = vmatprep.mubr.f32.mxu0 %v379
          %1330 = vmatmul.mubr.f32.gmra.mrb[0].mxu0 %v378
          %v1331 = vpop.f32.mrb[0].mxu0
          %v1332 = vadd.f32 %v883, %v1331
          %v1333 = vpop.f32.mrb[0].mxu0
          %v1334 = vadd.f32 %v885, %v1333
          %1335 = vmatprep.mubr.f32.mxu0 %v383
          %1336 = vmatmul.mubr.f32.gmra.mrb[0].mxu0 %v382
          %v1337 = vpop.f32.mrb[0].mxu0
          %v1338 = vadd.f32 %v889, %v1337
          %v1339 = vpop.f32.mrb[0].mxu0
          %v1340 = vadd.f32 %v891, %v1339
          %1341 = vmatprep.mubr.f32.mxu0 %v387
          %1342 = vmatmul.mubr.f32.gmra.mrb[0].mxu0 %v386
          %v1343 = vpop.f32.mrb[0].mxu0
          %v1344 = vadd.f32 %v895, %v1343
          %v1345 = vpop.f32.mrb[0].mxu0
          %v1346 = vadd.f32 %v897, %v1345
          %1347 = vmatprep.mubr.f32.mxu0 %v391
          %1348 = vmatmul.mubr.f32.gmra.mrb[0].mxu0 %v390
          %v1349 = vpop.f32.mrb[0].mxu0
          %v1350 = vadd.f32 %v901, %v1349
          %v1351 = vpop.f32.mrb[0].mxu0
          %v1352 = vadd.f32 %v903, %v1351
          %1353 = vmatprep.mubr.f32.mxu0 %v395
          %1354 = vmatmul.mubr.f32.gmra.mrb[0].mxu0 %v394
          %v1355 = vpop.f32.mrb[0].mxu0
          %v1356 = vadd.f32 %v907, %v1355
          %v1357 = vpop.f32.mrb[0].mxu0
          %v1358 = vadd.f32 %v909, %v1357
          %1359 = vmatprep.mubr.f32.mxu0 %v399
          %1360 = vmatmul.mubr.f32.gmra.mrb[0].mxu0 %v398
          %v1361 = vpop.f32.mrb[0].mxu0
          %v1362 = vadd.f32 %v913, %v1361
          %v1363 = vpop.f32.mrb[0].mxu0
          %v1364 = vadd.f32 %v915, %v1363
          %1365 = vmatprep.mubr.f32.mxu0 %v403
          %1366 = vmatmul.mubr.f32.gmra.mrb[0].mxu0 %v402
          %v1367 = vpop.f32.mrb[0].mxu0
          %v1368 = vadd.f32 %v919, %v1367
          %v1369 = vpop.f32.mrb[0].mxu0
          %v1370 = vadd.f32 %v921, %v1369
          %1371 = vmatprep.mubr.f32.mxu0 %v407
          %1372 = vmatmul.mubr.f32.gmra.mrb[0].mxu0 %v406
          %v1373 = vpop.f32.mrb[0].mxu0
          %v1374 = vadd.f32 %v925, %v1373
          %v1375 = vpop.f32.mrb[0].mxu0
          %v1376 = vadd.f32 %v927, %v1375
          %1377 = vmatprep.mubr.f32.mxu0 %v411
          %1378 = vmatmul.mubr.f32.gmra.mrb[0].mxu0 %v410
          %v1379 = vpop.f32.mrb[0].mxu0
          %v1380 = vadd.f32 %v931, %v1379
          %v1381 = vpop.f32.mrb[0].mxu0
          %v1382 = vadd.f32 %v933, %v1381
          %1383 = vmatprep.mubr.f32.mxu0 %v415
          %1384 = vmatmul.mubr.f32.gmra.mrb[0].mxu0 %v414
          %v1385 = vpop.f32.mrb[0].mxu0
          %v1386 = vadd.f32 %v937, %v1385
          %v1387 = vpop.f32.mrb[0].mxu0
          %v1388 = vadd.f32 %v939, %v1387
          %1389 = vmatprep.mubr.f32.mxu0 %v419
          %1390 = vmatmul.mubr.f32.gmra.mrb[0].mxu0 %v418
          %v1391 = vpop.f32.mrb[0].mxu0
          %v1392 = vadd.f32 %v943, %v1391
          %v1393 = vpop.f32.mrb[0].mxu0
          %v1394 = vadd.f32 %v945, %v1393
          %1395 = vmatprep.mubr.f32.mxu0 %v423
          %1396 = vmatmul.mubr.f32.gmra.mrb[0].mxu0 %v422
          %v1397 = vpop.f32.mrb[0].mxu0
          %v1398 = vadd.f32 %v949, %v1397
          %v1399 = vpop.f32.mrb[0].mxu0
          %v1400 = vadd.f32 %v951, %v1399
          %1401 = vmatprep.mubr.f32.mxu0 %v427
          %1402 = vmatmul.mubr.f32.gmra.mrb[0].mxu0 %v426
          %v1403 = vpop.f32.mrb[0].mxu0
          %v1404 = vadd.f32 %v955, %v1403
          %v1405 = vpop.f32.mrb[0].mxu0
          %v1406 = vadd.f32 %v957, %v1405
          %1407 = vmatprep.mubr.f32.mxu0 %v431
          %1408 = vmatmul.mubr.f32.gmra.mrb[0].mxu0 %v430
          %v1409 = vpop.f32.mrb[0].mxu0
          %v1410 = vadd.f32 %v961, %v1409
          %v1411 = vpop.f32.mrb[0].mxu0
          %v1412 = vadd.f32 %v963, %v1411
          %1413 = vmatprep.mubr.f32.mxu0 %v435
          %1414 = vmatmul.mubr.f32.gmra.mrb[0].mxu0 %v434
          %v1415 = vpop.f32.mrb[0].mxu0
          %v1416 = vadd.f32 %v967, %v1415
          %v1417 = vpop.f32.mrb[0].mxu0
          %v1418 = vadd.f32 %v969, %v1417
          %1419 = vmatprep.mubr.f32.mxu0 %v439
          %1420 = vmatmul.mubr.f32.gmra.mrb[0].mxu0 %v438
          %v1421 = vpop.f32.mrb[0].mxu0
          %v1422 = vadd.f32 %v973, %v1421
          %v1423 = vpop.f32.mrb[0].mxu0
          %v1424 = vadd.f32 %v975, %v1423
          %1425 = vmatprep.mubr.f32.mxu0 %v443
          %1426 = vmatmul.mubr.f32.gmra.mrb[0].mxu0 %v442
          %v1427 = vpop.f32.mrb[0].mxu0
          %v1428 = vadd.f32 %v979, %v1427
          %v1429 = vpop.f32.mrb[0].mxu0
          %v1430 = vadd.f32 %v981, %v1429
          %1431 = vmatprep.mubr.f32.mxu0 %v447
          %1432 = vmatmul.mubr.f32.gmra.mrb[0].mxu0 %v446
          %v1433 = vpop.f32.mrb[0].mxu0
          %v1434 = vadd.f32 %v985, %v1433
          %v1435 = vpop.f32.mrb[0].mxu0
          %v1436 = vadd.f32 %v987, %v1435
          %1437 = vmatprep.mubr.f32.mxu0 %v451
          %1438 = vmatmul.mubr.f32.gmra.mrb[0].mxu0 %v450
          %v1439 = vpop.f32.mrb[0].mxu0
          %v1440 = vadd.f32 %v991, %v1439
          %v1441 = vpop.f32.mrb[0].mxu0
          %v1442 = vadd.f32 %v993, %v1441
          %1443 = vmatprep.mubr.f32.mxu0 %v455
          %1444 = vmatmul.mubr.f32.gmra.mrb[0].mxu0 %v454
          %v1445 = vpop.f32.mrb[0].mxu0
          %v1446 = vadd.f32 %v997, %v1445
          %v1447 = vpop.f32.mrb[0].mxu0
          %v1448 = vadd.f32 %v999, %v1447
          %1449 = vmatprep.mubr.f32.mxu0 %v459
          %1450 = vmatmul.mubr.f32.gmra.mrb[0].mxu0 %v458
          %v1451 = vpop.f32.mrb[0].mxu0
          %v1452 = vadd.f32 %v1003, %v1451
          %v1453 = vpop.f32.mrb[0].mxu0
          %v1454 = vadd.f32 %v1005, %v1453
          %1455 = vmatprep.mubr.f32.mxu0 %v463
          %1456 = vmatmul.mubr.f32.gmra.mrb[0].mxu0 %v462
          %v1457 = vpop.f32.mrb[0].mxu0
          %v1458 = vadd.f32 %v1009, %v1457
          %v1459 = vpop.f32.mrb[0].mxu0
          %v1460 = vadd.f32 %v1011, %v1459
          %1461 = vmatprep.mubr.f32.mxu0 %v467
          %1462 = vmatmul.mubr.f32.gmra.mrb[0].mxu0 %v466
          %v1463 = vpop.f32.mrb[0].mxu0
          %v1464 = vadd.f32 %v1015, %v1463
          %v1465 = vpop.f32.mrb[0].mxu0
          %v1466 = vadd.f32 %v1017, %v1465
          %1467 = vmatprep.mubr.f32.mxu0 %v471
          %1468 = vmatmul.mubr.f32.gmra.mrb[0].mxu0 %v470
          %v1469 = vpop.f32.mrb[0].mxu0
          %v1470 = vadd.f32 %v1021, %v1469
          %v1471 = vpop.f32.mrb[0].mxu0
          %v1472 = vadd.f32 %v1023, %v1471
          %1473 = vmatprep.mubr.f32.mxu0 %v475
          %1474 = vmatmul.mubr.f32.gmra.mrb[0].mxu0 %v474
          %v1475 = vpop.f32.mrb[0].mxu0
          %v1476 = vadd.f32 %v1027, %v1475
          %v1477 = vpop.f32.mrb[0].mxu0
          %v1478 = vadd.f32 %v1029, %v1477
          %1479 = vmatprep.mubr.f32.mxu0 %v479
          %1480 = vmatmul.mubr.f32.gmra.mrb[0].mxu0 %v478
          %v1481 = vpop.f32.mrb[0].mxu0
          %v1482 = vadd.f32 %v1033, %v1481
          %v1483 = vpop.f32.mrb[0].mxu0
          %v1484 = vadd.f32 %v1035, %v1483
          %1485 = vmatprep.mubr.f32.mxu0 %v483
          %1486 = vmatmul.mubr.f32.gmra.mrb[0].mxu0 %v482
          %v1487 = vpop.f32.mrb[0].mxu0
          %v1488 = vadd.f32 %v1039, %v1487
          %v1489 = vpop.f32.mrb[0].mxu0
          %v1490 = vadd.f32 %v1041, %v1489
          %1491 = vmatprep.mubr.f32.mxu0 %v487
          %1492 = vmatmul.mubr.f32.gmra.mrb[0].mxu0 %v486
          %v1493 = vpop.f32.mrb[0].mxu0
          %v1494 = vadd.f32 %v1045, %v1493
          %v1495 = vpop.f32.mrb[0].mxu0
          %v1496 = vadd.f32 %v1047, %v1495
          %1497 = vmatprep.mubr.f32.mxu0 %v491
          %1498 = vmatmul.mubr.f32.gmra.mrb[0].mxu0 %v490
          %v1499 = vpop.f32.mrb[0].mxu0
          %v1500 = vadd.f32 %v1051, %v1499
          %v1501 = vpop.f32.mrb[0].mxu0
          %v1502 = vadd.f32 %v1053, %v1501
          %1503 = vmatprep.mubr.f32.mxu0 %v495
          %1504 = vmatmul.mubr.f32.gmra.mrb[0].mxu0 %v494
          %v1505 = vpop.f32.mrb[0].mxu0
          %v1506 = vadd.f32 %v1057, %v1505
          %v1507 = vpop.f32.mrb[0].mxu0
          %v1508 = vadd.f32 %v1059, %v1507
          %1509 = vmatprep.mubr.f32.mxu0 %v499
          %1510 = vmatmul.mubr.f32.gmra.mrb[0].mxu0 %v498
          %v1511 = vpop.f32.mrb[0].mxu0
          %v1512 = vadd.f32 %v1063, %v1511
          %v1513 = vpop.f32.mrb[0].mxu0
          %v1514 = vadd.f32 %v1065, %v1513
          %1515 = vmatprep.mubr.f32.mxu0 %v503
          %1516 = vmatmul.mubr.f32.gmra.mrb[0].mxu0 %v502
          %v1517 = vpop.f32.mrb[0].mxu0
          %v1518 = vadd.f32 %v1069, %v1517
          %v1519 = vpop.f32.mrb[0].mxu0
          %v1520 = vadd.f32 %v1071, %v1519
          %1521 = vmatprep.mubr.f32.mxu0 %v507
          %1522 = vmatmul.mubr.f32.gmra.mrb[0].mxu0 %v506
          %v1523 = vpop.f32.mrb[0].mxu0
          %v1524 = vadd.f32 %v1075, %v1523
          %v1525 = vpop.f32.mrb[0].mxu0
          %v1526 = vadd.f32 %v1077, %v1525
          %1527 = vmatprep.mubr.f32.mxu0 %v511
          %1528 = vmatmul.mubr.f32.gmra.mrb[0].mxu0 %v510
          %v1529 = vpop.f32.mrb[0].mxu0
          %v1530 = vadd.f32 %v1081, %v1529
          %v1531 = vpop.f32.mrb[0].mxu0
          %v1532 = vadd.f32 %v1083, %v1531
          %1533 = vmatprep.mubr.f32.mxu0 %v515
          %1534 = vmatmul.mubr.f32.gmra.mrb[0].mxu0 %v514
          %v1535 = vpop.f32.mrb[0].mxu0
          %v1536 = vadd.f32 %v1087, %v1535
          %v1537 = vpop.f32.mrb[0].mxu0
          %v1538 = vadd.f32 %v1089, %v1537
          %1539 = vmatprep.mubr.f32.mxu0 %v519
          %1540 = vmatmul.mubr.f32.gmra.mrb[0].mxu0 %v518
          %v1541 = vpop.f32.mrb[0].mxu0
          %v1542 = vadd.f32 %v1093, %v1541
          %v1543 = vpop.f32.mrb[0].mxu0
          %v1544 = vadd.f32 %v1095, %v1543
          %1545 = vdwg.mxu0
          %1546 = vst [vmem:[#allocation2] sm:$0xff] %v1164
          %1547 = vst [vmem:[#allocation2 + $0x8] sm:$0xff] %v1166
          %1548 = vst [vmem:[#allocation2 + $0x10] sm:$0xff] %v1170
          %1549 = vst [vmem:[#allocation2 + $0x18] sm:$0xff] %v1172
          %1550 = vst [vmem:[#allocation2 + $0x20] sm:$0xff] %v1176
          %1551 = vst [vmem:[#allocation2 + $0x28] sm:$0xff] %v1178
          %1552 = vst [vmem:[#allocation2 + $0x30] sm:$0xff] %v1182
          %1553 = vst [vmem:[#allocation2 + $0x38] sm:$0xff] %v1184
          %1554 = vst [vmem:[#allocation2 + $0x40] sm:$0xff] %v1188
          %1555 = vst [vmem:[#allocation2 + $0x48] sm:$0xff] %v1190
          %1556 = vst [vmem:[#allocation2 + $0x50] sm:$0xff] %v1194
          %1557 = vst [vmem:[#allocation2 + $0x58] sm:$0xff] %v1196
          %1558 = vst [vmem:[#allocation2 + $0x60] sm:$0xff] %v1200
          %1559 = vst [vmem:[#allocation2 + $0x68] sm:$0xff] %v1202
          %1560 = vst [vmem:[#allocation2 + $0x70] sm:$0xff] %v1206
          %1561 = vst [vmem:[#allocation2 + $0x78] sm:$0xff] %v1208
          %1562 = vst [vmem:[#allocation2 + $0x80] sm:$0xff] %v1212
          %1563 = vst [vmem:[#allocation2 + $0x88] sm:$0xff] %v1214
          %1564 = vst [vmem:[#allocation2 + $0x90] sm:$0xff] %v1218
          %1565 = vst [vmem:[#allocation2 + $0x98] sm:$0xff] %v1220
          %1566 = vst [vmem:[#allocation2 + $0xa0] sm:$0xff] %v1224
          %1567 = vst [vmem:[#allocation2 + $0xa8] sm:$0xff] %v1226
          %1568 = vst [vmem:[#allocation2 + $0xb0] sm:$0xff] %v1230
          %1569 = vst [vmem:[#allocation2 + $0xb8] sm:$0xff] %v1232
          %1570 = vst [vmem:[#allocation2 + $0xc0] sm:$0xff] %v1236
          %1571 = vst [vmem:[#allocation2 + $0xc8] sm:$0xff] %v1238
          %1572 = vst [vmem:[#allocation2 + $0xd0] sm:$0xff] %v1242
          %1573 = vst [vmem:[#allocation2 + $0xd8] sm:$0xff] %v1244
          %1574 = vst [vmem:[#allocation2 + $0xe0] sm:$0xff] %v1248
          %1575 = vst [vmem:[#allocation2 + $0xe8] sm:$0xff] %v1250
          %1576 = vst [vmem:[#allocation2 + $0xf0] sm:$0xff] %v1254
          %1577 = vst [vmem:[#allocation2 + $0xf8] sm:$0xff] %v1256
          %1578 = vst [vmem:[#allocation2 + $0x100] sm:$0xff] %v1260
          %1579 = vst [vmem:[#allocation2 + $0x108] sm:$0xff] %v1262
          %1580 = vst [vmem:[#allocation2 + $0x110] sm:$0xff] %v1266
          %1581 = vst [vmem:[#allocation2 + $0x118] sm:$0xff] %v1268
          %1582 = vst [vmem:[#allocation2 + $0x120] sm:$0xff] %v1272
          %1583 = vst [vmem:[#allocation2 + $0x128] sm:$0xff] %v1274
          %1584 = vst [vmem:[#allocation2 + $0x130] sm:$0xff] %v1278
          %1585 = vst [vmem:[#allocation2 + $0x138] sm:$0xff] %v1280
          %1586 = vst [vmem:[#allocation2 + $0x140] sm:$0xff] %v1284
          %1587 = vst [vmem:[#allocation2 + $0x148] sm:$0xff] %v1286
          %1588 = vst [vmem:[#allocation2 + $0x150] sm:$0xff] %v1290
          %1589 = vst [vmem:[#allocation2 + $0x158] sm:$0xff] %v1292
          %1590 = vst [vmem:[#allocation2 + $0x160] sm:$0xff] %v1296
          %1591 = vst [vmem:[#allocation2 + $0x168] sm:$0xff] %v1298
          %1592 = vst [vmem:[#allocation2 + $0x170] sm:$0xff] %v1302
          %1593 = vst [vmem:[#allocation2 + $0x178] sm:$0xff] %v1304
          %1594 = vst [vmem:[#allocation2 + $0x180] sm:$0xff] %v1308
          %1595 = vst [vmem:[#allocation2 + $0x188] sm:$0xff] %v1310
          %1596 = vst [vmem:[#allocation2 + $0x190] sm:$0xff] %v1314
          %1597 = vst [vmem:[#allocation2 + $0x198] sm:$0xff] %v1316
          %1598 = vst [vmem:[#allocation2 + $0x1a0] sm:$0xff] %v1320
          %1599 = vst [vmem:[#allocation2 + $0x1a8] sm:$0xff] %v1322
          %1600 = vst [vmem:[#allocation2 + $0x1b0] sm:$0xff] %v1326
          %1601 = vst [vmem:[#allocation2 + $0x1b8] sm:$0xff] %v1328
          %1602 = vst [vmem:[#allocation2 + $0x1c0] sm:$0xff] %v1332
          %1603 = vst [vmem:[#allocation2 + $0x1c8] sm:$0xff] %v1334
          %1604 = vst [vmem:[#allocation2 + $0x1d0] sm:$0xff] %v1338
          %1605 = vst [vmem:[#allocation2 + $0x1d8] sm:$0xff] %v1340
          %1606 = vst [vmem:[#allocation2 + $0x1e0] sm:$0xff] %v1344
          %1607 = vst [vmem:[#allocation2 + $0x1e8] sm:$0xff] %v1346
          %1608 = vst [vmem:[#allocation2 + $0x1f0] sm:$0xff] %v1350
          %1609 = vst [vmem:[#allocation2 + $0x1f8] sm:$0xff] %v1352
          %1610 = vst [vmem:[#allocation2 + $0x200] sm:$0xff] %v1356
          %1611 = vst [vmem:[#allocation2 + $0x208] sm:$0xff] %v1358
          %1612 = vst [vmem:[#allocation2 + $0x210] sm:$0xff] %v1362
          %1613 = vst [vmem:[#allocation2 + $0x218] sm:$0xff] %v1364
          %1614 = vst [vmem:[#allocation2 + $0x220] sm:$0xff] %v1368
          %1615 = vst [vmem:[#allocation2 + $0x228] sm:$0xff] %v1370
          %1616 = vst [vmem:[#allocation2 + $0x230] sm:$0xff] %v1374
          %1617 = vst [vmem:[#allocation2 + $0x238] sm:$0xff] %v1376
          %1618 = vst [vmem:[#allocation2 + $0x240] sm:$0xff] %v1380
          %1619 = vst [vmem:[#allocation2 + $0x248] sm:$0xff] %v1382
          %1620 = vst [vmem:[#allocation2 + $0x250] sm:$0xff] %v1386
          %1621 = vst [vmem:[#allocation2 + $0x258] sm:$0xff] %v1388
          %1622 = vst [vmem:[#allocation2 + $0x260] sm:$0xff] %v1392
          %1623 = vst [vmem:[#allocation2 + $0x268] sm:$0xff] %v1394
          %1624 = vst [vmem:[#allocation2 + $0x270] sm:$0xff] %v1398
          %1625 = vst [vmem:[#allocation2 + $0x278] sm:$0xff] %v1400
          %1626 = vst [vmem:[#allocation2 + $0x280] sm:$0xff] %v1404
          %1627 = vst [vmem:[#allocation2 + $0x288] sm:$0xff] %v1406
          %1628 = vst [vmem:[#allocation2 + $0x290] sm:$0xff] %v1410
          %1629 = vst [vmem:[#allocation2 + $0x298] sm:$0xff] %v1412
          %1630 = vst [vmem:[#allocation2 + $0x2a0] sm:$0xff] %v1416
          %1631 = vst [vmem:[#allocation2 + $0x2a8] sm:$0xff] %v1418
          %1632 = vst [vmem:[#allocation2 + $0x2b0] sm:$0xff] %v1422
          %1633 = vst [vmem:[#allocation2 + $0x2b8] sm:$0xff] %v1424
          %1634 = vst [vmem:[#allocation2 + $0x2c0] sm:$0xff] %v1428
          %1635 = vst [vmem:[#allocation2 + $0x2c8] sm:$0xff] %v1430
          %1636 = vst [vmem:[#allocation2 + $0x2d0] sm:$0xff] %v1434
          %1637 = vst [vmem:[#allocation2 + $0x2d8] sm:$0xff] %v1436
          %1638 = vst [vmem:[#allocation2 + $0x2e0] sm:$0xff] %v1440
          %1639 = vst [vmem:[#allocation2 + $0x2e8] sm:$0xff] %v1442
          %1640 = vst [vmem:[#allocation2 + $0x2f0] sm:$0xff] %v1446
          %1641 = vst [vmem:[#allocation2 + $0x2f8] sm:$0xff] %v1448
          %1642 = vst [vmem:[#allocation2 + $0x300] sm:$0xff] %v1452
          %1643 = vst [vmem:[#allocation2 + $0x308] sm:$0xff] %v1454
          %1644 = vst [vmem:[#allocation2 + $0x310] sm:$0xff] %v1458
          %1645 = vst [vmem:[#allocation2 + $0x318] sm:$0xff] %v1460
          %1646 = vst [vmem:[#allocation2 + $0x320] sm:$0xff] %v1464
          %1647 = vst [vmem:[#allocation2 + $0x328] sm:$0xff] %v1466
          %1648 = vst [vmem:[#allocation2 + $0x330] sm:$0xff] %v1470
          %1649 = vst [vmem:[#allocation2 + $0x338] sm:$0xff] %v1472
          %1650 = vst [vmem:[#allocation2 + $0x340] sm:$0xff] %v1476
          %1651 = vst [vmem:[#allocation2 + $0x348] sm:$0xff] %v1478
          %1652 = vst [vmem:[#allocation2 + $0x350] sm:$0xff] %v1482
          %1653 = vst [vmem:[#allocation2 + $0x358] sm:$0xff] %v1484
          %1654 = vst [vmem:[#allocation2 + $0x360] sm:$0xff] %v1488
          %1655 = vst [vmem:[#allocation2 + $0x368] sm:$0xff] %v1490
          %1656 = vst [vmem:[#allocation2 + $0x370] sm:$0xff] %v1494
          %1657 = vst [vmem:[#allocation2 + $0x378] sm:$0xff] %v1496
          %1658 = vst [vmem:[#allocation2 + $0x380] sm:$0xff] %v1500
          %1659 = vst [vmem:[#allocation2 + $0x388] sm:$0xff] %v1502
          %1660 = vst [vmem:[#allocation2 + $0x390] sm:$0xff] %v1506
          %1661 = vst [vmem:[#allocation2 + $0x398] sm:$0xff] %v1508
          %1662 = vst [vmem:[#allocation2 + $0x3a0] sm:$0xff] %v1512
          %1663 = vst [vmem:[#allocation2 + $0x3a8] sm:$0xff] %v1514
          %1664 = vst [vmem:[#allocation2 + $0x3b0] sm:$0xff] %v1518
          %1665 = vst [vmem:[#allocation2 + $0x3b8] sm:$0xff] %v1520
          %1666 = vst [vmem:[#allocation2 + $0x3c0] sm:$0xff] %v1524
          %1667 = vst [vmem:[#allocation2 + $0x3c8] sm:$0xff] %v1526
          %1668 = vst [vmem:[#allocation2 + $0x3d0] sm:$0xff] %v1530
          %1669 = vst [vmem:[#allocation2 + $0x3d8] sm:$0xff] %v1532
          %1670 = vst [vmem:[#allocation2 + $0x3e0] sm:$0xff] %v1536
          %1671 = vst [vmem:[#allocation2 + $0x3e8] sm:$0xff] %v1538
          %1672 = vst [vmem:[#allocation2 + $0x3f0] sm:$0xff] %v1542
          %1673 = vst [vmem:[#allocation2 + $0x3f8] sm:$0xff] %v1544
        $region48: #{tpu_custom_call.1} parent=31 // pred_fallthru
          _
        %s1674 = smul.u32 %s26, 256
        %s1675 = sshra.s32 %s1674, 3
        %s1676 = sand.u32 %s1674, 7
        %s1677 = smul.u32 %s1675, 2
        %s1678 = smul.addr %s1677, 8
        %s1679 = scalar_lea.vmem [#allocation2], %s1678
        %v1680 = vld [vmem:[%s1679] sm:$0xff]
        %v1681 = vld [vmem:[%s1679 + $0x8] sm:$0xff]
        %v1682 = vld [vmem:[%s1679 + $0x10] sm:$0xff]
        %v1683 = vld [vmem:[%s1679 + $0x18] sm:$0xff]
        %v1684 = vld [vmem:[%s1679 + $0x20] sm:$0xff]
        %v1685 = vld [vmem:[%s1679 + $0x28] sm:$0xff]
        %v1686 = vld [vmem:[%s1679 + $0x30] sm:$0xff]
        %v1687 = vld [vmem:[%s1679 + $0x38] sm:$0xff]
        %v1688 = vld [vmem:[%s1679 + $0x40] sm:$0xff]
        %v1689 = vld [vmem:[%s1679 + $0x48] sm:$0xff]
        %v1690 = vld [vmem:[%s1679 + $0x50] sm:$0xff]
        %v1691 = vld [vmem:[%s1679 + $0x58] sm:$0xff]
        %v1692 = vld [vmem:[%s1679 + $0x60] sm:$0xff]
        %v1693 = vld [vmem:[%s1679 + $0x68] sm:$0xff]
        %v1694 = vld [vmem:[%s1679 + $0x70] sm:$0xff]
        %v1695 = vld [vmem:[%s1679 + $0x78] sm:$0xff]
        %v1696 = vld [vmem:[%s1679 + $0x80] sm:$0xff]
        %v1697 = vld [vmem:[%s1679 + $0x88] sm:$0xff]
        %v1698 = vld [vmem:[%s1679 + $0x90] sm:$0xff]
        %v1699 = vld [vmem:[%s1679 + $0x98] sm:$0xff]
        %v1700 = vld [vmem:[%s1679 + $0xa0] sm:$0xff]
        %v1701 = vld [vmem:[%s1679 + $0xa8] sm:$0xff]
        %v1702 = vld [vmem:[%s1679 + $0xb0] sm:$0xff]
        %v1703 = vld [vmem:[%s1679 + $0xb8] sm:$0xff]
        %v1704 = vld [vmem:[%s1679 + $0xc0] sm:$0xff]
        %v1705 = vld [vmem:[%s1679 + $0xc8] sm:$0xff]
        %v1706 = vld [vmem:[%s1679 + $0xd0] sm:$0xff]
        %v1707 = vld [vmem:[%s1679 + $0xd8] sm:$0xff]
        %v1708 = vld [vmem:[%s1679 + $0xe0] sm:$0xff]
        %v1709 = vld [vmem:[%s1679 + $0xe8] sm:$0xff]
        %v1710 = vld [vmem:[%s1679 + $0xf0] sm:$0xff]
        %v1711 = vld [vmem:[%s1679 + $0xf8] sm:$0xff]
        %v1712 = vld [vmem:[%s1679 + $0x100] sm:$0xff]
        %v1713 = vld [vmem:[%s1679 + $0x108] sm:$0xff]
        %v1714 = vld [vmem:[%s1679 + $0x110] sm:$0xff]
        %v1715 = vld [vmem:[%s1679 + $0x118] sm:$0xff]
        %v1716 = vld [vmem:[%s1679 + $0x120] sm:$0xff]
        %v1717 = vld [vmem:[%s1679 + $0x128] sm:$0xff]
        %v1718 = vld [vmem:[%s1679 + $0x130] sm:$0xff]
        %v1719 = vld [vmem:[%s1679 + $0x138] sm:$0xff]
        %v1720 = vld [vmem:[%s1679 + $0x140] sm:$0xff]
        %v1721 = vld [vmem:[%s1679 + $0x148] sm:$0xff]
        %v1722 = vld [vmem:[%s1679 + $0x150] sm:$0xff]
        %v1723 = vld [vmem:[%s1679 + $0x158] sm:$0xff]
        %v1724 = vld [vmem:[%s1679 + $0x160] sm:$0xff]
        %v1725 = vld [vmem:[%s1679 + $0x168] sm:$0xff]
        %v1726 = vld [vmem:[%s1679 + $0x170] sm:$0xff]
        %v1727 = vld [vmem:[%s1679 + $0x178] sm:$0xff]
        %v1728 = vld [vmem:[%s1679 + $0x180] sm:$0xff]
        %v1729 = vld [vmem:[%s1679 + $0x188] sm:$0xff]
        %v1730 = vld [vmem:[%s1679 + $0x190] sm:$0xff]
        %v1731 = vld [vmem:[%s1679 + $0x198] sm:$0xff]
        %v1732 = vld [vmem:[%s1679 + $0x1a0] sm:$0xff]
        %v1733 = vld [vmem:[%s1679 + $0x1a8] sm:$0xff]
        %v1734 = vld [vmem:[%s1679 + $0x1b0] sm:$0xff]
        %v1735 = vld [vmem:[%s1679 + $0x1b8] sm:$0xff]
        %v1736 = vld [vmem:[%s1679 + $0x1c0] sm:$0xff]
        %v1737 = vld [vmem:[%s1679 + $0x1c8] sm:$0xff]
        %v1738 = vld [vmem:[%s1679 + $0x1d0] sm:$0xff]
        %v1739 = vld [vmem:[%s1679 + $0x1d8] sm:$0xff]
        %v1740 = vld [vmem:[%s1679 + $0x1e0] sm:$0xff]
        %v1741 = vld [vmem:[%s1679 + $0x1e8] sm:$0xff]
        %v1742 = vld [vmem:[%s1679 + $0x1f0] sm:$0xff]
        %v1743 = vld [vmem:[%s1679 + $0x1f8] sm:$0xff]
        %v1744 = vld [vmem:[%s228] sm:$0xff]
        %v1745 = vld [vmem:[%s228 + $0x8] sm:$0xff]
        %v1746 = vld [vmem:[%s228 + $0x10] sm:$0xff]
        %v1747 = vld [vmem:[%s228 + $0x18] sm:$0xff]
        %v1748 = vld [vmem:[%s228 + $0x20] sm:$0xff]
        %v1749 = vld [vmem:[%s228 + $0x28] sm:$0xff]
        %v1750 = vld [vmem:[%s228 + $0x30] sm:$0xff]
        %v1751 = vld [vmem:[%s228 + $0x38] sm:$0xff]
        %v1752 = vld [vmem:[%s228 + $0x40] sm:$0xff]
        %v1753 = vld [vmem:[%s228 + $0x48] sm:$0xff]
        %v1754 = vld [vmem:[%s228 + $0x50] sm:$0xff]
        %v1755 = vld [vmem:[%s228 + $0x58] sm:$0xff]
        %v1756 = vld [vmem:[%s228 + $0x60] sm:$0xff]
        %v1757 = vld [vmem:[%s228 + $0x68] sm:$0xff]
        %v1758 = vld [vmem:[%s228 + $0x70] sm:$0xff]
        %v1759 = vld [vmem:[%s228 + $0x78] sm:$0xff]
        %v1760 = vld [vmem:[%s228 + $0x80] sm:$0xff]
        %v1761 = vld [vmem:[%s228 + $0x88] sm:$0xff]
        %v1762 = vld [vmem:[%s228 + $0x90] sm:$0xff]
        %v1763 = vld [vmem:[%s228 + $0x98] sm:$0xff]
        %v1764 = vld [vmem:[%s228 + $0xa0] sm:$0xff]
        %v1765 = vld [vmem:[%s228 + $0xa8] sm:$0xff]
        %v1766 = vld [vmem:[%s228 + $0xb0] sm:$0xff]
        %v1767 = vld [vmem:[%s228 + $0xb8] sm:$0xff]
        %v1768 = vld [vmem:[%s228 + $0xc0] sm:$0xff]
        %v1769 = vld [vmem:[%s228 + $0xc8] sm:$0xff]
        %v1770 = vld [vmem:[%s228 + $0xd0] sm:$0xff]
        %v1771 = vld [vmem:[%s228 + $0xd8] sm:$0xff]
        %v1772 = vld [vmem:[%s228 + $0xe0] sm:$0xff]
        %v1773 = vld [vmem:[%s228 + $0xe8] sm:$0xff]
        %v1774 = vld [vmem:[%s228 + $0xf0] sm:$0xff]
        %v1775 = vld [vmem:[%s228 + $0xf8] sm:$0xff]
        %v1776 = vld [vmem:[%s228 + $0x100] sm:$0xff]
        %v1777 = vld [vmem:[%s228 + $0x108] sm:$0xff]
        %v1778 = vld [vmem:[%s228 + $0x110] sm:$0xff]
        %v1779 = vld [vmem:[%s228 + $0x118] sm:$0xff]
        %v1780 = vld [vmem:[%s228 + $0x120] sm:$0xff]
        %v1781 = vld [vmem:[%s228 + $0x128] sm:$0xff]
        %v1782 = vld [vmem:[%s228 + $0x130] sm:$0xff]
        %v1783 = vld [vmem:[%s228 + $0x138] sm:$0xff]
        %v1784 = vld [vmem:[%s228 + $0x140] sm:$0xff]
        %v1785 = vld [vmem:[%s228 + $0x148] sm:$0xff]
        %v1786 = vld [vmem:[%s228 + $0x150] sm:$0xff]
        %v1787 = vld [vmem:[%s228 + $0x158] sm:$0xff]
        %v1788 = vld [vmem:[%s228 + $0x160] sm:$0xff]
        %v1789 = vld [vmem:[%s228 + $0x168] sm:$0xff]
        %v1790 = vld [vmem:[%s228 + $0x170] sm:$0xff]
        %v1791 = vld [vmem:[%s228 + $0x178] sm:$0xff]
        %v1792 = vld [vmem:[%s228 + $0x180] sm:$0xff]
        %v1793 = vld [vmem:[%s228 + $0x188] sm:$0xff]
        %v1794 = vld [vmem:[%s228 + $0x190] sm:$0xff]
        %v1795 = vld [vmem:[%s228 + $0x198] sm:$0xff]
        %v1796 = vld [vmem:[%s228 + $0x1a0] sm:$0xff]
        %v1797 = vld [vmem:[%s228 + $0x1a8] sm:$0xff]
        %v1798 = vld [vmem:[%s228 + $0x1b0] sm:$0xff]
        %v1799 = vld [vmem:[%s228 + $0x1b8] sm:$0xff]
        %v1800 = vld [vmem:[%s228 + $0x1c0] sm:$0xff]
        %v1801 = vld [vmem:[%s228 + $0x1c8] sm:$0xff]
        %v1802 = vld [vmem:[%s228 + $0x1d0] sm:$0xff]
        %v1803 = vld [vmem:[%s228 + $0x1d8] sm:$0xff]
        %v1804 = vld [vmem:[%s228 + $0x1e0] sm:$0xff]
        %v1805 = vld [vmem:[%s228 + $0x1e8] sm:$0xff]
        %v1806 = vld [vmem:[%s228 + $0x1f0] sm:$0xff]
        %v1807 = vld [vmem:[%s228 + $0x1f8] sm:$0xff]
        %v1808 = vld [vmem:[%s228 + $0x200] sm:$0xff]
        %v1809 = vld [vmem:[%s228 + $0x208] sm:$0xff]
        %v1810 = vld [vmem:[%s228 + $0x210] sm:$0xff]
        %v1811 = vld [vmem:[%s228 + $0x218] sm:$0xff]
        %v1812 = vld [vmem:[%s228 + $0x220] sm:$0xff]
        %v1813 = vld [vmem:[%s228 + $0x228] sm:$0xff]
        %v1814 = vld [vmem:[%s228 + $0x230] sm:$0xff]
        %v1815 = vld [vmem:[%s228 + $0x238] sm:$0xff]
        %v1816 = vld [vmem:[%s228 + $0x240] sm:$0xff]
        %v1817 = vld [vmem:[%s228 + $0x248] sm:$0xff]
        %v1818 = vld [vmem:[%s228 + $0x250] sm:$0xff]
        %v1819 = vld [vmem:[%s228 + $0x258] sm:$0xff]
        %v1820 = vld [vmem:[%s228 + $0x260] sm:$0xff]
        %v1821 = vld [vmem:[%s228 + $0x268] sm:$0xff]
        %v1822 = vld [vmem:[%s228 + $0x270] sm:$0xff]
        %v1823 = vld [vmem:[%s228 + $0x278] sm:$0xff]
        %v1824 = vld [vmem:[%s228 + $0x280] sm:$0xff]
        %v1825 = vld [vmem:[%s228 + $0x288] sm:$0xff]
        %v1826 = vld [vmem:[%s228 + $0x290] sm:$0xff]
        %v1827 = vld [vmem:[%s228 + $0x298] sm:$0xff]
        %v1828 = vld [vmem:[%s228 + $0x2a0] sm:$0xff]
        %v1829 = vld [vmem:[%s228 + $0x2a8] sm:$0xff]
        %v1830 = vld [vmem:[%s228 + $0x2b0] sm:$0xff]
        %v1831 = vld [vmem:[%s228 + $0x2b8] sm:$0xff]
        %v1832 = vld [vmem:[%s228 + $0x2c0] sm:$0xff]
        %v1833 = vld [vmem:[%s228 + $0x2c8] sm:$0xff]
        %v1834 = vld [vmem:[%s228 + $0x2d0] sm:$0xff]
        %v1835 = vld [vmem:[%s228 + $0x2d8] sm:$0xff]
        %v1836 = vld [vmem:[%s228 + $0x2e0] sm:$0xff]
        %v1837 = vld [vmem:[%s228 + $0x2e8] sm:$0xff]
        %v1838 = vld [vmem:[%s228 + $0x2f0] sm:$0xff]
        %v1839 = vld [vmem:[%s228 + $0x2f8] sm:$0xff]
        %v1840 = vld [vmem:[%s228 + $0x300] sm:$0xff]
        %v1841 = vld [vmem:[%s228 + $0x308] sm:$0xff]
        %v1842 = vld [vmem:[%s228 + $0x310] sm:$0xff]
        %v1843 = vld [vmem:[%s228 + $0x318] sm:$0xff]
        %v1844 = vld [vmem:[%s228 + $0x320] sm:$0xff]
        %v1845 = vld [vmem:[%s228 + $0x328] sm:$0xff]
        %v1846 = vld [vmem:[%s228 + $0x330] sm:$0xff]
        %v1847 = vld [vmem:[%s228 + $0x338] sm:$0xff]
        %v1848 = vld [vmem:[%s228 + $0x340] sm:$0xff]
        %v1849 = vld [vmem:[%s228 + $0x348] sm:$0xff]
        %v1850 = vld [vmem:[%s228 + $0x350] sm:$0xff]
        %v1851 = vld [vmem:[%s228 + $0x358] sm:$0xff]
        %v1852 = vld [vmem:[%s228 + $0x360] sm:$0xff]
        %v1853 = vld [vmem:[%s228 + $0x368] sm:$0xff]
        %v1854 = vld [vmem:[%s228 + $0x370] sm:$0xff]
        %v1855 = vld [vmem:[%s228 + $0x378] sm:$0xff]
        %v1856 = vld [vmem:[%s228 + $0x380] sm:$0xff]
        %v1857 = vld [vmem:[%s228 + $0x388] sm:$0xff]
        %v1858 = vld [vmem:[%s228 + $0x390] sm:$0xff]
        %v1859 = vld [vmem:[%s228 + $0x398] sm:$0xff]
        %v1860 = vld [vmem:[%s228 + $0x3a0] sm:$0xff]
        %v1861 = vld [vmem:[%s228 + $0x3a8] sm:$0xff]
        %v1862 = vld [vmem:[%s228 + $0x3b0] sm:$0xff]
        %v1863 = vld [vmem:[%s228 + $0x3b8] sm:$0xff]
        %v1864 = vld [vmem:[%s228 + $0x3c0] sm:$0xff]
        %v1865 = vld [vmem:[%s228 + $0x3c8] sm:$0xff]
        %v1866 = vld [vmem:[%s228 + $0x3d0] sm:$0xff]
        %v1867 = vld [vmem:[%s228 + $0x3d8] sm:$0xff]
        %v1868 = vld [vmem:[%s228 + $0x3e0] sm:$0xff]
        %v1869 = vld [vmem:[%s228 + $0x3e8] sm:$0xff]
        %v1870 = vld [vmem:[%s228 + $0x3f0] sm:$0xff]
        %v1871 = vld [vmem:[%s228 + $0x3f8] sm:$0xff]
        %v1872 = vld [vmem:[#allocation2] sm:$0xff]
        %v1873 = vld [vmem:[#allocation2 + $0x8] sm:$0xff]
        %v1874 = vld [vmem:[#allocation2 + $0x10] sm:$0xff]
        %v1875 = vld [vmem:[#allocation2 + $0x18] sm:$0xff]
        %v1876 = vld [vmem:[#allocation2 + $0x20] sm:$0xff]
        %v1877 = vld [vmem:[#allocation2 + $0x28] sm:$0xff]
        %v1878 = vld [vmem:[#allocation2 + $0x30] sm:$0xff]
        %v1879 = vld [vmem:[#allocation2 + $0x38] sm:$0xff]
        %v1880 = vld [vmem:[#allocation2 + $0x40] sm:$0xff]
        %v1881 = vld [vmem:[#allocation2 + $0x48] sm:$0xff]
        %v1882 = vld [vmem:[#allocation2 + $0x50] sm:$0xff]
        %v1883 = vld [vmem:[#allocation2 + $0x58] sm:$0xff]
        %v1884 = vld [vmem:[#allocation2 + $0x60] sm:$0xff]
        %v1885 = vld [vmem:[#allocation2 + $0x68] sm:$0xff]
        %v1886 = vld [vmem:[#allocation2 + $0x70] sm:$0xff]
        %v1887 = vld [vmem:[#allocation2 + $0x78] sm:$0xff]
        %v1888 = vld [vmem:[#allocation2 + $0x80] sm:$0xff]
        %v1889 = vld [vmem:[#allocation2 + $0x88] sm:$0xff]
        %v1890 = vld [vmem:[#allocation2 + $0x90] sm:$0xff]
        %v1891 = vld [vmem:[#allocation2 + $0x98] sm:$0xff]
        %v1892 = vld [vmem:[#allocation2 + $0xa0] sm:$0xff]
        %v1893 = vld [vmem:[#allocation2 + $0xa8] sm:$0xff]
        %v1894 = vld [vmem:[#allocation2 + $0xb0] sm:$0xff]
        %v1895 = vld [vmem:[#allocation2 + $0xb8] sm:$0xff]
        %v1896 = vld [vmem:[#allocation2 + $0xc0] sm:$0xff]
        %v1897 = vld [vmem:[#allocation2 + $0xc8] sm:$0xff]
        %v1898 = vld [vmem:[#allocation2 + $0xd0] sm:$0xff]
        %v1899 = vld [vmem:[#allocation2 + $0xd8] sm:$0xff]
        %v1900 = vld [vmem:[#allocation2 + $0xe0] sm:$0xff]
        %v1901 = vld [vmem:[#allocation2 + $0xe8] sm:$0xff]
        %v1902 = vld [vmem:[#allocation2 + $0xf0] sm:$0xff]
        %v1903 = vld [vmem:[#allocation2 + $0xf8] sm:$0xff]
        %v1904 = vld [vmem:[#allocation2 + $0x100] sm:$0xff]
        %v1905 = vld [vmem:[#allocation2 + $0x108] sm:$0xff]
        %v1906 = vld [vmem:[#allocation2 + $0x110] sm:$0xff]
        %v1907 = vld [vmem:[#allocation2 + $0x118] sm:$0xff]
        %v1908 = vld [vmem:[#allocation2 + $0x120] sm:$0xff]
        %v1909 = vld [vmem:[#allocation2 + $0x128] sm:$0xff]
        %v1910 = vld [vmem:[#allocation2 + $0x130] sm:$0xff]
        %v1911 = vld [vmem:[#allocation2 + $0x138] sm:$0xff]
        %v1912 = vld [vmem:[#allocation2 + $0x140] sm:$0xff]
        %v1913 = vld [vmem:[#allocation2 + $0x148] sm:$0xff]
        %v1914 = vld [vmem:[#allocation2 + $0x150] sm:$0xff]
        %v1915 = vld [vmem:[#allocation2 + $0x158] sm:$0xff]
        %v1916 = vld [vmem:[#allocation2 + $0x160] sm:$0xff]
        %v1917 = vld [vmem:[#allocation2 + $0x168] sm:$0xff]
        %v1918 = vld [vmem:[#allocation2 + $0x170] sm:$0xff]
        %v1919 = vld [vmem:[#allocation2 + $0x178] sm:$0xff]
        %v1920 = vld [vmem:[#allocation2 + $0x180] sm:$0xff]
        %v1921 = vld [vmem:[#allocation2 + $0x188] sm:$0xff]
        %v1922 = vld [vmem:[#allocation2 + $0x190] sm:$0xff]
        %v1923 = vld [vmem:[#allocation2 + $0x198] sm:$0xff]
        %v1924 = vld [vmem:[#allocation2 + $0x1a0] sm:$0xff]
        %v1925 = vld [vmem:[#allocation2 + $0x1a8] sm:$0xff]
        %v1926 = vld [vmem:[#allocation2 + $0x1b0] sm:$0xff]
        %v1927 = vld [vmem:[#allocation2 + $0x1b8] sm:$0xff]
        %v1928 = vld [vmem:[#allocation2 + $0x1c0] sm:$0xff]
        %v1929 = vld [vmem:[#allocation2 + $0x1c8] sm:$0xff]
        %v1930 = vld [vmem:[#allocation2 + $0x1d0] sm:$0xff]
        %v1931 = vld [vmem:[#allocation2 + $0x1d8] sm:$0xff]
        %v1932 = vld [vmem:[#allocation2 + $0x1e0] sm:$0xff]
        %v1933 = vld [vmem:[#allocation2 + $0x1e8] sm:$0xff]
        %v1934 = vld [vmem:[#allocation2 + $0x1f0] sm:$0xff]
        %v1935 = vld [vmem:[#allocation2 + $0x1f8] sm:$0xff]
        %v1936 = vld [vmem:[#allocation2 + $0x200] sm:$0xff]
        %v1937 = vld [vmem:[#allocation2 + $0x208] sm:$0xff]
        %v1938 = vld [vmem:[#allocation2 + $0x210] sm:$0xff]
        %v1939 = vld [vmem:[#allocation2 + $0x218] sm:$0xff]
        %v1940 = vld [vmem:[#allocation2 + $0x220] sm:$0xff]
        %v1941 = vld [vmem:[#allocation2 + $0x228] sm:$0xff]
        %v1942 = vld [vmem:[#allocation2 + $0x230] sm:$0xff]
        %v1943 = vld [vmem:[#allocation2 + $0x238] sm:$0xff]
        %v1944 = vld [vmem:[#allocation2 + $0x240] sm:$0xff]
        %v1945 = vld [vmem:[#allocation2 + $0x248] sm:$0xff]
        %v1946 = vld [vmem:[#allocation2 + $0x250] sm:$0xff]
        %v1947 = vld [vmem:[#allocation2 + $0x258] sm:$0xff]
        %v1948 = vld [vmem:[#allocation2 + $0x260] sm:$0xff]
        %v1949 = vld [vmem:[#allocation2 + $0x268] sm:$0xff]
        %v1950 = vld [vmem:[#allocation2 + $0x270] sm:$0xff]
        %v1951 = vld [vmem:[#allocation2 + $0x278] sm:$0xff]
        %v1952 = vld [vmem:[#allocation2 + $0x280] sm:$0xff]
        %v1953 = vld [vmem:[#allocation2 + $0x288] sm:$0xff]
        %v1954 = vld [vmem:[#allocation2 + $0x290] sm:$0xff]
        %v1955 = vld [vmem:[#allocation2 + $0x298] sm:$0xff]
        %v1956 = vld [vmem:[#allocation2 + $0x2a0] sm:$0xff]
        %v1957 = vld [vmem:[#allocation2 + $0x2a8] sm:$0xff]
        %v1958 = vld [vmem:[#allocation2 + $0x2b0] sm:$0xff]
        %v1959 = vld [vmem:[#allocation2 + $0x2b8] sm:$0xff]
        %v1960 = vld [vmem:[#allocation2 + $0x2c0] sm:$0xff]
        %v1961 = vld [vmem:[#allocation2 + $0x2c8] sm:$0xff]
        %v1962 = vld [vmem:[#allocation2 + $0x2d0] sm:$0xff]
        %v1963 = vld [vmem:[#allocation2 + $0x2d8] sm:$0xff]
        %v1964 = vld [vmem:[#allocation2 + $0x2e0] sm:$0xff]
        %v1965 = vld [vmem:[#allocation2 + $0x2e8] sm:$0xff]
        %v1966 = vld [vmem:[#allocation2 + $0x2f0] sm:$0xff]
        %v1967 = vld [vmem:[#allocation2 + $0x2f8] sm:$0xff]
        %v1968 = vld [vmem:[#allocation2 + $0x300] sm:$0xff]
        %v1969 = vld [vmem:[#allocation2 + $0x308] sm:$0xff]
        %v1970 = vld [vmem:[#allocation2 + $0x310] sm:$0xff]
        %v1971 = vld [vmem:[#allocation2 + $0x318] sm:$0xff]
        %v1972 = vld [vmem:[#allocation2 + $0x320] sm:$0xff]
        %v1973 = vld [vmem:[#allocation2 + $0x328] sm:$0xff]
        %v1974 = vld [vmem:[#allocation2 + $0x330] sm:$0xff]
        %v1975 = vld [vmem:[#allocation2 + $0x338] sm:$0xff]
        %v1976 = vld [vmem:[#allocation2 + $0x340] sm:$0xff]
        %v1977 = vld [vmem:[#allocation2 + $0x348] sm:$0xff]
        %v1978 = vld [vmem:[#allocation2 + $0x350] sm:$0xff]
        %v1979 = vld [vmem:[#allocation2 + $0x358] sm:$0xff]
        %v1980 = vld [vmem:[#allocation2 + $0x360] sm:$0xff]
        %v1981 = vld [vmem:[#allocation2 + $0x368] sm:$0xff]
        %v1982 = vld [vmem:[#allocation2 + $0x370] sm:$0xff]
        %v1983 = vld [vmem:[#allocation2 + $0x378] sm:$0xff]
        %v1984 = vld [vmem:[#allocation2 + $0x380] sm:$0xff]
        %v1985 = vld [vmem:[#allocation2 + $0x388] sm:$0xff]
        %v1986 = vld [vmem:[#allocation2 + $0x390] sm:$0xff]
        %v1987 = vld [vmem:[#allocation2 + $0x398] sm:$0xff]
        %v1988 = vld [vmem:[#allocation2 + $0x3a0] sm:$0xff]
        %v1989 = vld [vmem:[#allocation2 + $0x3a8] sm:$0xff]
        %v1990 = vld [vmem:[#allocation2 + $0x3b0] sm:$0xff]
        %v1991 = vld [vmem:[#allocation2 + $0x3b8] sm:$0xff]
        %v1992 = vld [vmem:[#allocation2 + $0x3c0] sm:$0xff]
        %v1993 = vld [vmem:[#allocation2 + $0x3c8] sm:$0xff]
        %v1994 = vld [vmem:[#allocation2 + $0x3d0] sm:$0xff]
        %v1995 = vld [vmem:[#allocation2 + $0x3d8] sm:$0xff]
        %v1996 = vld [vmem:[#allocation2 + $0x3e0] sm:$0xff]
        %v1997 = vld [vmem:[#allocation2 + $0x3e8] sm:$0xff]
        %v1998 = vld [vmem:[#allocation2 + $0x3f0] sm:$0xff]
        %v1999 = vld [vmem:[#allocation2 + $0x3f8] sm:$0xff]
        %2000 = vmatprep.subr.mxu0 %v1873
        %2001 = vmatpush1.msra.mxu0 %v1872
        %2002 = vmatprep.subr.mxu0 %v1875
        %2003 = vmatpush1.msra.mxu0 %v1874
        %2004 = vmatprep.subr.mxu0 %v1877
        %2005 = vmatpush1.msra.mxu0 %v1876
        %2006 = vmatprep.subr.mxu0 %v1879
        %2007 = vmatpush1.msra.mxu0 %v1878
        %2008 = vmatprep.subr.mxu0 %v1881
        %2009 = vmatpush1.msra.mxu0 %v1880
        %2010 = vmatprep.subr.mxu0 %v1883
        %2011 = vmatpush1.msra.mxu0 %v1882
        %2012 = vmatprep.subr.mxu0 %v1885
        %2013 = vmatpush1.msra.mxu0 %v1884
        %2014 = vmatprep.subr.mxu0 %v1887
        %2015 = vmatpush1.msra.mxu0 %v1886
        %2016 = vmatprep.subr.mxu0 %v1889
        %2017 = vmatpush1.msra.mxu0 %v1888
        %2018 = vmatprep.subr.mxu0 %v1891
        %2019 = vmatpush1.msra.mxu0 %v1890
        %2020 = vmatprep.subr.mxu0 %v1893
        %2021 = vmatpush1.msra.mxu0 %v1892
        %2022 = vmatprep.subr.mxu0 %v1895
        %2023 = vmatpush1.msra.mxu0 %v1894
        %2024 = vmatprep.subr.mxu0 %v1897
        %2025 = vmatpush1.msra.mxu0 %v1896
        %2026 = vmatprep.subr.mxu0 %v1899
        %2027 = vmatpush1.msra.mxu0 %v1898
        %2028 = vmatprep.subr.mxu0 %v1901
        %2029 = vmatpush1.msra.mxu0 %v1900
        %2030 = vmatprep.subr.mxu0 %v1903
        %2031 = vmatpush1.msra.mxu0 %v1902
        %2032 = vmatprep.subr.mxu0 %v1905
        %2033 = vmatpush1.msra.mxu0 %v1904
        %2034 = vmatprep.subr.mxu0 %v1907
        %2035 = vmatpush1.msra.mxu0 %v1906
        %2036 = vmatprep.subr.mxu0 %v1909
        %2037 = vmatpush1.msra.mxu0 %v1908
        %2038 = vmatprep.subr.mxu0 %v1911
        %2039 = vmatpush1.msra.mxu0 %v1910
        %2040 = vmatprep.subr.mxu0 %v1913
        %2041 = vmatpush1.msra.mxu0 %v1912
        %2042 = vmatprep.subr.mxu0 %v1915
        %2043 = vmatpush1.msra.mxu0 %v1914
        %2044 = vmatprep.subr.mxu0 %v1917
        %2045 = vmatpush1.msra.mxu0 %v1916
        %2046 = vmatprep.subr.mxu0 %v1919
        %2047 = vmatpush1.msra.mxu0 %v1918
        %2048 = vmatprep.subr.mxu0 %v1921
        %2049 = vmatpush1.msra.mxu0 %v1920
        %2050 = vmatprep.subr.mxu0 %v1923
        %2051 = vmatpush1.msra.mxu0 %v1922
        %2052 = vmatprep.subr.mxu0 %v1925
        %2053 = vmatpush1.msra.mxu0 %v1924
        %2054 = vmatprep.subr.mxu0 %v1927
        %2055 = vmatpush1.msra.mxu0 %v1926
        %2056 = vmatprep.subr.mxu0 %v1929
        %2057 = vmatpush1.msra.mxu0 %v1928
        %2058 = vmatprep.subr.mxu0 %v1931
        %2059 = vmatpush1.msra.mxu0 %v1930
        %2060 = vmatprep.subr.mxu0 %v1933
        %2061 = vmatpush1.msra.mxu0 %v1932
        %2062 = vmatprep.subr.mxu0 %v1935
        %2063 = vmatpush1.msra.mxu0 %v1934
        %2064 = vmatprep.mubr.f32.mxu0 %v1745
        %2065 = vmatmul.mubr.f32.gmra.mrb[0].mxu0 %v1744
        %v2066 = vpop.f32.mrb[0].mxu0
        %v2067 = vadd.f32 %v1680, %v2066
        %v2068 = vpop.f32.mrb[0].mxu0
        %v2069 = vadd.f32 %v1681, %v2068
        %2070 = vmatprep.mubr.f32.mxu0 %v1749
        %2071 = vmatmul.mubr.f32.gmra.mrb[0].mxu0 %v1748
        %v2072 = vpop.f32.mrb[0].mxu0
        %v2073 = vadd.f32 %v1682, %v2072
        %v2074 = vpop.f32.mrb[0].mxu0
        %v2075 = vadd.f32 %v1683, %v2074
        %2076 = vmatprep.mubr.f32.mxu0 %v1753
        %2077 = vmatmul.mubr.f32.gmra.mrb[0].mxu0 %v1752
        %v2078 = vpop.f32.mrb[0].mxu0
        %v2079 = vadd.f32 %v1684, %v2078
        %v2080 = vpop.f32.mrb[0].mxu0
        %v2081 = vadd.f32 %v1685, %v2080
        %2082 = vmatprep.mubr.f32.mxu0 %v1757
        %2083 = vmatmul.mubr.f32.gmra.mrb[0].mxu0 %v1756
        %v2084 = vpop.f32.mrb[0].mxu0
        %v2085 = vadd.f32 %v1686, %v2084
        %v2086 = vpop.f32.mrb[0].mxu0
        %v2087 = vadd.f32 %v1687, %v2086
        %2088 = vmatprep.mubr.f32.mxu0 %v1761
        %2089 = vmatmul.mubr.f32.gmra.mrb[0].mxu0 %v1760
        %v2090 = vpop.f32.mrb[0].mxu0
        %v2091 = vadd.f32 %v1688, %v2090
        %v2092 = vpop.f32.mrb[0].mxu0
        %v2093 = vadd.f32 %v1689, %v2092
        %2094 = vmatprep.mubr.f32.mxu0 %v1765
        %2095 = vmatmul.mubr.f32.gmra.mrb[0].mxu0 %v1764
        %v2096 = vpop.f32.mrb[0].mxu0
        %v2097 = vadd.f32 %v1690, %v2096
        %v2098 = vpop.f32.mrb[0].mxu0
        %v2099 = vadd.f32 %v1691, %v2098
        %2100 = vmatprep.mubr.f32.mxu0 %v1769
        %2101 = vmatmul.mubr.f32.gmra.mrb[0].mxu0 %v1768
        %v2102 = vpop.f32.mrb[0].mxu0
        %v2103 = vadd.f32 %v1692, %v2102
        %v2104 = vpop.f32.mrb[0].mxu0
        %v2105 = vadd.f32 %v1693, %v2104
        %2106 = vmatprep.mubr.f32.mxu0 %v1773
        %2107 = vmatmul.mubr.f32.gmra.mrb[0].mxu0 %v1772
        %v2108 = vpop.f32.mrb[0].mxu0
        %v2109 = vadd.f32 %v1694, %v2108
        %v2110 = vpop.f32.mrb[0].mxu0
        %v2111 = vadd.f32 %v1695, %v2110
        %2112 = vmatprep.mubr.f32.mxu0 %v1777
        %2113 = vmatmul.mubr.f32.gmra.mrb[0].mxu0 %v1776
        %v2114 = vpop.f32.mrb[0].mxu0
        %v2115 = vadd.f32 %v1696, %v2114
        %v2116 = vpop.f32.mrb[0].mxu0
        %v2117 = vadd.f32 %v1697, %v2116
        %2118 = vmatprep.mubr.f32.mxu0 %v1781
        %2119 = vmatmul.mubr.f32.gmra.mrb[0].mxu0 %v1780
        %v2120 = vpop.f32.mrb[0].mxu0
        %v2121 = vadd.f32 %v1698, %v2120
        %v2122 = vpop.f32.mrb[0].mxu0
        %v2123 = vadd.f32 %v1699, %v2122
        %2124 = vmatprep.mubr.f32.mxu0 %v1785
        %2125 = vmatmul.mubr.f32.gmra.mrb[0].mxu0 %v1784
        %v2126 = vpop.f32.mrb[0].mxu0
        %v2127 = vadd.f32 %v1700, %v2126
        %v2128 = vpop.f32.mrb[0].mxu0
        %v2129 = vadd.f32 %v1701, %v2128
        %2130 = vmatprep.mubr.f32.mxu0 %v1789
        %2131 = vmatmul.mubr.f32.gmra.mrb[0].mxu0 %v1788
        %v2132 = vpop.f32.mrb[0].mxu0
        %v2133 = vadd.f32 %v1702, %v2132
        %v2134 = vpop.f32.mrb[0].mxu0
        %v2135 = vadd.f32 %v1703, %v2134
        %2136 = vmatprep.mubr.f32.mxu0 %v1793
        %2137 = vmatmul.mubr.f32.gmra.mrb[0].mxu0 %v1792
        %v2138 = vpop.f32.mrb[0].mxu0
        %v2139 = vadd.f32 %v1704, %v2138
        %v2140 = vpop.f32.mrb[0].mxu0
        %v2141 = vadd.f32 %v1705, %v2140
        %2142 = vmatprep.mubr.f32.mxu0 %v1797
        %2143 = vmatmul.mubr.f32.gmra.mrb[0].mxu0 %v1796
        %v2144 = vpop.f32.mrb[0].mxu0
        %v2145 = vadd.f32 %v1706, %v2144
        %v2146 = vpop.f32.mrb[0].mxu0
        %v2147 = vadd.f32 %v1707, %v2146
        %2148 = vmatprep.mubr.f32.mxu0 %v1801
        %2149 = vmatmul.mubr.f32.gmra.mrb[0].mxu0 %v1800
        %v2150 = vpop.f32.mrb[0].mxu0
        %v2151 = vadd.f32 %v1708, %v2150
        %v2152 = vpop.f32.mrb[0].mxu0
        %v2153 = vadd.f32 %v1709, %v2152
        %2154 = vmatprep.mubr.f32.mxu0 %v1805
        %2155 = vmatmul.mubr.f32.gmra.mrb[0].mxu0 %v1804
        %v2156 = vpop.f32.mrb[0].mxu0
        %v2157 = vadd.f32 %v1710, %v2156
        %v2158 = vpop.f32.mrb[0].mxu0
        %v2159 = vadd.f32 %v1711, %v2158
        %2160 = vmatprep.mubr.f32.mxu0 %v1809
        %2161 = vmatmul.mubr.f32.gmra.mrb[0].mxu0 %v1808
        %v2162 = vpop.f32.mrb[0].mxu0
        %v2163 = vadd.f32 %v1712, %v2162
        %v2164 = vpop.f32.mrb[0].mxu0
        %v2165 = vadd.f32 %v1713, %v2164
        %2166 = vmatprep.mubr.f32.mxu0 %v1813
        %2167 = vmatmul.mubr.f32.gmra.mrb[0].mxu0 %v1812
        %v2168 = vpop.f32.mrb[0].mxu0
        %v2169 = vadd.f32 %v1714, %v2168
        %v2170 = vpop.f32.mrb[0].mxu0
        %v2171 = vadd.f32 %v1715, %v2170
        %2172 = vmatprep.mubr.f32.mxu0 %v1817
        %2173 = vmatmul.mubr.f32.gmra.mrb[0].mxu0 %v1816
        %v2174 = vpop.f32.mrb[0].mxu0
        %v2175 = vadd.f32 %v1716, %v2174
        %v2176 = vpop.f32.mrb[0].mxu0
        %v2177 = vadd.f32 %v1717, %v2176
        %2178 = vmatprep.mubr.f32.mxu0 %v1821
        %2179 = vmatmul.mubr.f32.gmra.mrb[0].mxu0 %v1820
        %v2180 = vpop.f32.mrb[0].mxu0
        %v2181 = vadd.f32 %v1718, %v2180
        %v2182 = vpop.f32.mrb[0].mxu0
        %v2183 = vadd.f32 %v1719, %v2182
        %2184 = vmatprep.mubr.f32.mxu0 %v1825
        %2185 = vmatmul.mubr.f32.gmra.mrb[0].mxu0 %v1824
        %v2186 = vpop.f32.mrb[0].mxu0
        %v2187 = vadd.f32 %v1720, %v2186
        %v2188 = vpop.f32.mrb[0].mxu0
        %v2189 = vadd.f32 %v1721, %v2188
        %2190 = vmatprep.mubr.f32.mxu0 %v1829
        %2191 = vmatmul.mubr.f32.gmra.mrb[0].mxu0 %v1828
        %v2192 = vpop.f32.mrb[0].mxu0
        %v2193 = vadd.f32 %v1722, %v2192
        %v2194 = vpop.f32.mrb[0].mxu0
        %v2195 = vadd.f32 %v1723, %v2194
        %2196 = vmatprep.mubr.f32.mxu0 %v1833
        %2197 = vmatmul.mubr.f32.gmra.mrb[0].mxu0 %v1832
        %v2198 = vpop.f32.mrb[0].mxu0
        %v2199 = vadd.f32 %v1724, %v2198
        %v2200 = vpop.f32.mrb[0].mxu0
        %v2201 = vadd.f32 %v1725, %v2200
        %2202 = vmatprep.mubr.f32.mxu0 %v1837
        %2203 = vmatmul.mubr.f32.gmra.mrb[0].mxu0 %v1836
        %v2204 = vpop.f32.mrb[0].mxu0
        %v2205 = vadd.f32 %v1726, %v2204
        %v2206 = vpop.f32.mrb[0].mxu0
        %v2207 = vadd.f32 %v1727, %v2206
        %2208 = vmatprep.mubr.f32.mxu0 %v1841
        %2209 = vmatmul.mubr.f32.gmra.mrb[0].mxu0 %v1840
        %v2210 = vpop.f32.mrb[0].mxu0
        %v2211 = vadd.f32 %v1728, %v2210
        %v2212 = vpop.f32.mrb[0].mxu0
        %v2213 = vadd.f32 %v1729, %v2212
        %2214 = vmatprep.mubr.f32.mxu0 %v1845
        %2215 = vmatmul.mubr.f32.gmra.mrb[0].mxu0 %v1844
        %v2216 = vpop.f32.mrb[0].mxu0
        %v2217 = vadd.f32 %v1730, %v2216
        %v2218 = vpop.f32.mrb[0].mxu0
        %v2219 = vadd.f32 %v1731, %v2218
        %2220 = vmatprep.mubr.f32.mxu0 %v1849
        %2221 = vmatmul.mubr.f32.gmra.mrb[0].mxu0 %v1848
        %v2222 = vpop.f32.mrb[0].mxu0
        %v2223 = vadd.f32 %v1732, %v2222
        %v2224 = vpop.f32.mrb[0].mxu0
        %v2225 = vadd.f32 %v1733, %v2224
        %2226 = vmatprep.mubr.f32.mxu0 %v1853
        %2227 = vmatmul.mubr.f32.gmra.mrb[0].mxu0 %v1852
        %v2228 = vpop.f32.mrb[0].mxu0
        %v2229 = vadd.f32 %v1734, %v2228
        %v2230 = vpop.f32.mrb[0].mxu0
        %v2231 = vadd.f32 %v1735, %v2230
        %2232 = vmatprep.mubr.f32.mxu0 %v1857
        %2233 = vmatmul.mubr.f32.gmra.mrb[0].mxu0 %v1856
        %v2234 = vpop.f32.mrb[0].mxu0
        %v2235 = vadd.f32 %v1736, %v2234
        %v2236 = vpop.f32.mrb[0].mxu0
        %v2237 = vadd.f32 %v1737, %v2236
        %2238 = vmatprep.mubr.f32.mxu0 %v1861
        %2239 = vmatmul.mubr.f32.gmra.mrb[0].mxu0 %v1860
        %v2240 = vpop.f32.mrb[0].mxu0
        %v2241 = vadd.f32 %v1738, %v2240
        %v2242 = vpop.f32.mrb[0].mxu0
        %v2243 = vadd.f32 %v1739, %v2242
        %2244 = vmatprep.mubr.f32.mxu0 %v1865
        %2245 = vmatmul.mubr.f32.gmra.mrb[0].mxu0 %v1864
        %v2246 = vpop.f32.mrb[0].mxu0
        %v2247 = vadd.f32 %v1740, %v2246
        %v2248 = vpop.f32.mrb[0].mxu0
        %v2249 = vadd.f32 %v1741, %v2248
        %2250 = vmatprep.mubr.f32.mxu0 %v1869
        %2251 = vmatmul.mubr.f32.gmra.mrb[0].mxu0 %v1868
        %v2252 = vpop.f32.mrb[0].mxu0
        %v2253 = vadd.f32 %v1742, %v2252
        %v2254 = vpop.f32.mrb[0].mxu0
        %v2255 = vadd.f32 %v1743, %v2254
        %2256 = vdwg.mxu0
        %2257 = vmatprep.subr.mxu0 %v1937
        %2258 = vmatpush1.msra.mxu0 %v1936
        %2259 = vmatprep.subr.mxu0 %v1939
        %2260 = vmatpush1.msra.mxu0 %v1938
        %2261 = vmatprep.subr.mxu0 %v1941
        %2262 = vmatpush1.msra.mxu0 %v1940
        %2263 = vmatprep.subr.mxu0 %v1943
        %2264 = vmatpush1.msra.mxu0 %v1942
        %2265 = vmatprep.subr.mxu0 %v1945
        %2266 = vmatpush1.msra.mxu0 %v1944
        %2267 = vmatprep.subr.mxu0 %v1947
        %2268 = vmatpush1.msra.mxu0 %v1946
        %2269 = vmatprep.subr.mxu0 %v1949
        %2270 = vmatpush1.msra.mxu0 %v1948
        %2271 = vmatprep.subr.mxu0 %v1951
        %2272 = vmatpush1.msra.mxu0 %v1950
        %2273 = vmatprep.subr.mxu0 %v1953
        %2274 = vmatpush1.msra.mxu0 %v1952
        %2275 = vmatprep.subr.mxu0 %v1955
        %2276 = vmatpush1.msra.mxu0 %v1954
        %2277 = vmatprep.subr.mxu0 %v1957
        %2278 = vmatpush1.msra.mxu0 %v1956
        %2279 = vmatprep.subr.mxu0 %v1959
        %2280 = vmatpush1.msra.mxu0 %v1958
        %2281 = vmatprep.subr.mxu0 %v1961
        %2282 = vmatpush1.msra.mxu0 %v1960
        %2283 = vmatprep.subr.mxu0 %v1963
        %2284 = vmatpush1.msra.mxu0 %v1962
        %2285 = vmatprep.subr.mxu0 %v1965
        %2286 = vmatpush1.msra.mxu0 %v1964
        %2287 = vmatprep.subr.mxu0 %v1967
        %2288 = vmatpush1.msra.mxu0 %v1966
        %2289 = vmatprep.subr.mxu0 %v1969
        %2290 = vmatpush1.msra.mxu0 %v1968
        %2291 = vmatprep.subr.mxu0 %v1971
        %2292 = vmatpush1.msra.mxu0 %v1970
        %2293 = vmatprep.subr.mxu0 %v1973
        %2294 = vmatpush1.msra.mxu0 %v1972
        %2295 = vmatprep.subr.mxu0 %v1975
        %2296 = vmatpush1.msra.mxu0 %v1974
        %2297 = vmatprep.subr.mxu0 %v1977
        %2298 = vmatpush1.msra.mxu0 %v1976
        %2299 = vmatprep.subr.mxu0 %v1979
        %2300 = vmatpush1.msra.mxu0 %v1978
        %2301 = vmatprep.subr.mxu0 %v1981
        %2302 = vmatpush1.msra.mxu0 %v1980
        %2303 = vmatprep.subr.mxu0 %v1983
        %2304 = vmatpush1.msra.mxu0 %v1982
        %2305 = vmatprep.subr.mxu0 %v1985
        %2306 = vmatpush1.msra.mxu0 %v1984
        %2307 = vmatprep.subr.mxu0 %v1987
        %2308 = vmatpush1.msra.mxu0 %v1986
        %2309 = vmatprep.subr.mxu0 %v1989
        %2310 = vmatpush1.msra.mxu0 %v1988
        %2311 = vmatprep.subr.mxu0 %v1991
        %2312 = vmatpush1.msra.mxu0 %v1990
        %2313 = vmatprep.subr.mxu0 %v1993
        %2314 = vmatpush1.msra.mxu0 %v1992
        %2315 = vmatprep.subr.mxu0 %v1995
        %2316 = vmatpush1.msra.mxu0 %v1994
        %2317 = vmatprep.subr.mxu0 %v1997
        %2318 = vmatpush1.msra.mxu0 %v1996
        %2319 = vmatprep.subr.mxu0 %v1999
        %2320 = vmatpush1.msra.mxu0 %v1998
        %2321 = vmatprep.mubr.f32.mxu0 %v1747
        %2322 = vmatmul.mubr.f32.gmra.mrb[0].mxu0 %v1746
        %v2323 = vpop.f32.mrb[0].mxu0
        %v2324 = vadd.f32 %v2067, %v2323
        %v2325 = vpop.f32.mrb[0].mxu0
        %v2326 = vadd.f32 %v2069, %v2325
        %2327 = vmatprep.mubr.f32.mxu0 %v1751
        %2328 = vmatmul.mubr.f32.gmra.mrb[0].mxu0 %v1750
        %v2329 = vpop.f32.mrb[0].mxu0
        %v2330 = vadd.f32 %v2073, %v2329
        %v2331 = vpop.f32.mrb[0].mxu0
        %v2332 = vadd.f32 %v2075, %v2331
        %2333 = vmatprep.mubr.f32.mxu0 %v1755
        %2334 = vmatmul.mubr.f32.gmra.mrb[0].mxu0 %v1754
        %v2335 = vpop.f32.mrb[0].mxu0
        %v2336 = vadd.f32 %v2079, %v2335
        %v2337 = vpop.f32.mrb[0].mxu0
        %v2338 = vadd.f32 %v2081, %v2337
        %2339 = vmatprep.mubr.f32.mxu0 %v1759
        %2340 = vmatmul.mubr.f32.gmra.mrb[0].mxu0 %v1758
        %v2341 = vpop.f32.mrb[0].mxu0
        %v2342 = vadd.f32 %v2085, %v2341
        %v2343 = vpop.f32.mrb[0].mxu0
        %v2344 = vadd.f32 %v2087, %v2343
        %2345 = vmatprep.mubr.f32.mxu0 %v1763
        %2346 = vmatmul.mubr.f32.gmra.mrb[0].mxu0 %v1762
        %v2347 = vpop.f32.mrb[0].mxu0
        %v2348 = vadd.f32 %v2091, %v2347
        %v2349 = vpop.f32.mrb[0].mxu0
        %v2350 = vadd.f32 %v2093, %v2349
        %2351 = vmatprep.mubr.f32.mxu0 %v1767
        %2352 = vmatmul.mubr.f32.gmra.mrb[0].mxu0 %v1766
        %v2353 = vpop.f32.mrb[0].mxu0
        %v2354 = vadd.f32 %v2097, %v2353
        %v2355 = vpop.f32.mrb[0].mxu0
        %v2356 = vadd.f32 %v2099, %v2355
        %2357 = vmatprep.mubr.f32.mxu0 %v1771
        %2358 = vmatmul.mubr.f32.gmra.mrb[0].mxu0 %v1770
        %v2359 = vpop.f32.mrb[0].mxu0
        %v2360 = vadd.f32 %v2103, %v2359
        %v2361 = vpop.f32.mrb[0].mxu0
        %v2362 = vadd.f32 %v2105, %v2361
        %2363 = vmatprep.mubr.f32.mxu0 %v1775
        %2364 = vmatmul.mubr.f32.gmra.mrb[0].mxu0 %v1774
        %v2365 = vpop.f32.mrb[0].mxu0
        %v2366 = vadd.f32 %v2109, %v2365
        %v2367 = vpop.f32.mrb[0].mxu0
        %v2368 = vadd.f32 %v2111, %v2367
        %2369 = vmatprep.mubr.f32.mxu0 %v1779
        %2370 = vmatmul.mubr.f32.gmra.mrb[0].mxu0 %v1778
        %v2371 = vpop.f32.mrb[0].mxu0
        %v2372 = vadd.f32 %v2115, %v2371
        %v2373 = vpop.f32.mrb[0].mxu0
        %v2374 = vadd.f32 %v2117, %v2373
        %2375 = vmatprep.mubr.f32.mxu0 %v1783
        %2376 = vmatmul.mubr.f32.gmra.mrb[0].mxu0 %v1782
        %v2377 = vpop.f32.mrb[0].mxu0
        %v2378 = vadd.f32 %v2121, %v2377
        %v2379 = vpop.f32.mrb[0].mxu0
        %v2380 = vadd.f32 %v2123, %v2379
        %2381 = vmatprep.mubr.f32.mxu0 %v1787
        %2382 = vmatmul.mubr.f32.gmra.mrb[0].mxu0 %v1786
        %v2383 = vpop.f32.mrb[0].mxu0
        %v2384 = vadd.f32 %v2127, %v2383
        %v2385 = vpop.f32.mrb[0].mxu0
        %v2386 = vadd.f32 %v2129, %v2385
        %2387 = vmatprep.mubr.f32.mxu0 %v1791
        %2388 = vmatmul.mubr.f32.gmra.mrb[0].mxu0 %v1790
        %v2389 = vpop.f32.mrb[0].mxu0
        %v2390 = vadd.f32 %v2133, %v2389
        %v2391 = vpop.f32.mrb[0].mxu0
        %v2392 = vadd.f32 %v2135, %v2391
        %2393 = vmatprep.mubr.f32.mxu0 %v1795
        %2394 = vmatmul.mubr.f32.gmra.mrb[0].mxu0 %v1794
        %v2395 = vpop.f32.mrb[0].mxu0
        %v2396 = vadd.f32 %v2139, %v2395
        %v2397 = vpop.f32.mrb[0].mxu0
        %v2398 = vadd.f32 %v2141, %v2397
        %2399 = vmatprep.mubr.f32.mxu0 %v1799
        %2400 = vmatmul.mubr.f32.gmra.mrb[0].mxu0 %v1798
        %v2401 = vpop.f32.mrb[0].mxu0
        %v2402 = vadd.f32 %v2145, %v2401
        %v2403 = vpop.f32.mrb[0].mxu0
        %v2404 = vadd.f32 %v2147, %v2403
        %2405 = vmatprep.mubr.f32.mxu0 %v1803
        %2406 = vmatmul.mubr.f32.gmra.mrb[0].mxu0 %v1802
        %v2407 = vpop.f32.mrb[0].mxu0
        %v2408 = vadd.f32 %v2151, %v2407
        %v2409 = vpop.f32.mrb[0].mxu0
        %v2410 = vadd.f32 %v2153, %v2409
        %2411 = vmatprep.mubr.f32.mxu0 %v1807
        %2412 = vmatmul.mubr.f32.gmra.mrb[0].mxu0 %v1806
        %v2413 = vpop.f32.mrb[0].mxu0
        %v2414 = vadd.f32 %v2157, %v2413
        %v2415 = vpop.f32.mrb[0].mxu0
        %v2416 = vadd.f32 %v2159, %v2415
        %2417 = vmatprep.mubr.f32.mxu0 %v1811
        %2418 = vmatmul.mubr.f32.gmra.mrb[0].mxu0 %v1810
        %v2419 = vpop.f32.mrb[0].mxu0
        %v2420 = vadd.f32 %v2163, %v2419
        %v2421 = vpop.f32.mrb[0].mxu0
        %v2422 = vadd.f32 %v2165, %v2421
        %2423 = vmatprep.mubr.f32.mxu0 %v1815
        %2424 = vmatmul.mubr.f32.gmra.mrb[0].mxu0 %v1814
        %v2425 = vpop.f32.mrb[0].mxu0
        %v2426 = vadd.f32 %v2169, %v2425
        %v2427 = vpop.f32.mrb[0].mxu0
        %v2428 = vadd.f32 %v2171, %v2427
        %2429 = vmatprep.mubr.f32.mxu0 %v1819
        %2430 = vmatmul.mubr.f32.gmra.mrb[0].mxu0 %v1818
        %v2431 = vpop.f32.mrb[0].mxu0
        %v2432 = vadd.f32 %v2175, %v2431
        %v2433 = vpop.f32.mrb[0].mxu0
        %v2434 = vadd.f32 %v2177, %v2433
        %2435 = vmatprep.mubr.f32.mxu0 %v1823
        %2436 = vmatmul.mubr.f32.gmra.mrb[0].mxu0 %v1822
        %v2437 = vpop.f32.mrb[0].mxu0
        %v2438 = vadd.f32 %v2181, %v2437
        %v2439 = vpop.f32.mrb[0].mxu0
        %v2440 = vadd.f32 %v2183, %v2439
        %2441 = vmatprep.mubr.f32.mxu0 %v1827
        %2442 = vmatmul.mubr.f32.gmra.mrb[0].mxu0 %v1826
        %v2443 = vpop.f32.mrb[0].mxu0
        %v2444 = vadd.f32 %v2187, %v2443
        %v2445 = vpop.f32.mrb[0].mxu0
        %v2446 = vadd.f32 %v2189, %v2445
        %2447 = vmatprep.mubr.f32.mxu0 %v1831
        %2448 = vmatmul.mubr.f32.gmra.mrb[0].mxu0 %v1830
        %v2449 = vpop.f32.mrb[0].mxu0
        %v2450 = vadd.f32 %v2193, %v2449
        %v2451 = vpop.f32.mrb[0].mxu0
        %v2452 = vadd.f32 %v2195, %v2451
        %2453 = vmatprep.mubr.f32.mxu0 %v1835
        %2454 = vmatmul.mubr.f32.gmra.mrb[0].mxu0 %v1834
        %v2455 = vpop.f32.mrb[0].mxu0
        %v2456 = vadd.f32 %v2199, %v2455
        %v2457 = vpop.f32.mrb[0].mxu0
        %v2458 = vadd.f32 %v2201, %v2457
        %2459 = vmatprep.mubr.f32.mxu0 %v1839
        %2460 = vmatmul.mubr.f32.gmra.mrb[0].mxu0 %v1838
        %v2461 = vpop.f32.mrb[0].mxu0
        %v2462 = vadd.f32 %v2205, %v2461
        %v2463 = vpop.f32.mrb[0].mxu0
        %v2464 = vadd.f32 %v2207, %v2463
        %2465 = vmatprep.mubr.f32.mxu0 %v1843
        %2466 = vmatmul.mubr.f32.gmra.mrb[0].mxu0 %v1842
        %v2467 = vpop.f32.mrb[0].mxu0
        %v2468 = vadd.f32 %v2211, %v2467
        %v2469 = vpop.f32.mrb[0].mxu0
        %v2470 = vadd.f32 %v2213, %v2469
        %2471 = vmatprep.mubr.f32.mxu0 %v1847
        %2472 = vmatmul.mubr.f32.gmra.mrb[0].mxu0 %v1846
        %v2473 = vpop.f32.mrb[0].mxu0
        %v2474 = vadd.f32 %v2217, %v2473
        %v2475 = vpop.f32.mrb[0].mxu0
        %v2476 = vadd.f32 %v2219, %v2475
        %2477 = vmatprep.mubr.f32.mxu0 %v1851
        %2478 = vmatmul.mubr.f32.gmra.mrb[0].mxu0 %v1850
        %v2479 = vpop.f32.mrb[0].mxu0
        %v2480 = vadd.f32 %v2223, %v2479
        %v2481 = vpop.f32.mrb[0].mxu0
        %v2482 = vadd.f32 %v2225, %v2481
        %2483 = vmatprep.mubr.f32.mxu0 %v1855
        %2484 = vmatmul.mubr.f32.gmra.mrb[0].mxu0 %v1854
        %v2485 = vpop.f32.mrb[0].mxu0
        %v2486 = vadd.f32 %v2229, %v2485
        %v2487 = vpop.f32.mrb[0].mxu0
        %v2488 = vadd.f32 %v2231, %v2487
        %2489 = vmatprep.mubr.f32.mxu0 %v1859
        %2490 = vmatmul.mubr.f32.gmra.mrb[0].mxu0 %v1858
        %v2491 = vpop.f32.mrb[0].mxu0
        %v2492 = vadd.f32 %v2235, %v2491
        %v2493 = vpop.f32.mrb[0].mxu0
        %v2494 = vadd.f32 %v2237, %v2493
        %2495 = vmatprep.mubr.f32.mxu0 %v1863
        %2496 = vmatmul.mubr.f32.gmra.mrb[0].mxu0 %v1862
        %v2497 = vpop.f32.mrb[0].mxu0
        %v2498 = vadd.f32 %v2241, %v2497
        %v2499 = vpop.f32.mrb[0].mxu0
        %v2500 = vadd.f32 %v2243, %v2499
        %2501 = vmatprep.mubr.f32.mxu0 %v1867
        %2502 = vmatmul.mubr.f32.gmra.mrb[0].mxu0 %v1866
        %v2503 = vpop.f32.mrb[0].mxu0
        %v2504 = vadd.f32 %v2247, %v2503
        %v2505 = vpop.f32.mrb[0].mxu0
        %v2506 = vadd.f32 %v2249, %v2505
        %2507 = vmatprep.mubr.f32.mxu0 %v1871
        %2508 = vmatmul.mubr.f32.gmra.mrb[0].mxu0 %v1870
        %v2509 = vpop.f32.mrb[0].mxu0
        %v2510 = vadd.f32 %v2253, %v2509
        %v2511 = vpop.f32.mrb[0].mxu0
        %v2512 = vadd.f32 %v2255, %v2511
        %2513 = vdwg.mxu0
        %2514 = vst [vmem:[%s255] sm:$0xff] %v2324
        %2515 = vst [vmem:[%s255 + $0x8] sm:$0xff] %v2326
        %2516 = vst [vmem:[%s255 + $0x10] sm:$0xff] %v2330
        %2517 = vst [vmem:[%s255 + $0x18] sm:$0xff] %v2332
        %2518 = vst [vmem:[%s255 + $0x20] sm:$0xff] %v2336
        %2519 = vst [vmem:[%s255 + $0x28] sm:$0xff] %v2338
        %2520 = vst [vmem:[%s255 + $0x30] sm:$0xff] %v2342
        %2521 = vst [vmem:[%s255 + $0x38] sm:$0xff] %v2344
        %2522 = vst [vmem:[%s255 + $0x40] sm:$0xff] %v2348
        %2523 = vst [vmem:[%s255 + $0x48] sm:$0xff] %v2350
        %2524 = vst [vmem:[%s255 + $0x50] sm:$0xff] %v2354
        %2525 = vst [vmem:[%s255 + $0x58] sm:$0xff] %v2356
        %2526 = vst [vmem:[%s255 + $0x60] sm:$0xff] %v2360
        %2527 = vst [vmem:[%s255 + $0x68] sm:$0xff] %v2362
        %2528 = vst [vmem:[%s255 + $0x70] sm:$0xff] %v2366
        %2529 = vst [vmem:[%s255 + $0x78] sm:$0xff] %v2368
        %2530 = vst [vmem:[%s255 + $0x80] sm:$0xff] %v2372
        %2531 = vst [vmem:[%s255 + $0x88] sm:$0xff] %v2374
        %2532 = vst [vmem:[%s255 + $0x90] sm:$0xff] %v2378
        %2533 = vst [vmem:[%s255 + $0x98] sm:$0xff] %v2380
        %2534 = vst [vmem:[%s255 + $0xa0] sm:$0xff] %v2384
        %2535 = vst [vmem:[%s255 + $0xa8] sm:$0xff] %v2386
        %2536 = vst [vmem:[%s255 + $0xb0] sm:$0xff] %v2390
        %2537 = vst [vmem:[%s255 + $0xb8] sm:$0xff] %v2392
        %2538 = vst [vmem:[%s255 + $0xc0] sm:$0xff] %v2396
        %2539 = vst [vmem:[%s255 + $0xc8] sm:$0xff] %v2398
        %2540 = vst [vmem:[%s255 + $0xd0] sm:$0xff] %v2402
        %2541 = vst [vmem:[%s255 + $0xd8] sm:$0xff] %v2404
        %2542 = vst [vmem:[%s255 + $0xe0] sm:$0xff] %v2408
        %2543 = vst [vmem:[%s255 + $0xe8] sm:$0xff] %v2410
        %2544 = vst [vmem:[%s255 + $0xf0] sm:$0xff] %v2414
        %2545 = vst [vmem:[%s255 + $0xf8] sm:$0xff] %v2416
        %2546 = vst [vmem:[%s255 + $0x100] sm:$0xff] %v2420
        %2547 = vst [vmem:[%s255 + $0x108] sm:$0xff] %v2422
        %2548 = vst [vmem:[%s255 + $0x110] sm:$0xff] %v2426
        %2549 = vst [vmem:[%s255 + $0x118] sm:$0xff] %v2428
        %2550 = vst [vmem:[%s255 + $0x120] sm:$0xff] %v2432
        %2551 = vst [vmem:[%s255 + $0x128] sm:$0xff] %v2434
        %2552 = vst [vmem:[%s255 + $0x130] sm:$0xff] %v2438
        %2553 = vst [vmem:[%s255 + $0x138] sm:$0xff] %v2440
        %2554 = vst [vmem:[%s255 + $0x140] sm:$0xff] %v2444
        %2555 = vst [vmem:[%s255 + $0x148] sm:$0xff] %v2446
        %2556 = vst [vmem:[%s255 + $0x150] sm:$0xff] %v2450
        %2557 = vst [vmem:[%s255 + $0x158] sm:$0xff] %v2452
        %2558 = vst [vmem:[%s255 + $0x160] sm:$0xff] %v2456
        %2559 = vst [vmem:[%s255 + $0x168] sm:$0xff] %v2458
        %2560 = vst [vmem:[%s255 + $0x170] sm:$0xff] %v2462
        %2561 = vst [vmem:[%s255 + $0x178] sm:$0xff] %v2464
        %2562 = vst [vmem:[%s255 + $0x180] sm:$0xff] %v2468
        %2563 = vst [vmem:[%s255 + $0x188] sm:$0xff] %v2470
        %2564 = vst [vmem:[%s255 + $0x190] sm:$0xff] %v2474
        %2565 = vst [vmem:[%s255 + $0x198] sm:$0xff] %v2476
        %2566 = vst [vmem:[%s255 + $0x1a0] sm:$0xff] %v2480
        %2567 = vst [vmem:[%s255 + $0x1a8] sm:$0xff] %v2482
        %2568 = vst [vmem:[%s255 + $0x1b0] sm:$0xff] %v2486
        %2569 = vst [vmem:[%s255 + $0x1b8] sm:$0xff] %v2488
        %2570 = vst [vmem:[%s255 + $0x1c0] sm:$0xff] %v2492
        %2571 = vst [vmem:[%s255 + $0x1c8] sm:$0xff] %v2494
        %2572 = vst [vmem:[%s255 + $0x1d0] sm:$0xff] %v2498
        %2573 = vst [vmem:[%s255 + $0x1d8] sm:$0xff] %v2500
        %2574 = vst [vmem:[%s255 + $0x1e0] sm:$0xff] %v2504
        %2575 = vst [vmem:[%s255 + $0x1e8] sm:$0xff] %v2506
        %2576 = vst [vmem:[%s255 + $0x1f0] sm:$0xff] %v2510
        %2577 = vst [vmem:[%s255 + $0x1f8] sm:$0xff] %v2512
        %s2578 = sand.u32 %s116, 1
        %s2579 = scalar_lea.sflag [#allocation5], %s2578
        %s2580 = sand.u32 %s116, 1
        %s2581 = smul.addr %s2580, 512
        %s2582 = scalar_lea.vmem [#allocation9], %s2581
        // Predicated region
        $region49: #{tpu_custom_call.1} parent=31 // pred_check
          %p2583 = pneg %p126
        $region50: #{tpu_custom_call.1} parent=31 // pred_check_branch
          %2585 = sbr.rel (%p2583) target = $region52
        $region51: #{tpu_custom_call.1} parent=31 // pred_region
          %s2586 = smul.u32 32, %s26
          %s2587 = smul.u32 2, %s25
          %s2589 = ssub.s32 8192, 8192
          %2590 = vsyncadd %s2579, %s2589
          %s2591 = smul.addr %s2586, 4
          %s2592 = sadd.s32 %s2587, %s2591
          %s2593 = smul.addr %s2592, 128
          %s2594 = scalar_lea.hbm %s3, %s2593
          %s2595 = sshll.u32 %s2582, 4
          %s2596 = int_to_ptr.vmem [resolvable:$true] %s2595
          %2601 = dma.vmem_to_hbm [thread:$0]  %s2596, 8192, %s2594, %s2579, 256, 512, 16
        $region52: #{tpu_custom_call.1} parent=31 // pred_fallthru
          _
      $region32: #{tpu_custom_call.1} parent=5 // pred_fallthru
        _
      %p2602 = scmp.le.s32.totalorder 2, %s16
      // Predicated region
      $region53: #{tpu_custom_call.1} parent=5 // pred_check
        %p2603 = pneg %p2602
      $region54: #{tpu_custom_call.1} parent=5 // pred_check_branch
        %2605 = sbr.rel (%p2603) target = $region56
      $region55: #{tpu_custom_call.1} parent=5 // pred_region
        %s2606 = ssub.s32 %s16, 2
        // Predicated region
        $region57: #{tpu_custom_call.1} parent=55 // pred_check
          %p2607 = pneg %p132
        $region58: #{tpu_custom_call.1} parent=55 // pred_check_branch
          %2609 = sbr.rel (%p2607) target = $region60
        $region59: #{tpu_custom_call.1} parent=55 // pred_region
          %s2610 = sand.u32 %s117, 1
          %s2611 = scalar_lea.sflag [#allocation5], %s2610
          %s2612 = sand.u32 %s117, 1
          %s2613 = smul.addr %s2612, 512
          %s2614 = scalar_lea.vmem [#allocation9], %s2613
          %2615 = dma.done %s2611, 8192
        $region60: #{tpu_custom_call.1} parent=55 // pred_fallthru
          _
      $region56: #{tpu_custom_call.1} parent=5 // pred_fallthru
        _
    $region6: #{tpu_custom_call.1} parent=1 // loop_footer
      %s20 = sadd.s32 1, %s16
    $region7: #{tpu_custom_call.1} parent=1 // loop_footer_branch
      %15 = sbr.rel target = $region3
    $region8: #{tpu_custom_call.1} parent=1 // loop_exit
      _
    %2616 = vsyncpa [#allocation4], 1
    %s2617 = scalar_lea.sflag [#allocation4], 1
    %2618 = vsyncpa %s2617, 1
    %2619 = vsyncpa [#allocation7], 1
    %s2620 = scalar_lea.sflag [#allocation7], 1
    %2621 = vsyncpa %s2620, 1
    %2622 = vsyncpa [#allocation5], 1
    %s2623 = scalar_lea.sflag [#allocation5], 1
    %2624 = vsyncpa %s2623, 1

</llo_original>
